<compile_context>
chip_gen: v7x
topology: tpu7x:2x2x1
jax: 0.10.0
libtpu: 0.0.40
codegen_flags: <defaults>
</compile_context>

<pallas_src>
import functools

import jax
import jax.numpy as jnp
from jax.experimental import pallas as pl
from jax.experimental.pallas import tpu as pltpu

_LANE = 128
_MIB = 1024 * 1024


def _attention_kernel(x_ref, wqkv_ref, wproj_ref, bproj_ref, *refs,
                      num_heads, head_dim, n_actual, return_attn):
    """One (batch element, query tile) grid step.

    x_ref:     (Np, C)      full padded sequence for this batch element (bf16)
    wqkv_ref:  (C, 3C)      qkv weight^T, q-columns pre-scaled by `scale`
    wproj_ref: (C, C)       proj weight^T
    bproj_ref: (1, C)       proj bias (f32)
    out_ref:   (Tq, C)      projected output rows for this query tile
    attn_ref:  (H, Tq, Np)  softmaxed attention for this query tile (optional)
    qkv_ref:   (Np, 3C)     scratch: qkv projection (compute dtype), persists
                            across the query-tile grid axis
    o_ref:     (Tq, C)      scratch: per-head attn@V slabs (compute dtype)
    """
    if return_attn:
        out_ref, attn_ref, qkv_ref, o_ref = refs
    else:
        out_ref, qkv_ref, o_ref = refs
        attn_ref = None

    qt = pl.program_id(1)
    n_pad = x_ref.shape[0]
    q_tile = out_ref.shape[0]
    C = num_heads * head_dim

    # QKV projection once per batch element (MXU, f32 accumulation). The query-tile
    # axis is "arbitrary", so this scratch persists across qt steps of the same b.
    @pl.when(qt == 0)
    def _():
        qkv_ref[...] = jnp.dot(
            x_ref[...], wqkv_ref[...],
            preferred_element_type=jnp.float32).astype(qkv_ref.dtype)

    row0 = pl.multiple_of(qt * q_tile, q_tile)

    # Static mask for padded key columns (n_actual is a Python int).
    if n_actual < n_pad:
        col = jax.lax.broadcasted_iota(jnp.int32, (q_tile, n_pad), 1)
        key_mask = col < n_actual
    else:
        key_mask = None

    # qkv column layout after torch reshape(B, N, 3, H, hd): [q heads | k heads | v heads].
    for h in range(num_heads):
        q = qkv_ref[pl.ds(row0, q_tile), pl.ds(h * head_dim, head_dim)]       # (Tq, hd)
        k = qkv_ref[:, pl.ds(C + h * head_dim, head_dim)]                     # (Np, hd)
        v = qkv_ref[:, pl.ds(2 * C + h * head_dim, head_dim)]                 # (Np, hd)

        # Scores: contract head_dim of both operands (no explicit k transpose).
        # Scale is already folded into the q weight columns.
        s = jax.lax.dot_general(
            q, k, dimension_numbers=(((1,), (1,)), ((), ())),
            preferred_element_type=jnp.float32)
        if key_mask is not None:
            s = jnp.where(key_mask, s, jnp.float32(-1e30))

        # Numerically stable softmax in f32. Exact divide so rows sum to 1
        # (the normalized weights are also a user-visible output).
        s = s - jnp.max(s, axis=-1, keepdims=True)
        e = jnp.exp(s)
        a = e / jnp.sum(e, axis=-1, keepdims=True)

        if attn_ref is not None:
            attn_ref[h] = a.astype(attn_ref.dtype)

        # attn @ v : (Tq, Np) @ (Np, hd) -> (Tq, hd), written into the head's slab.
        av = jnp.dot(a.astype(v.dtype), v, preferred_element_type=jnp.float32)
        o_ref[:, pl.ds(h * head_dim, head_dim)] = av.astype(o_ref.dtype)

    # Output projection for this query tile (full-C contraction keeps the MXU fed).
    y = jnp.dot(o_ref[...], wproj_ref[...],
                preferred_element_type=jnp.float32) + bproj_ref[...]
    out_ref[...] = y.astype(out_ref.dtype)


def _pick_q_tile(n_pad):
    if n_pad <= 256:
        return n_pad
    if n_pad % 256 == 0:
        return 256
    return 128


def _vmem_limit_bytes(n_pad, q_tile, C, num_heads, cd_isz, out_isz, attn_isz,
                      return_attn):
    weights = 2 * (4 * C * C) * cd_isz + 2 * C * 4          # qkv + proj (x2 buffers) + bias
    x_io = 2 * n_pad * C * cd_isz                           # double-buffered x block
    out_io = 2 * q_tile * C * out_isz
    attn_io = 2 * num_heads * q_tile * n_pad * attn_isz if return_attn else 0
    scratch = n_pad * 3 * C * cd_isz + q_tile * C * cd_isz  # qkv slab + o slab
    # Transient f32 values: qkv-projection result, one head's score/exp tiles, proj.
    live = n_pad * 3 * C * 4 + 4 * q_tile * n_pad * 4 + 2 * q_tile * C * 4
    total = weights + x_io + out_io + attn_io + scratch + live

    cap = 48 * _MIB                       # conservative default if the HW query fails
    try:
        info = pltpu.get_tpu_info()
        phys = getattr(info, "vmem_capacity_bytes", 0) or 0
        if phys >= 100 * _MIB:            # 128-MiB parts (v5e / v6e)
            cap = 100 * _MIB
        elif phys > 0:                    # 64-MiB parts (v7x)
            cap = min(56 * _MIB, int(phys * 0.875))
    except Exception:                     # hardware query unavailable -> keep default
        pass
    return int(min(max(total + total // 2, 16 * _MIB), cap))


def attention_forward(x, w_qkv_t, w_proj_t, b_proj, *, num_heads,
                      compute_dtype=jnp.bfloat16, attn_dtype=jnp.bfloat16,
                      return_attn=True, qk_scale=None):
    """ViT attention forward.

    x: (B, N, C); w_qkv_t: (C, 3C) = W_qkv^T; w_proj_t: (C, C) = W_proj^T;
    b_proj: (C,). Returns (out, attn) like the PyTorch module (attn in `attn_dtype`,
    bf16 by default), or just `out` if return_attn=False.
    """
    B, N, C = x.shape
    head_dim = C // num_heads
    scale = qk_scale if qk_scale is not None else head_dim ** (-0.5)
    out_dtype = x.dtype

    # Pad the sequence length so score / attention tiles are lane-dense.
    n_pad = pl.cdiv(N, _LANE) * _LANE
    x_p = x if n_pad == N else jnp.pad(x, ((0, 0), (0, n_pad - N), (0, 0)))
    x_p = x_p.astype(compute_dtype)

    # Fold the softmax scale into the q columns of the qkv weight (qkv_bias=False,
    # so there is no bias to scale). Done in f32, then cast to the compute dtype.
    col_scale = jnp.concatenate([
        jnp.full((C,), scale, dtype=jnp.float32),
        jnp.ones((2 * C,), dtype=jnp.float32)])
    wq = (jnp.asarray(w_qkv_t, jnp.float32) * col_scale[None, :]).astype(compute_dtype)
    wp = jnp.asarray(w_proj_t, jnp.float32).astype(compute_dtype)
    bp = jnp.asarray(b_proj, dtype=jnp.float32).reshape(1, C)

    q_tile = _pick_q_tile(n_pad)
    n_qt = n_pad // q_tile

    kernel = functools.partial(
        _attention_kernel, num_heads=num_heads, head_dim=head_dim,
        n_actual=N, return_attn=return_attn)

    if return_attn:
        out_shape = (
            jax.ShapeDtypeStruct((B, n_pad, C), out_dtype),
            jax.ShapeDtypeStruct((B, num_heads, n_pad, n_pad), attn_dtype),
        )
        out_specs = (
            pl.BlockSpec((None, q_tile, C), lambda b, t: (b, t, 0)),
            pl.BlockSpec((None, num_heads, q_tile, n_pad), lambda b, t: (b, 0, t, 0)),
        )
    else:
        out_shape = jax.ShapeDtypeStruct((B, n_pad, C), out_dtype)
        out_specs = pl.BlockSpec((None, q_tile, C), lambda b, t: (b, t, 0))

    vmem_bytes = _vmem_limit_bytes(
        n_pad, q_tile, C, num_heads,
        jnp.dtype(compute_dtype).itemsize,
        jnp.dtype(out_dtype).itemsize,
        jnp.dtype(attn_dtype).itemsize,
        return_attn)

    call = pl.pallas_call(
        kernel,
        out_shape=out_shape,
        grid_spec=pltpu.PrefetchScalarGridSpec(
            num_scalar_prefetch=0,
            grid=(B, n_qt),
            in_specs=[
                pl.BlockSpec((None, n_pad, C), lambda b, t: (b, 0, 0)),  # x (per batch)
                pl.BlockSpec((C, 3 * C), lambda b, t: (0, 0)),           # qkv weight
                pl.BlockSpec((C, C), lambda b, t: (0, 0)),               # proj weight
                pl.BlockSpec((1, C), lambda b, t: (0, 0)),               # proj bias
            ],
            out_specs=out_specs,
            scratch_shapes=[
                pltpu.VMEM((n_pad, 3 * C), compute_dtype),   # qkv slab (per batch elem)
                pltpu.VMEM((q_tile, C), compute_dtype),      # attn@V slab (per q tile)
            ]),
        compiler_params=pltpu.CompilerParams(
            dimension_semantics=("parallel", "arbitrary"),
            vmem_limit_bytes=vmem_bytes),
    )

    if return_attn:
        out_p, attn_p = call(x_p, wq, wp, bp)
        return out_p[:, :N, :], attn_p[:, :, :N, :N]
    out_p = call(x_p, wq, wp, bp)
    return out_p[:, :N, :]


def attention_reference(x, w_qkv_t, w_proj_t, b_proj, *, num_heads):
    """Pure-JAX (f32) reference mirroring the PyTorch forward pass."""
    B, N, C = x.shape
    hd = C // num_heads
    scale = hd ** (-0.5)
    qkv = x @ w_qkv_t                                             # (B, N, 3C)
    qkv = qkv.reshape(B, N, 3, num_heads, hd).transpose(2, 0, 3, 1, 4)
    q, k, v = qkv[0], qkv[1], qkv[2]                              # (B, H, N, hd)
    attn = jnp.einsum("bhnd,bhmd->bhnm", q, k) * scale
    attn = jax.nn.softmax(attn, axis=-1)
    o = jnp.einsum("bhnm,bhmd->bhnd", attn, v)                    # (B, H, N, hd)
    o = o.transpose(0, 2, 1, 3).reshape(B, N, C)
    y = o @ w_proj_t + jnp.asarray(b_proj).reshape(1, C)
    return y, attn


if __name__ == "__main__":
    # Small shapes consistent with the module: dim=C=32, num_heads=8, seq N=8, batch B=2.
    B, N, C = 2, 8, 32
    num_heads = 8

    key = jax.random.PRNGKey(0)
    kx, k1, k2, k3 = jax.random.split(key, 4)

    x = jax.random.normal(kx, (B, N, C), dtype=jnp.float32)

    # Deterministic parameter init (qkv_bias=False -> qkv has no bias; proj has bias).
    w_qkv = jax.random.normal(k1, (3 * C, C), dtype=jnp.float32) * 0.05   # nn.Linear (out, in)
    w_proj = jax.random.normal(k2, (C, C), dtype=jnp.float32) * 0.05
    b_proj = jax.random.normal(k3, (C,), dtype=jnp.float32) * 0.05

    # Kernel takes transposed weights so it can do x @ W directly.
    w_qkv_t = w_qkv.T                       # (C, 3C)
    w_proj_t = w_proj.T                     # (C, C)

    out, attn = attention_forward(x, w_qkv_t, w_proj_t, b_proj, num_heads=num_heads)
    out = jax.block_until_ready(out)
    attn = jax.block_until_ready(attn)

    # Verify against pure-JAX f32 reference of the PyTorch forward.
    ref_out, ref_attn = attention_reference(x, w_qkv_t, w_proj_t, b_proj,
                                            num_heads=num_heads)
    assert out.shape == (B, N, C) and attn.shape == (B, num_heads, N, N)
    # bf16 matmul operands (and bf16 attn output) -> tolerances loosened vs exact f32.
    assert jnp.allclose(out, ref_out, atol=2e-2, rtol=2e-2), \
        float(jnp.max(jnp.abs(out - ref_out)))
    attn_f32 = attn.astype(jnp.float32)
    assert jnp.allclose(attn_f32, ref_attn, atol=1e-2, rtol=5e-2), \
        float(jnp.max(jnp.abs(attn_f32 - ref_attn)))

    # Fast path: skip materializing the attention-weights output entirely.
    out_only = attention_forward(x, w_qkv_t, w_proj_t, b_proj,
                                 num_heads=num_heads, return_attn=False)
    out_only = jax.block_until_ready(out_only)
    assert out_only.shape == (B, N, C)
    assert jnp.allclose(out_only, ref_out, atol=2e-2, rtol=2e-2), \
        float(jnp.max(jnp.abs(out_only - ref_out)))

    print("KERNEL_OK")
</pallas_src>

<mosaic_0001>
module attributes {stable_mosaic.version = 11 : i64} {
  func.func @_attention_kernel(%arg0: i32, %arg1: i32, %arg2: memref<1x128x32xbf16, #tpu.memory_space<vmem>>, %arg3: memref<32x96xbf16, #tpu.memory_space<vmem>>, %arg4: memref<32x32xbf16, #tpu.memory_space<vmem>>, %arg5: memref<1x32xf32, #tpu.memory_space<vmem>>, %arg6: memref<1x128x32xf32, #tpu.memory_space<vmem>>, %arg7: memref<1x8x128x128xbf16, #tpu.memory_space<vmem>>, %arg8: memref<128x96xbf16, #tpu.memory_space<vmem>>, %arg9: memref<128x32xbf16, #tpu.memory_space<vmem>>) attributes {dimension_semantics = [#tpu.dimension_semantics<parallel>, #tpu.dimension_semantics<arbitrary>], iteration_bounds = array<i64: 2, 1>, scalar_prefetch = 0 : i64, scratch_operands = 2 : i64, tpu.core_type = #tpu.core_type<tc>, window_params = [{transform_indices = @transform_0, window_bounds = array<i64: 1, 128, 32>}, {pipeline_mode = #tpu.pipeline_mode<synchronous>, transform_indices = @transform_1, window_bounds = array<i64: 32, 96>}, {pipeline_mode = #tpu.pipeline_mode<synchronous>, transform_indices = @transform_2, window_bounds = array<i64: 32, 32>}, {pipeline_mode = #tpu.pipeline_mode<synchronous>, transform_indices = @transform_3, window_bounds = array<i64: 1, 32>}, {transform_indices = @transform_4, window_bounds = array<i64: 1, 128, 32>}, {transform_indices = @transform_5, window_bounds = array<i64: 1, 8, 128, 128>}]} {
    %c0_i32 = arith.constant 0 : i32
    %0 = arith.cmpi eq, %arg1, %c0_i32 : i32
    %1 = arith.extui %0 : i1 to i32
    %c0_i32_0 = arith.constant 0 : i32
    %2 = arith.cmpi ne, %1, %c0_i32_0 : i32
    scf.if %2 {
      %c0_108 = arith.constant 0 : index
      %c0_109 = arith.constant 0 : index
      %c0_110 = arith.constant 0 : index
      %209 = vector.load %arg2[%c0_108, %c0_109, %c0_110] : memref<1x128x32xbf16, #tpu.memory_space<vmem>>, vector<1x128x32xbf16>
      %210 = vector.shape_cast %209 : vector<1x128x32xbf16> to vector<128x32xbf16>
      %c0_111 = arith.constant 0 : index
      %c0_112 = arith.constant 0 : index
      %211 = vector.load %arg3[%c0_111, %c0_112] : memref<32x96xbf16, #tpu.memory_space<vmem>>, vector<32x96xbf16>
      %cst_113 = arith.constant dense<0.000000e+00> : vector<128x96xf32>
      %212 = tpu.matmul %210, %211, %cst_113 {dimension_numbers = #tpu.dot_dimension_numbers<[1], [0], [0], [1], [0, 0, 1, 1], [], []>} : vector<128x32xbf16>, vector<32x96xbf16>, vector<128x96xf32> -> vector<128x96xf32>
      %213 = arith.truncf %212 : vector<128x96xf32> to vector<128x96xbf16>
      %c0_114 = arith.constant 0 : index
      %c0_115 = arith.constant 0 : index
      %214 = vector.load %arg8[%c0_114, %c0_115] : memref<128x96xbf16, #tpu.memory_space<vmem>>, vector<128x96xbf16>
      tpu.vector_store %arg8[%c0_114, %c0_115], %213 {strides = array<i32>} : memref<128x96xbf16, #tpu.memory_space<vmem>>, vector<128x96xbf16>,
    } else {
    }
    %c128_i32 = arith.constant 128 : i32
    %3 = arith.muli %arg1, %c128_i32 : i32
    %4 = tpu.assume_multiple %3, 128 : i32
    %5 = tpu.iota {dimensions = array<i32: 1>} : vector<128x128xi32>
    %c8_i32 = arith.constant 8 : i32
    %6 = vector.broadcast %c8_i32 : i32 to vector<128x128xi32>
    %7 = arith.cmpi slt, %5, %6 : vector<128x128xi32>
    %8 = arith.index_cast %4 : i32 to index
    %c0 = arith.constant 0 : index
    %9 = vector.load %arg8[%8, %c0] : memref<128x96xbf16, #tpu.memory_space<vmem>>, vector<128x4xbf16>
    %c0_1 = arith.constant 0 : index
    %c32 = arith.constant 32 : index
    %10 = vector.load %arg8[%c0_1, %c32] : memref<128x96xbf16, #tpu.memory_space<vmem>>, vector<128x4xbf16>
    %c0_2 = arith.constant 0 : index
    %c64 = arith.constant 64 : index
    %11 = vector.load %arg8[%c0_2, %c64] : memref<128x96xbf16, #tpu.memory_space<vmem>>, vector<128x4xbf16>
    %cst = arith.constant dense<0.000000e+00> : vector<128x128xf32>
    %12 = tpu.matmul %9, %10, %cst {dimension_numbers = #tpu.dot_dimension_numbers<[1], [1], [0], [0], [0, 0, 1, 0], [], []>} : vector<128x4xbf16>, vector<128x4xbf16>, vector<128x128xf32> -> vector<128x128xf32>
    %cst_3 = arith.constant -1.000000e+30 : f32
    %13 = vector.broadcast %cst_3 : f32 to vector<128x128xf32>
    %14 = arith.select %7, %12, %13 : vector<128x128xi1>, vector<128x128xf32>
    %cst_4 = arith.constant dense<0xFF800000> : vector<128xf32>
    %15 = vector.multi_reduction <maximumf>, %14, %cst_4 [1] : vector<128x128xf32> to vector<128xf32>
    %16 = vector.shape_cast %15 : vector<128xf32> to vector<128x1xf32>
    %17 = vector.broadcast %16 : vector<128x1xf32> to vector<128x128xf32>
    %18 = arith.subf %14, %17 : vector<128x128xf32>
    %19 = math.exp %18 : vector<128x128xf32>
    %cst_5 = arith.constant dense<0.000000e+00> : vector<128xf32>
    %20 = vector.multi_reduction <add>, %19, %cst_5 [1] : vector<128x128xf32> to vector<128xf32>
    %21 = vector.shape_cast %20 : vector<128xf32> to vector<128x1xf32>
    %22 = vector.broadcast %21 : vector<128x1xf32> to vector<128x128xf32>
    %23 = arith.divf %19, %22 : vector<128x128xf32>
    %24 = arith.truncf %23 : vector<128x128xf32> to vector<128x128xbf16>
    %c0_6 = arith.constant 0 : index
    %c0_7 = arith.constant 0 : index
    %c0_8 = arith.constant 0 : index
    %c0_9 = arith.constant 0 : index
    %25 = vector.load %arg7[%c0_6, %c0_7, %c0_8, %c0_9] : memref<1x8x128x128xbf16, #tpu.memory_space<vmem>>, vector<1x1x128x128xbf16>
    %26 = vector.shape_cast %25 : vector<1x1x128x128xbf16> to vector<128x128xbf16>
    %27 = vector.shape_cast %24 : vector<128x128xbf16> to vector<1x1x128x128xbf16>
    tpu.vector_store %arg7[%c0_6, %c0_7, %c0_8, %c0_9], %27 {strides = array<i32>} : memref<1x8x128x128xbf16, #tpu.memory_space<vmem>>, vector<1x1x128x128xbf16>,
    %28 = arith.truncf %23 : vector<128x128xf32> to vector<128x128xbf16>
    %cst_10 = arith.constant dense<0.000000e+00> : vector<128x4xf32>
    %29 = tpu.matmul %28, %11, %cst_10 {dimension_numbers = #tpu.dot_dimension_numbers<[1], [0], [0], [1], [0, 0, 1, 1], [], []>} : vector<128x128xbf16>, vector<128x4xbf16>, vector<128x4xf32> -> vector<128x4xf32>
    %30 = arith.truncf %29 : vector<128x4xf32> to vector<128x4xbf16>
    %c0_11 = arith.constant 0 : index
    %c0_12 = arith.constant 0 : index
    %31 = vector.load %arg9[%c0_11, %c0_12] : memref<128x32xbf16, #tpu.memory_space<vmem>>, vector<128x4xbf16>
    tpu.vector_store %arg9[%c0_11, %c0_12], %30 {strides = array<i32>} : memref<128x32xbf16, #tpu.memory_space<vmem>>, vector<128x4xbf16>,
    %32 = arith.index_cast %4 : i32 to index
    %c4 = arith.constant 4 : index
    %33 = vector.load %arg8[%32, %c4] : memref<128x96xbf16, #tpu.memory_space<vmem>>, vector<128x4xbf16>
    %c0_13 = arith.constant 0 : index
    %c36 = arith.constant 36 : index
    %34 = vector.load %arg8[%c0_13, %c36] : memref<128x96xbf16, #tpu.memory_space<vmem>>, vector<128x4xbf16>
    %c0_14 = arith.constant 0 : index
    %c68 = arith.constant 68 : index
    %35 = vector.load %arg8[%c0_14, %c68] : memref<128x96xbf16, #tpu.memory_space<vmem>>, vector<128x4xbf16>
    %cst_15 = arith.constant dense<0.000000e+00> : vector<128x128xf32>
    %36 = tpu.matmul %33, %34, %cst_15 {dimension_numbers = #tpu.dot_dimension_numbers<[1], [1], [0], [0], [0, 0, 1, 0], [], []>} : vector<128x4xbf16>, vector<128x4xbf16>, vector<128x128xf32> -> vector<128x128xf32>
    %cst_16 = arith.constant -1.000000e+30 : f32
    %37 = vector.broadcast %cst_16 : f32 to vector<128x128xf32>
    %38 = arith.select %7, %36, %37 : vector<128x128xi1>, vector<128x128xf32>
    %cst_17 = arith.constant dense<0xFF800000> : vector<128xf32>
    %39 = vector.multi_reduction <maximumf>, %38, %cst_17 [1] : vector<128x128xf32> to vector<128xf32>
    %40 = vector.shape_cast %39 : vector<128xf32> to vector<128x1xf32>
    %41 = vector.broadcast %40 : vector<128x1xf32> to vector<128x128xf32>
    %42 = arith.subf %38, %41 : vector<128x128xf32>
    %43 = math.exp %42 : vector<128x128xf32>
    %cst_18 = arith.constant dense<0.000000e+00> : vector<128xf32>
    %44 = vector.multi_reduction <add>, %43, %cst_18 [1] : vector<128x128xf32> to vector<128xf32>
    %45 = vector.shape_cast %44 : vector<128xf32> to vector<128x1xf32>
    %46 = vector.broadcast %45 : vector<128x1xf32> to vector<128x128xf32>
    %47 = arith.divf %43, %46 : vector<128x128xf32>
    %48 = arith.truncf %47 : vector<128x128xf32> to vector<128x128xbf16>
    %c0_19 = arith.constant 0 : index
    %c1 = arith.constant 1 : index
    %c0_20 = arith.constant 0 : index
    %c0_21 = arith.constant 0 : index
    %49 = vector.load %arg7[%c0_19, %c1, %c0_20, %c0_21] : memref<1x8x128x128xbf16, #tpu.memory_space<vmem>>, vector<1x1x128x128xbf16>
    %50 = vector.shape_cast %49 : vector<1x1x128x128xbf16> to vector<128x128xbf16>
    %51 = vector.shape_cast %48 : vector<128x128xbf16> to vector<1x1x128x128xbf16>
    tpu.vector_store %arg7[%c0_19, %c1, %c0_20, %c0_21], %51 {strides = array<i32>} : memref<1x8x128x128xbf16, #tpu.memory_space<vmem>>, vector<1x1x128x128xbf16>,
    %52 = arith.truncf %47 : vector<128x128xf32> to vector<128x128xbf16>
    %cst_22 = arith.constant dense<0.000000e+00> : vector<128x4xf32>
    %53 = tpu.matmul %52, %35, %cst_22 {dimension_numbers = #tpu.dot_dimension_numbers<[1], [0], [0], [1], [0, 0, 1, 1], [], []>} : vector<128x128xbf16>, vector<128x4xbf16>, vector<128x4xf32> -> vector<128x4xf32>
    %54 = arith.truncf %53 : vector<128x4xf32> to vector<128x4xbf16>
    %c0_23 = arith.constant 0 : index
    %c4_24 = arith.constant 4 : index
    %55 = vector.load %arg9[%c0_23, %c4_24] : memref<128x32xbf16, #tpu.memory_space<vmem>>, vector<128x4xbf16>
    tpu.vector_store %arg9[%c0_23, %c4_24], %54 {strides = array<i32>} : memref<128x32xbf16, #tpu.memory_space<vmem>>, vector<128x4xbf16>,
    %56 = arith.index_cast %4 : i32 to index
    %c8 = arith.constant 8 : index
    %57 = vector.load %arg8[%56, %c8] : memref<128x96xbf16, #tpu.memory_space<vmem>>, vector<128x4xbf16>
    %c0_25 = arith.constant 0 : index
    %c40 = arith.constant 40 : index
    %58 = vector.load %arg8[%c0_25, %c40] : memref<128x96xbf16, #tpu.memory_space<vmem>>, vector<128x4xbf16>
    %c0_26 = arith.constant 0 : index
    %c72 = arith.constant 72 : index
    %59 = vector.load %arg8[%c0_26, %c72] : memref<128x96xbf16, #tpu.memory_space<vmem>>, vector<128x4xbf16>
    %cst_27 = arith.constant dense<0.000000e+00> : vector<128x128xf32>
    %60 = tpu.matmul %57, %58, %cst_27 {dimension_numbers = #tpu.dot_dimension_numbers<[1], [1], [0], [0], [0, 0, 1, 0], [], []>} : vector<128x4xbf16>, vector<128x4xbf16>, vector<128x128xf32> -> vector<128x128xf32>
    %cst_28 = arith.constant -1.000000e+30 : f32
    %61 = vector.broadcast %cst_28 : f32 to vector<128x128xf32>
    %62 = arith.select %7, %60, %61 : vector<128x128xi1>, vector<128x128xf32>
    %cst_29 = arith.constant dense<0xFF800000> : vector<128xf32>
    %63 = vector.multi_reduction <maximumf>, %62, %cst_29 [1] : vector<128x128xf32> to vector<128xf32>
    %64 = vector.shape_cast %63 : vector<128xf32> to vector<128x1xf32>
    %65 = vector.broadcast %64 : vector<128x1xf32> to vector<128x128xf32>
    %66 = arith.subf %62, %65 : vector<128x128xf32>
    %67 = math.exp %66 : vector<128x128xf32>
    %cst_30 = arith.constant dense<0.000000e+00> : vector<128xf32>
    %68 = vector.multi_reduction <add>, %67, %cst_30 [1] : vector<128x128xf32> to vector<128xf32>
    %69 = vector.shape_cast %68 : vector<128xf32> to vector<128x1xf32>
    %70 = vector.broadcast %69 : vector<128x1xf32> to vector<128x128xf32>
    %71 = arith.divf %67, %70 : vector<128x128xf32>
    %72 = arith.truncf %71 : vector<128x128xf32> to vector<128x128xbf16>
    %c0_31 = arith.constant 0 : index
    %c2 = arith.constant 2 : index
    %c0_32 = arith.constant 0 : index
    %c0_33 = arith.constant 0 : index
    %73 = vector.load %arg7[%c0_31, %c2, %c0_32, %c0_33] : memref<1x8x128x128xbf16, #tpu.memory_space<vmem>>, vector<1x1x128x128xbf16>
    %74 = vector.shape_cast %73 : vector<1x1x128x128xbf16> to vector<128x128xbf16>
    %75 = vector.shape_cast %72 : vector<128x128xbf16> to vector<1x1x128x128xbf16>
    tpu.vector_store %arg7[%c0_31, %c2, %c0_32, %c0_33], %75 {strides = array<i32>} : memref<1x8x128x128xbf16, #tpu.memory_space<vmem>>, vector<1x1x128x128xbf16>,
    %76 = arith.truncf %71 : vector<128x128xf32> to vector<128x128xbf16>
    %cst_34 = arith.constant dense<0.000000e+00> : vector<128x4xf32>
    %77 = tpu.matmul %76, %59, %cst_34 {dimension_numbers = #tpu.dot_dimension_numbers<[1], [0], [0], [1], [0, 0, 1, 1], [], []>} : vector<128x128xbf16>, vector<128x4xbf16>, vector<128x4xf32> -> vector<128x4xf32>
    %78 = arith.truncf %77 : vector<128x4xf32> to vector<128x4xbf16>
    %c0_35 = arith.constant 0 : index
    %c8_36 = arith.constant 8 : index
    %79 = vector.load %arg9[%c0_35, %c8_36] : memref<128x32xbf16, #tpu.memory_space<vmem>>, vector<128x4xbf16>
    tpu.vector_store %arg9[%c0_35, %c8_36], %78 {strides = array<i32>} : memref<128x32xbf16, #tpu.memory_space<vmem>>, vector<128x4xbf16>,
    %80 = arith.index_cast %4 : i32 to index
    %c12 = arith.constant 12 : index
    %81 = vector.load %arg8[%80, %c12] : memref<128x96xbf16, #tpu.memory_space<vmem>>, vector<128x4xbf16>
    %c0_37 = arith.constant 0 : index
    %c44 = arith.constant 44 : index
    %82 = vector.load %arg8[%c0_37, %c44] : memref<128x96xbf16, #tpu.memory_space<vmem>>, vector<128x4xbf16>
    %c0_38 = arith.constant 0 : index
    %c76 = arith.constant 76 : index
    %83 = vector.load %arg8[%c0_38, %c76] : memref<128x96xbf16, #tpu.memory_space<vmem>>, vector<128x4xbf16>
    %cst_39 = arith.constant dense<0.000000e+00> : vector<128x128xf32>
    %84 = tpu.matmul %81, %82, %cst_39 {dimension_numbers = #tpu.dot_dimension_numbers<[1], [1], [0], [0], [0, 0, 1, 0], [], []>} : vector<128x4xbf16>, vector<128x4xbf16>, vector<128x128xf32> -> vector<128x128xf32>
    %cst_40 = arith.constant -1.000000e+30 : f32
    %85 = vector.broadcast %cst_40 : f32 to vector<128x128xf32>
    %86 = arith.select %7, %84, %85 : vector<128x128xi1>, vector<128x128xf32>
    %cst_41 = arith.constant dense<0xFF800000> : vector<128xf32>
    %87 = vector.multi_reduction <maximumf>, %86, %cst_41 [1] : vector<128x128xf32> to vector<128xf32>
    %88 = vector.shape_cast %87 : vector<128xf32> to vector<128x1xf32>
    %89 = vector.broadcast %88 : vector<128x1xf32> to vector<128x128xf32>
    %90 = arith.subf %86, %89 : vector<128x128xf32>
    %91 = math.exp %90 : vector<128x128xf32>
    %cst_42 = arith.constant dense<0.000000e+00> : vector<128xf32>
    %92 = vector.multi_reduction <add>, %91, %cst_42 [1] : vector<128x128xf32> to vector<128xf32>
    %93 = vector.shape_cast %92 : vector<128xf32> to vector<128x1xf32>
    %94 = vector.broadcast %93 : vector<128x1xf32> to vector<128x128xf32>
    %95 = arith.divf %91, %94 : vector<128x128xf32>
    %96 = arith.truncf %95 : vector<128x128xf32> to vector<128x128xbf16>
    %c0_43 = arith.constant 0 : index
    %c3 = arith.constant 3 : index
    %c0_44 = arith.constant 0 : index
    %c0_45 = arith.constant 0 : index
    %97 = vector.load %arg7[%c0_43, %c3, %c0_44, %c0_45] : memref<1x8x128x128xbf16, #tpu.memory_space<vmem>>, vector<1x1x128x128xbf16>
    %98 = vector.shape_cast %97 : vector<1x1x128x128xbf16> to vector<128x128xbf16>
    %99 = vector.shape_cast %96 : vector<128x128xbf16> to vector<1x1x128x128xbf16>
    tpu.vector_store %arg7[%c0_43, %c3, %c0_44, %c0_45], %99 {strides = array<i32>} : memref<1x8x128x128xbf16, #tpu.memory_space<vmem>>, vector<1x1x128x128xbf16>,
    %100 = arith.truncf %95 : vector<128x128xf32> to vector<128x128xbf16>
    %cst_46 = arith.constant dense<0.000000e+00> : vector<128x4xf32>
    %101 = tpu.matmul %100, %83, %cst_46 {dimension_numbers = #tpu.dot_dimension_numbers<[1], [0], [0], [1], [0, 0, 1, 1], [], []>} : vector<128x128xbf16>, vector<128x4xbf16>, vector<128x4xf32> -> vector<128x4xf32>
    %102 = arith.truncf %101 : vector<128x4xf32> to vector<128x4xbf16>
    %c0_47 = arith.constant 0 : index
    %c12_48 = arith.constant 12 : index
    %103 = vector.load %arg9[%c0_47, %c12_48] : memref<128x32xbf16, #tpu.memory_space<vmem>>, vector<128x4xbf16>
    tpu.vector_store %arg9[%c0_47, %c12_48], %102 {strides = array<i32>} : memref<128x32xbf16, #tpu.memory_space<vmem>>, vector<128x4xbf16>,
    %104 = arith.index_cast %4 : i32 to index
    %c16 = arith.constant 16 : index
    %105 = vector.load %arg8[%104, %c16] : memref<128x96xbf16, #tpu.memory_space<vmem>>, vector<128x4xbf16>
    %c0_49 = arith.constant 0 : index
    %c48 = arith.constant 48 : index
    %106 = vector.load %arg8[%c0_49, %c48] : memref<128x96xbf16, #tpu.memory_space<vmem>>, vector<128x4xbf16>
    %c0_50 = arith.constant 0 : index
    %c80 = arith.constant 80 : index
    %107 = vector.load %arg8[%c0_50, %c80] : memref<128x96xbf16, #tpu.memory_space<vmem>>, vector<128x4xbf16>
    %cst_51 = arith.constant dense<0.000000e+00> : vector<128x128xf32>
    %108 = tpu.matmul %105, %106, %cst_51 {dimension_numbers = #tpu.dot_dimension_numbers<[1], [1], [0], [0], [0, 0, 1, 0], [], []>} : vector<128x4xbf16>, vector<128x4xbf16>, vector<128x128xf32> -> vector<128x128xf32>
    %cst_52 = arith.constant -1.000000e+30 : f32
    %109 = vector.broadcast %cst_52 : f32 to vector<128x128xf32>
    %110 = arith.select %7, %108, %109 : vector<128x128xi1>, vector<128x128xf32>
    %cst_53 = arith.constant dense<0xFF800000> : vector<128xf32>
    %111 = vector.multi_reduction <maximumf>, %110, %cst_53 [1] : vector<128x128xf32> to vector<128xf32>
    %112 = vector.shape_cast %111 : vector<128xf32> to vector<128x1xf32>
    %113 = vector.broadcast %112 : vector<128x1xf32> to vector<128x128xf32>
    %114 = arith.subf %110, %113 : vector<128x128xf32>
    %115 = math.exp %114 : vector<128x128xf32>
    %cst_54 = arith.constant dense<0.000000e+00> : vector<128xf32>
    %116 = vector.multi_reduction <add>, %115, %cst_54 [1] : vector<128x128xf32> to vector<128xf32>
    %117 = vector.shape_cast %116 : vector<128xf32> to vector<128x1xf32>
    %118 = vector.broadcast %117 : vector<128x1xf32> to vector<128x128xf32>
    %119 = arith.divf %115, %118 : vector<128x128xf32>
    %120 = arith.truncf %119 : vector<128x128xf32> to vector<128x128xbf16>
    %c0_55 = arith.constant 0 : index
    %c4_56 = arith.constant 4 : index
    %c0_57 = arith.constant 0 : index
    %c0_58 = arith.constant 0 : index
    %121 = vector.load %arg7[%c0_55, %c4_56, %c0_57, %c0_58] : memref<1x8x128x128xbf16, #tpu.memory_space<vmem>>, vector<1x1x128x128xbf16>
    %122 = vector.shape_cast %121 : vector<1x1x128x128xbf16> to vector<128x128xbf16>
    %123 = vector.shape_cast %120 : vector<128x128xbf16> to vector<1x1x128x128xbf16>
    tpu.vector_store %arg7[%c0_55, %c4_56, %c0_57, %c0_58], %123 {strides = array<i32>} : memref<1x8x128x128xbf16, #tpu.memory_space<vmem>>, vector<1x1x128x128xbf16>,
    %124 = arith.truncf %119 : vector<128x128xf32> to vector<128x128xbf16>
    %cst_59 = arith.constant dense<0.000000e+00> : vector<128x4xf32>
    %125 = tpu.matmul %124, %107, %cst_59 {dimension_numbers = #tpu.dot_dimension_numbers<[1], [0], [0], [1], [0, 0, 1, 1], [], []>} : vector<128x128xbf16>, vector<128x4xbf16>, vector<128x4xf32> -> vector<128x4xf32>
    %126 = arith.truncf %125 : vector<128x4xf32> to vector<128x4xbf16>
    %c0_60 = arith.constant 0 : index
    %c16_61 = arith.constant 16 : index
    %127 = vector.load %arg9[%c0_60, %c16_61] : memref<128x32xbf16, #tpu.memory_space<vmem>>, vector<128x4xbf16>
    tpu.vector_store %arg9[%c0_60, %c16_61], %126 {strides = array<i32>} : memref<128x32xbf16, #tpu.memory_space<vmem>>, vector<128x4xbf16>,
    %128 = arith.index_cast %4 : i32 to index
    %c20 = arith.constant 20 : index
    %129 = vector.load %arg8[%128, %c20] : memref<128x96xbf16, #tpu.memory_space<vmem>>, vector<128x4xbf16>
    %c0_62 = arith.constant 0 : index
    %c52 = arith.constant 52 : index
    %130 = vector.load %arg8[%c0_62, %c52] : memref<128x96xbf16, #tpu.memory_space<vmem>>, vector<128x4xbf16>
    %c0_63 = arith.constant 0 : index
    %c84 = arith.constant 84 : index
    %131 = vector.load %arg8[%c0_63, %c84] : memref<128x96xbf16, #tpu.memory_space<vmem>>, vector<128x4xbf16>
    %cst_64 = arith.constant dense<0.000000e+00> : vector<128x128xf32>
    %132 = tpu.matmul %129, %130, %cst_64 {dimension_numbers = #tpu.dot_dimension_numbers<[1], [1], [0], [0], [0, 0, 1, 0], [], []>} : vector<128x4xbf16>, vector<128x4xbf16>, vector<128x128xf32> -> vector<128x128xf32>
    %cst_65 = arith.constant -1.000000e+30 : f32
    %133 = vector.broadcast %cst_65 : f32 to vector<128x128xf32>
    %134 = arith.select %7, %132, %133 : vector<128x128xi1>, vector<128x128xf32>
    %cst_66 = arith.constant dense<0xFF800000> : vector<128xf32>
    %135 = vector.multi_reduction <maximumf>, %134, %cst_66 [1] : vector<128x128xf32> to vector<128xf32>
    %136 = vector.shape_cast %135 : vector<128xf32> to vector<128x1xf32>
    %137 = vector.broadcast %136 : vector<128x1xf32> to vector<128x128xf32>
    %138 = arith.subf %134, %137 : vector<128x128xf32>
    %139 = math.exp %138 : vector<128x128xf32>
    %cst_67 = arith.constant dense<0.000000e+00> : vector<128xf32>
    %140 = vector.multi_reduction <add>, %139, %cst_67 [1] : vector<128x128xf32> to vector<128xf32>
    %141 = vector.shape_cast %140 : vector<128xf32> to vector<128x1xf32>
    %142 = vector.broadcast %141 : vector<128x1xf32> to vector<128x128xf32>
    %143 = arith.divf %139, %142 : vector<128x128xf32>
    %144 = arith.truncf %143 : vector<128x128xf32> to vector<128x128xbf16>
    %c0_68 = arith.constant 0 : index
    %c5 = arith.constant 5 : index
    %c0_69 = arith.constant 0 : index
    %c0_70 = arith.constant 0 : index
    %145 = vector.load %arg7[%c0_68, %c5, %c0_69, %c0_70] : memref<1x8x128x128xbf16, #tpu.memory_space<vmem>>, vector<1x1x128x128xbf16>
    %146 = vector.shape_cast %145 : vector<1x1x128x128xbf16> to vector<128x128xbf16>
    %147 = vector.shape_cast %144 : vector<128x128xbf16> to vector<1x1x128x128xbf16>
    tpu.vector_store %arg7[%c0_68, %c5, %c0_69, %c0_70], %147 {strides = array<i32>} : memref<1x8x128x128xbf16, #tpu.memory_space<vmem>>, vector<1x1x128x128xbf16>,
    %148 = arith.truncf %143 : vector<128x128xf32> to vector<128x128xbf16>
    %cst_71 = arith.constant dense<0.000000e+00> : vector<128x4xf32>
    %149 = tpu.matmul %148, %131, %cst_71 {dimension_numbers = #tpu.dot_dimension_numbers<[1], [0], [0], [1], [0, 0, 1, 1], [], []>} : vector<128x128xbf16>, vector<128x4xbf16>, vector<128x4xf32> -> vector<128x4xf32>
    %150 = arith.truncf %149 : vector<128x4xf32> to vector<128x4xbf16>
    %c0_72 = arith.constant 0 : index
    %c20_73 = arith.constant 20 : index
    %151 = vector.load %arg9[%c0_72, %c20_73] : memref<128x32xbf16, #tpu.memory_space<vmem>>, vector<128x4xbf16>
    tpu.vector_store %arg9[%c0_72, %c20_73], %150 {strides = array<i32>} : memref<128x32xbf16, #tpu.memory_space<vmem>>, vector<128x4xbf16>,
    %152 = arith.index_cast %4 : i32 to index
    %c24 = arith.constant 24 : index
    %153 = vector.load %arg8[%152, %c24] : memref<128x96xbf16, #tpu.memory_space<vmem>>, vector<128x4xbf16>
    %c0_74 = arith.constant 0 : index
    %c56 = arith.constant 56 : index
    %154 = vector.load %arg8[%c0_74, %c56] : memref<128x96xbf16, #tpu.memory_space<vmem>>, vector<128x4xbf16>
    %c0_75 = arith.constant 0 : index
    %c88 = arith.constant 88 : index
    %155 = vector.load %arg8[%c0_75, %c88] : memref<128x96xbf16, #tpu.memory_space<vmem>>, vector<128x4xbf16>
    %cst_76 = arith.constant dense<0.000000e+00> : vector<128x128xf32>
    %156 = tpu.matmul %153, %154, %cst_76 {dimension_numbers = #tpu.dot_dimension_numbers<[1], [1], [0], [0], [0, 0, 1, 0], [], []>} : vector<128x4xbf16>, vector<128x4xbf16>, vector<128x128xf32> -> vector<128x128xf32>
    %cst_77 = arith.constant -1.000000e+30 : f32
    %157 = vector.broadcast %cst_77 : f32 to vector<128x128xf32>
    %158 = arith.select %7, %156, %157 : vector<128x128xi1>, vector<128x128xf32>
    %cst_78 = arith.constant dense<0xFF800000> : vector<128xf32>
    %159 = vector.multi_reduction <maximumf>, %158, %cst_78 [1] : vector<128x128xf32> to vector<128xf32>
    %160 = vector.shape_cast %159 : vector<128xf32> to vector<128x1xf32>
    %161 = vector.broadcast %160 : vector<128x1xf32> to vector<128x128xf32>
    %162 = arith.subf %158, %161 : vector<128x128xf32>
    %163 = math.exp %162 : vector<128x128xf32>
    %cst_79 = arith.constant dense<0.000000e+00> : vector<128xf32>
    %164 = vector.multi_reduction <add>, %163, %cst_79 [1] : vector<128x128xf32> to vector<128xf32>
    %165 = vector.shape_cast %164 : vector<128xf32> to vector<128x1xf32>
    %166 = vector.broadcast %165 : vector<128x1xf32> to vector<128x128xf32>
    %167 = arith.divf %163, %166 : vector<128x128xf32>
    %168 = arith.truncf %167 : vector<128x128xf32> to vector<128x128xbf16>
    %c0_80 = arith.constant 0 : index
    %c6 = arith.constant 6 : index
    %c0_81 = arith.constant 0 : index
    %c0_82 = arith.constant 0 : index
    %169 = vector.load %arg7[%c0_80, %c6, %c0_81, %c0_82] : memref<1x8x128x128xbf16, #tpu.memory_space<vmem>>, vector<1x1x128x128xbf16>
    %170 = vector.shape_cast %169 : vector<1x1x128x128xbf16> to vector<128x128xbf16>
    %171 = vector.shape_cast %168 : vector<128x128xbf16> to vector<1x1x128x128xbf16>
    tpu.vector_store %arg7[%c0_80, %c6, %c0_81, %c0_82], %171 {strides = array<i32>} : memref<1x8x128x128xbf16, #tpu.memory_space<vmem>>, vector<1x1x128x128xbf16>,
    %172 = arith.truncf %167 : vector<128x128xf32> to vector<128x128xbf16>
    %cst_83 = arith.constant dense<0.000000e+00> : vector<128x4xf32>
    %173 = tpu.matmul %172, %155, %cst_83 {dimension_numbers = #tpu.dot_dimension_numbers<[1], [0], [0], [1], [0, 0, 1, 1], [], []>} : vector<128x128xbf16>, vector<128x4xbf16>, vector<128x4xf32> -> vector<128x4xf32>
    %174 = arith.truncf %173 : vector<128x4xf32> to vector<128x4xbf16>
    %c0_84 = arith.constant 0 : index
    %c24_85 = arith.constant 24 : index
    %175 = vector.load %arg9[%c0_84, %c24_85] : memref<128x32xbf16, #tpu.memory_space<vmem>>, vector<128x4xbf16>
    tpu.vector_store %arg9[%c0_84, %c24_85], %174 {strides = array<i32>} : memref<128x32xbf16, #tpu.memory_space<vmem>>, vector<128x4xbf16>,
    %176 = arith.index_cast %4 : i32 to index
    %c28 = arith.constant 28 : index
    %177 = vector.load %arg8[%176, %c28] : memref<128x96xbf16, #tpu.memory_space<vmem>>, vector<128x4xbf16>
    %c0_86 = arith.constant 0 : index
    %c60 = arith.constant 60 : index
    %178 = vector.load %arg8[%c0_86, %c60] : memref<128x96xbf16, #tpu.memory_space<vmem>>, vector<128x4xbf16>
    %c0_87 = arith.constant 0 : index
    %c92 = arith.constant 92 : index
    %179 = vector.load %arg8[%c0_87, %c92] : memref<128x96xbf16, #tpu.memory_space<vmem>>, vector<128x4xbf16>
    %cst_88 = arith.constant dense<0.000000e+00> : vector<128x128xf32>
    %180 = tpu.matmul %177, %178, %cst_88 {dimension_numbers = #tpu.dot_dimension_numbers<[1], [1], [0], [0], [0, 0, 1, 0], [], []>} : vector<128x4xbf16>, vector<128x4xbf16>, vector<128x128xf32> -> vector<128x128xf32>
    %cst_89 = arith.constant -1.000000e+30 : f32
    %181 = vector.broadcast %cst_89 : f32 to vector<128x128xf32>
    %182 = arith.select %7, %180, %181 : vector<128x128xi1>, vector<128x128xf32>
    %cst_90 = arith.constant dense<0xFF800000> : vector<128xf32>
    %183 = vector.multi_reduction <maximumf>, %182, %cst_90 [1] : vector<128x128xf32> to vector<128xf32>
    %184 = vector.shape_cast %183 : vector<128xf32> to vector<128x1xf32>
    %185 = vector.broadcast %184 : vector<128x1xf32> to vector<128x128xf32>
    %186 = arith.subf %182, %185 : vector<128x128xf32>
    %187 = math.exp %186 : vector<128x128xf32>
    %cst_91 = arith.constant dense<0.000000e+00> : vector<128xf32>
    %188 = vector.multi_reduction <add>, %187, %cst_91 [1] : vector<128x128xf32> to vector<128xf32>
    %189 = vector.shape_cast %188 : vector<128xf32> to vector<128x1xf32>
    %190 = vector.broadcast %189 : vector<128x1xf32> to vector<128x128xf32>
    %191 = arith.divf %187, %190 : vector<128x128xf32>
    %192 = arith.truncf %191 : vector<128x128xf32> to vector<128x128xbf16>
    %c0_92 = arith.constant 0 : index
    %c7 = arith.constant 7 : index
    %c0_93 = arith.constant 0 : index
    %c0_94 = arith.constant 0 : index
    %193 = vector.load %arg7[%c0_92, %c7, %c0_93, %c0_94] : memref<1x8x128x128xbf16, #tpu.memory_space<vmem>>, vector<1x1x128x128xbf16>
    %194 = vector.shape_cast %193 : vector<1x1x128x128xbf16> to vector<128x128xbf16>
    %195 = vector.shape_cast %192 : vector<128x128xbf16> to vector<1x1x128x128xbf16>
    tpu.vector_store %arg7[%c0_92, %c7, %c0_93, %c0_94], %195 {strides = array<i32>} : memref<1x8x128x128xbf16, #tpu.memory_space<vmem>>, vector<1x1x128x128xbf16>,
    %196 = arith.truncf %191 : vector<128x128xf32> to vector<128x128xbf16>
    %cst_95 = arith.constant dense<0.000000e+00> : vector<128x4xf32>
    %197 = tpu.matmul %196, %179, %cst_95 {dimension_numbers = #tpu.dot_dimension_numbers<[1], [0], [0], [1], [0, 0, 1, 1], [], []>} : vector<128x128xbf16>, vector<128x4xbf16>, vector<128x4xf32> -> vector<128x4xf32>
    %198 = arith.truncf %197 : vector<128x4xf32> to vector<128x4xbf16>
    %c0_96 = arith.constant 0 : index
    %c28_97 = arith.constant 28 : index
    %199 = vector.load %arg9[%c0_96, %c28_97] : memref<128x32xbf16, #tpu.memory_space<vmem>>, vector<128x4xbf16>
    tpu.vector_store %arg9[%c0_96, %c28_97], %198 {strides = array<i32>} : memref<128x32xbf16, #tpu.memory_space<vmem>>, vector<128x4xbf16>,
    %c0_98 = arith.constant 0 : index
    %c0_99 = arith.constant 0 : index
    %200 = vector.load %arg9[%c0_98, %c0_99] : memref<128x32xbf16, #tpu.memory_space<vmem>>, vector<128x32xbf16>
    %c0_100 = arith.constant 0 : index
    %c0_101 = arith.constant 0 : index
    %201 = vector.load %arg4[%c0_100, %c0_101] : memref<32x32xbf16, #tpu.memory_space<vmem>>, vector<32x32xbf16>
    %cst_102 = arith.constant dense<0.000000e+00> : vector<128x32xf32>
    %202 = tpu.matmul %200, %201, %cst_102 {dimension_numbers = #tpu.dot_dimension_numbers<[1], [0], [0], [1], [0, 0, 1, 1], [], []>} : vector<128x32xbf16>, vector<32x32xbf16>, vector<128x32xf32> -> vector<128x32xf32>
    %c0_103 = arith.constant 0 : index
    %c0_104 = arith.constant 0 : index
    %203 = vector.load %arg5[%c0_103, %c0_104] : memref<1x32xf32, #tpu.memory_space<vmem>>, vector<1x32xf32>
    %204 = vector.broadcast %203 : vector<1x32xf32> to vector<128x32xf32>
    %205 = arith.addf %202, %204 : vector<128x32xf32>
    %c0_105 = arith.constant 0 : index
    %c0_106 = arith.constant 0 : index
    %c0_107 = arith.constant 0 : index
    %206 = vector.load %arg6[%c0_105, %c0_106, %c0_107] : memref<1x128x32xf32, #tpu.memory_space<vmem>>, vector<1x128x32xf32>
    %207 = vector.shape_cast %206 : vector<1x128x32xf32> to vector<128x32xf32>
    %208 = vector.shape_cast %205 : vector<128x32xf32> to vector<1x128x32xf32>
    tpu.vector_store %arg6[%c0_105, %c0_106, %c0_107], %208 {strides = array<i32>} : memref<1x128x32xf32, #tpu.memory_space<vmem>>, vector<1x128x32xf32>,
    return
  }
  func.func @transform_0(%arg0: i32, %arg1: i32) -> (i32, i32, i32) {
    %c0_i32 = arith.constant 0 : i32
    %c0_i32_0 = arith.constant 0 : i32
    %c0_i32_1 = arith.constant 0 : i32
    return %arg0, %c0_i32, %c0_i32_0 : i32, i32, i32
  }
  func.func @transform_1(%arg0: i32, %arg1: i32) -> (i32, i32) {
    %c0_i32 = arith.constant 0 : i32
    %c0_i32_0 = arith.constant 0 : i32
    %c0_i32_1 = arith.constant 0 : i32
    return %c0_i32, %c0_i32_0 : i32, i32
  }
  func.func @transform_2(%arg0: i32, %arg1: i32) -> (i32, i32) {
    %c0_i32 = arith.constant 0 : i32
    %c0_i32_0 = arith.constant 0 : i32
    %c0_i32_1 = arith.constant 0 : i32
    return %c0_i32, %c0_i32_0 : i32, i32
  }
  func.func @transform_3(%arg0: i32, %arg1: i32) -> (i32, i32) {
    %c0_i32 = arith.constant 0 : i32
    %c0_i32_0 = arith.constant 0 : i32
    %c0_i32_1 = arith.constant 0 : i32
    return %c0_i32, %c0_i32_0 : i32, i32
  }
  func.func @transform_4(%arg0: i32, %arg1: i32) -> (i32, i32, i32) {
    %c0_i32 = arith.constant 0 : i32
    %c0_i32_0 = arith.constant 0 : i32
    return %arg0, %arg1, %c0_i32 : i32, i32, i32
  }
  func.func @transform_5(%arg0: i32, %arg1: i32) -> (i32, i32, i32, i32) {
    %c0_i32 = arith.constant 0 : i32
    %c0_i32_0 = arith.constant 0 : i32
    %c0_i32_1 = arith.constant 0 : i32
    return %arg0, %c0_i32, %arg1, %c0_i32_0 : i32, i32, i32, i32
  }
}

</mosaic_0001>

<llo_original>
// kernel: tpu_custom_call.1
$region0: #{tpu_custom_call.1}
  #allocation0 [shape = 'u32[]', space=smem, size = 0x4, offset = 0x4, fixed_abs, tag = 'smem constant byte address 0x4 - core index']
  #allocation1 [shape = 'u32[144,128]{1,0:T(1,128)}', space=vmem, size = 0x12000, scoped, tag = 'internal scratch']
  #allocation2 [shape = 'bf16[128,96]{1,0:T(16,128)(2,1)}', space=vmem, size = 0x8000, scoped, tag = 'scratch operand']
  #allocation3 [shape = 'bf16[128,32]{1,0:T(16,128)(2,1)}', space=vmem, size = 0x8000, scoped, tag = 'scratch operand']
  %s0 = inlined_call_operand.vmem [shape: bf16[2,128,32], index: 0, kind: input, shape index: {}]
  %s1 = inlined_call_operand.vmem [shape: bf16[32,96], index: 1, kind: input, shape index: {}]
  %s2 = inlined_call_operand.vmem [shape: bf16[32,32], index: 2, kind: input, shape index: {}]
  %s3 = inlined_call_operand.vmem [shape: f32[1,32], index: 3, kind: input, shape index: {}]
  %s4 = inlined_call_operand.vmem [shape: f32[2,128,32], index: 4, kind: output, shape index: {0}]
  %s5 = inlined_call_operand.hbm [shape: bf16[2,8,128,128], index: 5, kind: output, shape index: {1}]
  %6 = xla_tuple %s4, %s5
  %s7 = sld [smem:[#allocation0]]
  $region61: #{tpu_custom_call.1} parent=0
    _
  %s9 = ssub.s32 1, %s7
  %s10 = scalar_select 0, %s9, %s7
  $region1: #{tpu_custom_call.1} parent=0
    #allocation4 [shape = 'u8[524288]{0}', space=vmem, size = 0x80000, scoped, tag = 'output window, operand 1']
    #allocation5 [shape = 's32[2]{0}', space=sflag, size = 0x8, scoped, tag = 'scoped memory for tpu_custom_call.1']
    %11 = vsyncpa [#allocation5], 0
    %s12 = scalar_lea.sflag [#allocation5], 1
    %13 = vsyncpa %s12, 0
    loop: start=0, step=1, limit=4
    $region2: #{tpu_custom_call.1} parent=1 // loop_pre_header
      _
    $region3: #{tpu_custom_call.1} parent=1 // loop_header
      %s15 = sphi 0, %s19
      %p16 = scmp.ge.s32.totalorder %s15, 4
      %s22 = sphi 0, %s34
      %s23 = sphi 0, %s30
      %s24 = sphi 0, %s22
      %s25 = sphi 0, %s23
      %s26 = sphi 0, %s24
      %s27 = sphi 0, %s25
      %s37 = sphi 0, %s39
      %s40 = sphi 0, %s37
      %s41 = sphi 0, %s40
      %s57 = sphi 0, %s41
      %s61 = sphi 0, %s61
      %s63 = sphi 0, %s61
      %s64 = sphi 0, %s63
      %s78 = sphi 0, %s64
      %s82 = sphi 0, %s82
      %s84 = sphi 0, %s82
      %s85 = sphi 0, %s84
      %s99 = sphi 0, %s85
      %s103 = sphi 0, %s103
      %s105 = sphi 0, %s103
      %s106 = sphi 0, %s105
      %s120 = sphi 0, %s106
      %s128 = sphi 0, %s130
      %s131 = sphi 0, %s128
      %s132 = sphi 0, %s131
      %s148 = sphi 0, %s132
      %s156 = sphi 0, %s158
      %s159 = sphi 0, %s156
      %s160 = sphi 0, %s159
      %s176 = sphi 0, %s160
    $region4: #{tpu_custom_call.1} parent=1 // loop_header_branch
      %18 = sbr.rel (%p16) target = $region8
    $region5: #{tpu_custom_call.1} parent=1 // loop_body
      %s20 = ssub.s32 %s15, 1
      %s21 = ssub.s32 %s15, 2
      %s28 = sadd.s32 1, %s23
      %p29 = scmp.ge.s32.totalorder %s28, 1
      %s30 = scalar_select %p29, 0, %s28
      %s31 = sadd.s32 1, %s22
      %s32 = scalar_select %p29, %s31, %s22
      %p33 = scmp.ge.s32.totalorder %s32, 2
      %s34 = scalar_select %p33, 0, %s32
      %s35 = ssub.s32 %s22, %s34
      %p36 = scmp.eq.s32.totalorder %s35, 0
      %s38 = sadd.s32 %s37, 1
      %s39 = scalar_select %p36, %s37, %s38
      %p42 = pneg %p36
      %p43 = scmp.eq.s32.totalorder %s15, 1
      %p44 = por %p42, %p43
      %p45 = scmp.ne.s32.totalorder %s37, %s40
      %p46 = scmp.eq.s32.totalorder %s15, 0
      %p47 = por %p45, %p46
      %p48 = scmp.ne.s32.totalorder %s37, %s40
      %p49 = scmp.eq.s32.totalorder %s20, 1
      %p50 = por %p48, %p49
      %p51 = scmp.ne.s32.totalorder %s40, %s41
      %p52 = scmp.eq.s32.totalorder %s20, 0
      %p53 = por %p51, %p52
      %p54 = scmp.ne.s32.totalorder %s40, %s41
      %p55 = scmp.eq.s32.totalorder %s21, 1
      %p56 = por %p54, %p55
      %p58 = scmp.ne.s32.totalorder %s41, %s57
      %p59 = scmp.eq.s32.totalorder %s21, 0
      %p60 = por %p58, %p59
      %s62 = sadd.s32 %s61, 1
      %p65 = scmp.eq.s32.totalorder %s15, 1
      %p66 = scmp.ne.s32.totalorder %s61, %s63
      %p67 = scmp.eq.s32.totalorder %s15, 0
      %p68 = por %p66, %p67
      %p69 = scmp.ne.s32.totalorder %s61, %s63
      %p70 = scmp.eq.s32.totalorder %s20, 1
      %p71 = por %p69, %p70
      %p72 = scmp.ne.s32.totalorder %s63, %s64
      %p73 = scmp.eq.s32.totalorder %s20, 0
      %p74 = por %p72, %p73
      %p75 = scmp.ne.s32.totalorder %s63, %s64
      %p76 = scmp.eq.s32.totalorder %s21, 1
      %p77 = por %p75, %p76
      %p79 = scmp.ne.s32.totalorder %s64, %s78
      %p80 = scmp.eq.s32.totalorder %s21, 0
      %p81 = por %p79, %p80
      %s83 = sadd.s32 %s82, 1
      %p86 = scmp.eq.s32.totalorder %s15, 1
      %p87 = scmp.ne.s32.totalorder %s82, %s84
      %p88 = scmp.eq.s32.totalorder %s15, 0
      %p89 = por %p87, %p88
      %p90 = scmp.ne.s32.totalorder %s82, %s84
      %p91 = scmp.eq.s32.totalorder %s20, 1
      %p92 = por %p90, %p91
      %p93 = scmp.ne.s32.totalorder %s84, %s85
      %p94 = scmp.eq.s32.totalorder %s20, 0
      %p95 = por %p93, %p94
      %p96 = scmp.ne.s32.totalorder %s84, %s85
      %p97 = scmp.eq.s32.totalorder %s21, 1
      %p98 = por %p96, %p97
      %p100 = scmp.ne.s32.totalorder %s85, %s99
      %p101 = scmp.eq.s32.totalorder %s21, 0
      %p102 = por %p100, %p101
      %s104 = sadd.s32 %s103, 1
      %p107 = scmp.eq.s32.totalorder %s15, 1
      %p108 = scmp.ne.s32.totalorder %s103, %s105
      %p109 = scmp.eq.s32.totalorder %s15, 0
      %p110 = por %p108, %p109
      %p111 = scmp.ne.s32.totalorder %s103, %s105
      %p112 = scmp.eq.s32.totalorder %s20, 1
      %p113 = por %p111, %p112
      %p114 = scmp.ne.s32.totalorder %s105, %s106
      %p115 = scmp.eq.s32.totalorder %s20, 0
      %p116 = por %p114, %p115
      %p117 = scmp.ne.s32.totalorder %s105, %s106
      %p118 = scmp.eq.s32.totalorder %s21, 1
      %p119 = por %p117, %p118
      %p121 = scmp.ne.s32.totalorder %s106, %s120
      %p122 = scmp.eq.s32.totalorder %s21, 0
      %p123 = por %p121, %p122
      %s124 = ssub.s32 %s22, %s34
      %s125 = ssub.s32 %s23, %s30
      %s126 = sor.u32 %s124, %s125
      %p127 = scmp.eq.s32.totalorder %s126, 0
      %s129 = sadd.s32 %s128, 1
      %s130 = scalar_select %p127, %s128, %s129
      %p133 = pneg %p127
      %p134 = scmp.eq.s32.totalorder %s15, 1
      %p135 = por %p133, %p134
      %p136 = scmp.ne.s32.totalorder %s128, %s131
      %p137 = scmp.eq.s32.totalorder %s15, 0
      %p138 = por %p136, %p137
      %p139 = scmp.ne.s32.totalorder %s128, %s131
      %p140 = scmp.eq.s32.totalorder %s20, 1
      %p141 = por %p139, %p140
      %p142 = scmp.ne.s32.totalorder %s131, %s132
      %p143 = scmp.eq.s32.totalorder %s20, 0
      %p144 = por %p142, %p143
      %p145 = scmp.ne.s32.totalorder %s131, %s132
      %p146 = scmp.eq.s32.totalorder %s21, 1
      %p147 = por %p145, %p146
      %p149 = scmp.ne.s32.totalorder %s132, %s148
      %p150 = scmp.eq.s32.totalorder %s21, 0
      %p151 = por %p149, %p150
      %s152 = ssub.s32 %s22, %s34
      %s153 = ssub.s32 %s23, %s30
      %s154 = sor.u32 %s152, %s153
      %p155 = scmp.eq.s32.totalorder %s154, 0
      %s157 = sadd.s32 %s156, 1
      %s158 = scalar_select %p155, %s156, %s157
      %p161 = pneg %p155
      %p162 = scmp.eq.s32.totalorder %s15, 1
      %p163 = por %p161, %p162
      %p164 = scmp.ne.s32.totalorder %s156, %s159
      %p165 = scmp.eq.s32.totalorder %s15, 0
      %p166 = por %p164, %p165
      %p167 = scmp.ne.s32.totalorder %s156, %s159
      %p168 = scmp.eq.s32.totalorder %s20, 1
      %p169 = por %p167, %p168
      %p170 = scmp.ne.s32.totalorder %s159, %s160
      %p171 = scmp.eq.s32.totalorder %s20, 0
      %p172 = por %p170, %p171
      %p173 = scmp.ne.s32.totalorder %s159, %s160
      %p174 = scmp.eq.s32.totalorder %s21, 1
      %p175 = por %p173, %p174
      %p177 = scmp.ne.s32.totalorder %s160, %s176
      %p178 = scmp.eq.s32.totalorder %s21, 0
      %p179 = por %p177, %p178
      %p180 = scmp.le.s32.totalorder 1, %s15
      %p181 = scmp.lt.s32.totalorder %s15, 3
      %p182 = pnand %p180, %p181
      %p183 = pneg %p182
      // Predicated region
      $region9: #{tpu_custom_call.1} parent=5 // pred_check
        _
      $region10: #{tpu_custom_call.1} parent=5 // pred_check_branch
        %185 = sbr.rel (%p182) target = $region12
      $region11: #{tpu_custom_call.1} parent=5 // pred_region
        %s186 = ssub.s32 %s15, 1
        // Predicated region
        $region13: #{tpu_custom_call.1} parent=11 // pred_check
          %p187 = pneg %p74
        $region14: #{tpu_custom_call.1} parent=11 // pred_check_branch
          %189 = sbr.rel (%p187) target = $region16
        $region15: #{tpu_custom_call.1} parent=11 // pred_region
          _
        $region16: #{tpu_custom_call.1} parent=11 // pred_fallthru
          _
        // Predicated region
        $region17: #{tpu_custom_call.1} parent=11 // pred_check
          %p190 = pneg %p95
        $region18: #{tpu_custom_call.1} parent=11 // pred_check_branch
          %192 = sbr.rel (%p190) target = $region20
        $region19: #{tpu_custom_call.1} parent=11 // pred_region
          _
        $region20: #{tpu_custom_call.1} parent=11 // pred_fallthru
          _
        // Predicated region
        $region21: #{tpu_custom_call.1} parent=11 // pred_check
          %p193 = pneg %p116
        $region22: #{tpu_custom_call.1} parent=11 // pred_check_branch
          %195 = sbr.rel (%p193) target = $region24
        $region23: #{tpu_custom_call.1} parent=11 // pred_region
          _
        $region24: #{tpu_custom_call.1} parent=11 // pred_fallthru
          _
      $region12: #{tpu_custom_call.1} parent=5 // pred_fallthru
        _
      %p196 = scmp.lt.s32.totalorder %s15, 2
      // Predicated region
      $region25: #{tpu_custom_call.1} parent=5 // pred_check
        %p197 = pneg %p196
      $region26: #{tpu_custom_call.1} parent=5 // pred_check_branch
        %199 = sbr.rel (%p197) target = $region28
      $region27: #{tpu_custom_call.1} parent=5 // pred_region
        // Predicated region
        $region29: #{tpu_custom_call.1} parent=27 // pred_check
          %p200 = pneg %p47
        $region30: #{tpu_custom_call.1} parent=27 // pred_check_branch
          %202 = sbr.rel (%p200) target = $region32
        $region31: #{tpu_custom_call.1} parent=27 // pred_region
          %p203 = scmp.lt.s32.totalorder %s22, 1
          %s204 = scalar_select %p203, %s22, 1
          %s205 = smul.addr %s204, 16
          %s206 = smul.addr %s205, 4
          %s207 = scalar_lea.vmem %s0, %s206
        $region32: #{tpu_custom_call.1} parent=27 // pred_fallthru
          _
      $region28: #{tpu_custom_call.1} parent=5 // pred_fallthru
        _
      %p208 = scmp.le.s32.totalorder 1, %s15
      %p209 = scmp.lt.s32.totalorder %s15, 3
      %p210 = pnand %p208, %p209
      %p211 = pneg %p210
      // Predicated region
      $region33: #{tpu_custom_call.1} parent=5 // pred_check
        _
      $region34: #{tpu_custom_call.1} parent=5 // pred_check_branch
        %213 = sbr.rel (%p210) target = $region36
      $region35: #{tpu_custom_call.1} parent=5 // pred_region
        %s214 = ssub.s32 %s15, 1
        %p215 = scmp.lt.s32.totalorder %s24, 1
        %s216 = scalar_select %p215, %s24, 1
        %s217 = smul.addr %s216, 16
        %s218 = smul.addr %s217, 4
        %s219 = scalar_lea.vmem %s0, %s218
        %p220 = pneg %p53
        %p221 = pneg %p50
        %p222 = pneg %p74
        %p223 = pneg %p71
        %p224 = pneg %p95
        %p225 = pneg %p92
        %p226 = pneg %p116
        %p227 = pneg %p113
        %p228 = pneg %p144
        %p229 = pneg %p141
        %s230 = smul.u32 16, %s25
        %p231 = scmp.lt.s32.totalorder %s24, 1
        %s232 = scalar_select %p231, %s24, 1
        %p233 = scmp.lt.s32.totalorder %s230, 15
        %s234 = scalar_select %p233, %s230, 15
        %s235 = smul.addr %s232, 16
        %s236 = sadd.s32 %s234, %s235
        %s237 = smul.addr %s236, 8
        %s238 = scalar_lea.vmem %s4, %s237
        %p239 = pneg %p172
        %p240 = pneg %p169
        %s241 = sand.u32 %s159, 1
        %s242 = scalar_lea.sflag [#allocation5], %s241
        %s243 = sand.u32 %s159, 1
        %s244 = smul.addr %s243, 512
        %s245 = scalar_lea.vmem [#allocation4], %s244
        %p246 = scmp.lt.s32.totalorder %s24, 1
        %s247 = scalar_select %p246, %s24, 1
        %s248 = smul.addr %s247, 16
        %s249 = smul.addr %s248, 4
        %s250 = scalar_lea.vmem %s0, %s249
        %s251 = smul.u32 16, %s25
        %p252 = scmp.lt.s32.totalorder %s24, 1
        %s253 = scalar_select %p252, %s24, 1
        %p254 = scmp.lt.s32.totalorder %s251, 15
        %s255 = scalar_select %p254, %s251, 15
        %s256 = smul.addr %s253, 16
        %s257 = sadd.s32 %s255, %s256
        %s258 = smul.addr %s257, 8
        %s259 = scalar_lea.vmem %s4, %s258
        %s260 = smul.u32 16, %s25
        %s261 = smul.u32 16, %s25
        %p263 = scmp.eq.s32.totalorder %s25, 0
        // Predicated region
        $region37: #{tpu_custom_call.1} parent=35 // pred_check
          %p264 = pneg %p263
        $region38: #{tpu_custom_call.1} parent=35 // pred_check_branch
          %266 = sbr.rel (%p264) target = $region40
        $region39: #{tpu_custom_call.1} parent=35 // pred_region
          %v267 = vld [vmem:[%s250] sm:$0xf]
          %v268 = vld [vmem:[%s250 + $0x4] sm:$0xf]
          %v269 = vld [vmem:[%s250 + $0x8] sm:$0xf]
          %v270 = vld [vmem:[%s250 + $0xc] sm:$0xf]
          %v271 = vld [vmem:[%s250 + $0x10] sm:$0xf]
          %v272 = vld [vmem:[%s250 + $0x14] sm:$0xf]
          %v273 = vld [vmem:[%s250 + $0x18] sm:$0xf]
          %v274 = vld [vmem:[%s250 + $0x1c] sm:$0xf]
          %v275 = vld [vmem:[%s250 + $0x20] sm:$0xf]
          %v276 = vld [vmem:[%s250 + $0x24] sm:$0xf]
          %v277 = vld [vmem:[%s250 + $0x28] sm:$0xf]
          %v278 = vld [vmem:[%s250 + $0x2c] sm:$0xf]
          %v279 = vld [vmem:[%s250 + $0x30] sm:$0xf]
          %v280 = vld [vmem:[%s250 + $0x34] sm:$0xf]
          %v281 = vld [vmem:[%s250 + $0x38] sm:$0xf]
          %v282 = vld [vmem:[%s250 + $0x3c] sm:$0xf]
          %v283 = vld [vmem:[%s1] sm:$0xf]
          %v284 = vld [vmem:[%s1 + $0x4] sm:$0xf]
          %v285 = vld [vmem:[%s1 + $0x8] sm:$0xf]
          %v286 = vld [vmem:[%s1 + $0xc] sm:$0xf]
          %v303 = vunpack.c.l.b16 %v267
          %v304 = vunpack.c.l.b16 %v268
          %v305 = vunpack.c.l.b16 %v269
          %v306 = vunpack.c.l.b16 %v270
          %v307 = vunpack.c.l.b16 %v271
          %v308 = vunpack.c.l.b16 %v272
          %v309 = vunpack.c.l.b16 %v273
          %v310 = vunpack.c.l.b16 %v274
          %v311 = vunpack.c.l.b16 %v275
          %v312 = vunpack.c.l.b16 %v276
          %v313 = vunpack.c.l.b16 %v277
          %v314 = vunpack.c.l.b16 %v278
          %v315 = vunpack.c.l.b16 %v279
          %v316 = vunpack.c.l.b16 %v280
          %v317 = vunpack.c.l.b16 %v281
          %v318 = vunpack.c.l.b16 %v282
          %v319 = vpack.c.b16 %v304, %v303
          %v320 = vpack.c.b16 %v306, %v305
          %v321 = vpack.c.b16 %v308, %v307
          %v322 = vpack.c.b16 %v310, %v309
          %v323 = vpack.c.b16 %v312, %v311
          %v324 = vpack.c.b16 %v314, %v313
          %v325 = vpack.c.b16 %v316, %v315
          %v326 = vpack.c.b16 %v318, %v317
          %v331 = vunpack.c.l.b16 %v283
          %v332 = vunpack.c.l.b16 %v284
          %v333 = vunpack.c.l.b16 %v285
          %v334 = vunpack.c.l.b16 %v286
          %v335 = vpack.c.b16 %v332, %v331
          %v336 = vpack.c.b16 %v334, %v333
          %vm339 = vcmask 261120
          %v341 = vsel %vm339, %v319, 0
          %v344 = vsel %vm339, %v320, 0
          %v347 = vsel %vm339, %v321, 0
          %v350 = vsel %vm339, %v322, 0
          %v353 = vsel %vm339, %v323, 0
          %v356 = vsel %vm339, %v324, 0
          %v359 = vsel %vm339, %v325, 0
          %v362 = vsel %vm339, %v326, 0
          %364 = vmatprep.subr.bf16.mxu0 0
          %365 = vmatpush1.bf16.msra.mxu0 %v335
          %366 = vmatprep.subr.bf16.mxu0 0
          %367 = vmatpush1.bf16.msra.mxu0 %v336
          %368 = vmatprep.subr.bf16.mxu0 0
          %369 = vmatpush1.bf16.msra.mxu0 0
          %370 = vmatprep.subr.bf16.mxu0 0
          %371 = vmatpush1.bf16.msra.mxu0 0
          %372 = vmatprep.subr.bf16.mxu0 0
          %373 = vmatpush1.bf16.msra.mxu0 0
          %374 = vmatprep.subr.bf16.mxu0 0
          %375 = vmatpush1.bf16.msra.mxu0 0
          %376 = vmatprep.subr.bf16.mxu0 0
          %377 = vmatpush1.bf16.msra.mxu0 0
          %378 = vmatprep.subr.bf16.mxu0 0
          %379 = vmatpush1.bf16.msra.mxu0 0
          %380 = vmatprep.subr.bf16.mxu0 0
          %381 = vmatpush1.bf16.msra.mxu0 0
          %382 = vmatprep.subr.bf16.mxu0 0
          %383 = vmatpush1.bf16.msra.mxu0 0
          %384 = vmatprep.subr.bf16.mxu0 0
          %385 = vmatpush1.bf16.msra.mxu0 0
          %386 = vmatprep.subr.bf16.mxu0 0
          %387 = vmatpush1.bf16.msra.mxu0 0
          %388 = vmatprep.subr.bf16.mxu0 0
          %389 = vmatpush1.bf16.msra.mxu0 0
          %390 = vmatprep.subr.bf16.mxu0 0
          %391 = vmatpush1.bf16.msra.mxu0 0
          %392 = vmatprep.subr.bf16.mxu0 0
          %393 = vmatpush1.bf16.msra.mxu0 0
          %394 = vmatprep.subr.bf16.mxu0 0
          %395 = vmatpush1.bf16.msra.mxu0 0
          %396 = vmatprep.mubr.bf16.mxu0 0
          %397 = vmatmul.mubr.bf16.gmra.mrb[0].mxu0 %v341
          %v398 = vpop.f32.mrb[0].mxu0
          %v399 = vadd.f32 0.0, %v398
          %v400 = vpop.f32.mrb[0].mxu0
          %v401 = vpop.f32.mrb[0].mxu0
          %v402 = vadd.f32 0.0, %v401
          %v403 = vpop.f32.mrb[0].mxu0
          %404 = vmatprep.mubr.bf16.mxu0 0
          %405 = vmatmul.mubr.bf16.gmra.mrb[0].mxu0 %v344
          %v406 = vpop.f32.mrb[0].mxu0
          %v407 = vadd.f32 0.0, %v406
          %v408 = vpop.f32.mrb[0].mxu0
          %v409 = vpop.f32.mrb[0].mxu0
          %v410 = vadd.f32 0.0, %v409
          %v411 = vpop.f32.mrb[0].mxu0
          %412 = vmatprep.mubr.bf16.mxu0 0
          %413 = vmatmul.mubr.bf16.gmra.mrb[0].mxu0 %v347
          %v414 = vpop.f32.mrb[0].mxu0
          %v415 = vadd.f32 0.0, %v414
          %v416 = vpop.f32.mrb[0].mxu0
          %v417 = vpop.f32.mrb[0].mxu0
          %v418 = vadd.f32 0.0, %v417
          %v419 = vpop.f32.mrb[0].mxu0
          %420 = vmatprep.mubr.bf16.mxu0 0
          %421 = vmatmul.mubr.bf16.gmra.mrb[0].mxu0 %v350
          %v422 = vpop.f32.mrb[0].mxu0
          %v423 = vadd.f32 0.0, %v422
          %v424 = vpop.f32.mrb[0].mxu0
          %v425 = vpop.f32.mrb[0].mxu0
          %v426 = vadd.f32 0.0, %v425
          %v427 = vpop.f32.mrb[0].mxu0
          %428 = vmatprep.mubr.bf16.mxu0 0
          %429 = vmatmul.mubr.bf16.gmra.mrb[0].mxu0 %v353
          %v430 = vpop.f32.mrb[0].mxu0
          %v431 = vadd.f32 0.0, %v430
          %v432 = vpop.f32.mrb[0].mxu0
          %v433 = vpop.f32.mrb[0].mxu0
          %v434 = vadd.f32 0.0, %v433
          %v435 = vpop.f32.mrb[0].mxu0
          %436 = vmatprep.mubr.bf16.mxu0 0
          %437 = vmatmul.mubr.bf16.gmra.mrb[0].mxu0 %v356
          %v438 = vpop.f32.mrb[0].mxu0
          %v439 = vadd.f32 0.0, %v438
          %v440 = vpop.f32.mrb[0].mxu0
          %v441 = vpop.f32.mrb[0].mxu0
          %v442 = vadd.f32 0.0, %v441
          %v443 = vpop.f32.mrb[0].mxu0
          %444 = vmatprep.mubr.bf16.mxu0 0
          %445 = vmatmul.mubr.bf16.gmra.mrb[0].mxu0 %v359
          %v446 = vpop.f32.mrb[0].mxu0
          %v447 = vadd.f32 0.0, %v446
          %v448 = vpop.f32.mrb[0].mxu0
          %v449 = vpop.f32.mrb[0].mxu0
          %v450 = vadd.f32 0.0, %v449
          %v451 = vpop.f32.mrb[0].mxu0
          %452 = vmatprep.mubr.bf16.mxu0 0
          %453 = vmatmul.mubr.bf16.gmra.mrb[0].mxu0 %v362
          %v454 = vpop.f32.mrb[0].mxu0
          %v455 = vadd.f32 0.0, %v454
          %v456 = vpop.f32.mrb[0].mxu0
          %v457 = vpop.f32.mrb[0].mxu0
          %v458 = vadd.f32 0.0, %v457
          %v459 = vpop.f32.mrb[0].mxu0
          %460 = vdwg.mxu0
          %v461 = vpack.c.bf16 %v402, %v399
          %v462 = vpack.c.bf16 %v410, %v407
          %v463 = vpack.c.bf16 %v418, %v415
          %v464 = vpack.c.bf16 %v426, %v423
          %v465 = vpack.c.bf16 %v434, %v431
          %v466 = vpack.c.bf16 %v442, %v439
          %v467 = vpack.c.bf16 %v450, %v447
          %v468 = vpack.c.bf16 %v458, %v455
          %vm469 = vcmask 785408
          %470 = vst.msk [vmem:[#allocation2] sm:$0xff] %vm469, %v461
          %471 = vst.msk [vmem:[#allocation2 + $0x8] sm:$0xff] %vm469, %v462
          %472 = vst.msk [vmem:[#allocation2 + $0x10] sm:$0xff] %vm469, %v463
          %473 = vst.msk [vmem:[#allocation2 + $0x18] sm:$0xff] %vm469, %v464
          %474 = vst.msk [vmem:[#allocation2 + $0x20] sm:$0xff] %vm469, %v465
          %475 = vst.msk [vmem:[#allocation2 + $0x28] sm:$0xff] %vm469, %v466
          %476 = vst.msk [vmem:[#allocation2 + $0x30] sm:$0xff] %vm469, %v467
          %477 = vst.msk [vmem:[#allocation2 + $0x38] sm:$0xff] %vm469, %v468
        $region40: #{tpu_custom_call.1} parent=35 // pred_fallthru
          _
        %s478 = smul.u32 %s25, 128
        %v479 = vlaneseq
        %v480 = vand.u32 %v479, 127
        %vm481 = vcmp.lt.s32.totalorder %v480, 8
        %s482 = sshra.s32 %s478, 4
        %s483 = sand.u32 %s478, 15
        %s484 = smul.addr %s482, 8
        %s485 = scalar_lea.vmem [#allocation2], %s484
        %v486 = vld [vmem:[%s485] sm:$0xff]
        %v487 = vld [vmem:[%s485 + $0x8] sm:$0xff]
        %v488 = vld [vmem:[%s485 + $0x10] sm:$0xff]
        %v489 = vld [vmem:[%s485 + $0x18] sm:$0xff]
        %v490 = vld [vmem:[%s485 + $0x20] sm:$0xff]
        %v491 = vld [vmem:[%s485 + $0x28] sm:$0xff]
        %v492 = vld [vmem:[%s485 + $0x30] sm:$0xff]
        %v493 = vld [vmem:[%s485 + $0x38] sm:$0xff]
        %v494 = vld [vmem:[#allocation2] sm:$0xff]
        %v495 = vld [vmem:[#allocation2 + $0x8] sm:$0xff]
        %v496 = vld [vmem:[#allocation2 + $0x10] sm:$0xff]
        %v497 = vld [vmem:[#allocation2 + $0x18] sm:$0xff]
        %v498 = vld [vmem:[#allocation2 + $0x20] sm:$0xff]
        %v499 = vld [vmem:[#allocation2 + $0x28] sm:$0xff]
        %v500 = vld [vmem:[#allocation2 + $0x30] sm:$0xff]
        %v501 = vld [vmem:[#allocation2 + $0x38] sm:$0xff]
        %510 = vrot.lane.b32.xlu0 %v494, 96
        %v511 = vpop.permute.xlu0 %510
        %512 = vrot.lane.b32.xlu0 %v495, 96
        %v513 = vpop.permute.xlu0 %512
        %514 = vrot.lane.b32.xlu0 %v496, 96
        %v515 = vpop.permute.xlu0 %514
        %516 = vrot.lane.b32.xlu0 %v497, 96
        %v517 = vpop.permute.xlu0 %516
        %518 = vrot.lane.b32.xlu0 %v498, 96
        %v519 = vpop.permute.xlu0 %518
        %520 = vrot.lane.b32.xlu0 %v499, 96
        %v521 = vpop.permute.xlu0 %520
        %522 = vrot.lane.b32.xlu0 %v500, 96
        %v523 = vpop.permute.xlu0 %522
        %524 = vrot.lane.b32.xlu0 %v501, 96
        %v525 = vpop.permute.xlu0 %524
        %vm526 = vcmask 31744
        %v528 = vsel %vm526, %v486, 0
        %v531 = vsel %vm526, %v487, 0
        %v534 = vsel %vm526, %v488, 0
        %v537 = vsel %vm526, %v489, 0
        %v540 = vsel %vm526, %v490, 0
        %v543 = vsel %vm526, %v491, 0
        %v546 = vsel %vm526, %v492, 0
        %v549 = vsel %vm526, %v493, 0
        %v552 = vsel %vm526, %v511, 0
        %v555 = vsel %vm526, %v513, 0
        %v558 = vsel %vm526, %v515, 0
        %v561 = vsel %vm526, %v517, 0
        %v564 = vsel %vm526, %v519, 0
        %v567 = vsel %vm526, %v521, 0
        %v570 = vsel %vm526, %v523, 0
        %v573 = vsel %vm526, %v525, 0
        %575 = vmatprep.subr.bf16.mxu0 0
        %576 = vmatpush1.bf16.xpose.msra.mxu0 %v552
        %577 = vmatprep.subr.bf16.mxu0 0
        %578 = vmatpush1.bf16.xpose.msra.mxu0 %v555
        %579 = vmatprep.subr.bf16.mxu0 0
        %580 = vmatpush1.bf16.xpose.msra.mxu0 %v558
        %581 = vmatprep.subr.bf16.mxu0 0
        %582 = vmatpush1.bf16.xpose.msra.mxu0 %v561
        %583 = vmatprep.subr.bf16.mxu0 0
        %584 = vmatpush1.bf16.xpose.msra.mxu0 %v564
        %585 = vmatprep.subr.bf16.mxu0 0
        %586 = vmatpush1.bf16.xpose.msra.mxu0 %v567
        %587 = vmatprep.subr.bf16.mxu0 0
        %588 = vmatpush1.bf16.xpose.msra.mxu0 %v570
        %589 = vmatprep.subr.bf16.mxu0 0
        %590 = vmatpush1.bf16.xpose.msra.mxu0 %v573
        %591 = vmatprep.subr.bf16.mxu0 0
        %592 = vmatpush1.bf16.xpose.msra.mxu0 0
        %593 = vmatprep.subr.bf16.mxu0 0
        %594 = vmatpush1.bf16.xpose.msra.mxu0 0
        %595 = vmatprep.subr.bf16.mxu0 0
        %596 = vmatpush1.bf16.xpose.msra.mxu0 0
        %597 = vmatprep.subr.bf16.mxu0 0
        %598 = vmatpush1.bf16.xpose.msra.mxu0 0
        %599 = vmatprep.subr.bf16.mxu0 0
        %600 = vmatpush1.bf16.xpose.msra.mxu0 0
        %601 = vmatprep.subr.bf16.mxu0 0
        %602 = vmatpush1.bf16.xpose.msra.mxu0 0
        %603 = vmatprep.subr.bf16.mxu0 0
        %604 = vmatpush1.bf16.xpose.msra.mxu0 0
        %605 = vmatprep.subr.bf16.mxu0 0
        %606 = vmatpush1.bf16.xpose.msra.mxu0 0
        %607 = vmatprep.mubr.bf16.mxu0 0
        %608 = vmatmul.mubr.bf16.gmra.mrb[0].mxu0 %v528
        %v609 = vpop.f32.mrb[0].mxu0
        %v610 = vadd.f32 0.0, %v609
        %v611 = vpop.f32.mrb[0].mxu0
        %v612 = vpop.f32.mrb[0].mxu0
        %v613 = vadd.f32 0.0, %v612
        %v614 = vpop.f32.mrb[0].mxu0
        %615 = vmatprep.mubr.bf16.mxu0 0
        %616 = vmatmul.mubr.bf16.gmra.mrb[0].mxu0 %v531
        %v617 = vpop.f32.mrb[0].mxu0
        %v618 = vadd.f32 0.0, %v617
        %v619 = vpop.f32.mrb[0].mxu0
        %v620 = vpop.f32.mrb[0].mxu0
        %v621 = vadd.f32 0.0, %v620
        %v622 = vpop.f32.mrb[0].mxu0
        %623 = vmatprep.mubr.bf16.mxu0 0
        %624 = vmatmul.mubr.bf16.gmra.mrb[0].mxu0 %v534
        %v625 = vpop.f32.mrb[0].mxu0
        %v626 = vadd.f32 0.0, %v625
        %v627 = vpop.f32.mrb[0].mxu0
        %v628 = vpop.f32.mrb[0].mxu0
        %v629 = vadd.f32 0.0, %v628
        %v630 = vpop.f32.mrb[0].mxu0
        %631 = vmatprep.mubr.bf16.mxu0 0
        %632 = vmatmul.mubr.bf16.gmra.mrb[0].mxu0 %v537
        %v633 = vpop.f32.mrb[0].mxu0
        %v634 = vadd.f32 0.0, %v633
        %v635 = vpop.f32.mrb[0].mxu0
        %v636 = vpop.f32.mrb[0].mxu0
        %v637 = vadd.f32 0.0, %v636
        %v638 = vpop.f32.mrb[0].mxu0
        %639 = vmatprep.mubr.bf16.mxu0 0
        %640 = vmatmul.mubr.bf16.gmra.mrb[0].mxu0 %v540
        %v641 = vpop.f32.mrb[0].mxu0
        %v642 = vadd.f32 0.0, %v641
        %v643 = vpop.f32.mrb[0].mxu0
        %v644 = vpop.f32.mrb[0].mxu0
        %v645 = vadd.f32 0.0, %v644
        %v646 = vpop.f32.mrb[0].mxu0
        %647 = vmatprep.mubr.bf16.mxu0 0
        %648 = vmatmul.mubr.bf16.gmra.mrb[0].mxu0 %v543
        %v649 = vpop.f32.mrb[0].mxu0
        %v650 = vadd.f32 0.0, %v649
        %v651 = vpop.f32.mrb[0].mxu0
        %v652 = vpop.f32.mrb[0].mxu0
        %v653 = vadd.f32 0.0, %v652
        %v654 = vpop.f32.mrb[0].mxu0
        %655 = vmatprep.mubr.bf16.mxu0 0
        %656 = vmatmul.mubr.bf16.gmra.mrb[0].mxu0 %v546
        %v657 = vpop.f32.mrb[0].mxu0
        %v658 = vadd.f32 0.0, %v657
        %v659 = vpop.f32.mrb[0].mxu0
        %v660 = vpop.f32.mrb[0].mxu0
        %v661 = vadd.f32 0.0, %v660
        %v662 = vpop.f32.mrb[0].mxu0
        %663 = vmatprep.mubr.bf16.mxu0 0
        %664 = vmatmul.mubr.bf16.gmra.mrb[0].mxu0 %v549
        %v665 = vpop.f32.mrb[0].mxu0
        %v666 = vadd.f32 0.0, %v665
        %v667 = vpop.f32.mrb[0].mxu0
        %v668 = vpop.f32.mrb[0].mxu0
        %v669 = vadd.f32 0.0, %v668
        %v670 = vpop.f32.mrb[0].mxu0
        %671 = vdwg.mxu0
        %v672 = vsel %vm481, %v610, -1e+30
        %v673 = vsel %vm481, %v613, -1e+30
        %v674 = vsel %vm481, %v618, -1e+30
        %v675 = vsel %vm481, %v621, -1e+30
        %v676 = vsel %vm481, %v626, -1e+30
        %v677 = vsel %vm481, %v629, -1e+30
        %v678 = vsel %vm481, %v634, -1e+30
        %v679 = vsel %vm481, %v637, -1e+30
        %v680 = vsel %vm481, %v642, -1e+30
        %v681 = vsel %vm481, %v645, -1e+30
        %v682 = vsel %vm481, %v650, -1e+30
        %v683 = vsel %vm481, %v653, -1e+30
        %v684 = vsel %vm481, %v658, -1e+30
        %v685 = vsel %vm481, %v661, -1e+30
        %v686 = vsel %vm481, %v666, -1e+30
        %v687 = vsel %vm481, %v669, -1e+30
        %688 = vmax.xlane.f32.xlu0 %v672
        %v689 = vpop.xlane.xlu0 %688
        %690 = vmax.xlane.f32.xlu0 %v673
        %v691 = vpop.xlane.xlu0 %690
        %692 = vmax.xlane.f32.xlu0 %v674
        %v693 = vpop.xlane.xlu0 %692
        %694 = vmax.xlane.f32.xlu0 %v675
        %v695 = vpop.xlane.xlu0 %694
        %696 = vmax.xlane.f32.xlu0 %v676
        %v697 = vpop.xlane.xlu0 %696
        %698 = vmax.xlane.f32.xlu0 %v677
        %v699 = vpop.xlane.xlu0 %698
        %700 = vmax.xlane.f32.xlu0 %v678
        %v701 = vpop.xlane.xlu0 %700
        %702 = vmax.xlane.f32.xlu0 %v679
        %v703 = vpop.xlane.xlu0 %702
        %704 = vmax.xlane.f32.xlu0 %v680
        %v705 = vpop.xlane.xlu0 %704
        %706 = vmax.xlane.f32.xlu0 %v681
        %v707 = vpop.xlane.xlu0 %706
        %708 = vmax.xlane.f32.xlu0 %v682
        %v709 = vpop.xlane.xlu0 %708
        %710 = vmax.xlane.f32.xlu0 %v683
        %v711 = vpop.xlane.xlu0 %710
        %712 = vmax.xlane.f32.xlu0 %v684
        %v713 = vpop.xlane.xlu0 %712
        %714 = vmax.xlane.f32.xlu0 %v685
        %v715 = vpop.xlane.xlu0 %714
        %716 = vmax.xlane.f32.xlu0 %v686
        %v717 = vpop.xlane.xlu0 %716
        %718 = vmax.xlane.f32.xlu0 %v687
        %v719 = vpop.xlane.xlu0 %718
        %v720 = vsub.f32 %v672, %v689
        %v721 = vsub.f32 %v673, %v691
        %v722 = vsub.f32 %v674, %v693
        %v723 = vsub.f32 %v675, %v695
        %v724 = vsub.f32 %v676, %v697
        %v725 = vsub.f32 %v677, %v699
        %v726 = vsub.f32 %v678, %v701
        %v727 = vsub.f32 %v679, %v703
        %v728 = vsub.f32 %v680, %v705
        %v729 = vsub.f32 %v681, %v707
        %v730 = vsub.f32 %v682, %v709
        %v731 = vsub.f32 %v683, %v711
        %v732 = vsub.f32 %v684, %v713
        %v733 = vsub.f32 %v685, %v715
        %v734 = vsub.f32 %v686, %v717
        %v735 = vsub.f32 %v687, %v719
        %v736 = vmul.f32 %v720, 1.442695
        %v737 = vpow.pop %v736
        %v738 = vmul.f32 %v721, 1.442695
        %v739 = vpow.pop %v738
        %v740 = vmul.f32 %v722, 1.442695
        %v741 = vpow.pop %v740
        %v742 = vmul.f32 %v723, 1.442695
        %v743 = vpow.pop %v742
        %v744 = vmul.f32 %v724, 1.442695
        %v745 = vpow.pop %v744
        %v746 = vmul.f32 %v725, 1.442695
        %v747 = vpow.pop %v746
        %v748 = vmul.f32 %v726, 1.442695
        %v749 = vpow.pop %v748
        %v750 = vmul.f32 %v727, 1.442695
        %v751 = vpow.pop %v750
        %v752 = vmul.f32 %v728, 1.442695
        %v753 = vpow.pop %v752
        %v754 = vmul.f32 %v729, 1.442695
        %v755 = vpow.pop %v754
        %v756 = vmul.f32 %v730, 1.442695
        %v757 = vpow.pop %v756
        %v758 = vmul.f32 %v731, 1.442695
        %v759 = vpow.pop %v758
        %v760 = vmul.f32 %v732, 1.442695
        %v761 = vpow.pop %v760
        %v762 = vmul.f32 %v733, 1.442695
        %v763 = vpow.pop %v762
        %v764 = vmul.f32 %v734, 1.442695
        %v765 = vpow.pop %v764
        %v766 = vmul.f32 %v735, 1.442695
        %v767 = vpow.pop %v766
        %768 = vadd.xlane.f32.xlu0 %v737
        %v769 = vpop.xlane.xlu0 %768
        %770 = vadd.xlane.f32.xlu0 %v739
        %v771 = vpop.xlane.xlu0 %770
        %772 = vadd.xlane.f32.xlu0 %v741
        %v773 = vpop.xlane.xlu0 %772
        %774 = vadd.xlane.f32.xlu0 %v743
        %v775 = vpop.xlane.xlu0 %774
        %776 = vadd.xlane.f32.xlu0 %v745
        %v777 = vpop.xlane.xlu0 %776
        %778 = vadd.xlane.f32.xlu0 %v747
        %v779 = vpop.xlane.xlu0 %778
        %780 = vadd.xlane.f32.xlu0 %v749
        %v781 = vpop.xlane.xlu0 %780
        %782 = vadd.xlane.f32.xlu0 %v751
        %v783 = vpop.xlane.xlu0 %782
        %784 = vadd.xlane.f32.xlu0 %v753
        %v785 = vpop.xlane.xlu0 %784
        %786 = vadd.xlane.f32.xlu0 %v755
        %v787 = vpop.xlane.xlu0 %786
        %788 = vadd.xlane.f32.xlu0 %v757
        %v789 = vpop.xlane.xlu0 %788
        %790 = vadd.xlane.f32.xlu0 %v759
        %v791 = vpop.xlane.xlu0 %790
        %792 = vadd.xlane.f32.xlu0 %v761
        %v793 = vpop.xlane.xlu0 %792
        %794 = vadd.xlane.f32.xlu0 %v763
        %v795 = vpop.xlane.xlu0 %794
        %796 = vadd.xlane.f32.xlu0 %v765
        %v797 = vpop.xlane.xlu0 %796
        %798 = vadd.xlane.f32.xlu0 %v767
        %v799 = vpop.xlane.xlu0 %798
        %v800 = vrcp.pop %v769
        %v801 = vmul.f32 %v737, %v800
        %v802 = vrcp.pop %v771
        %v803 = vmul.f32 %v739, %v802
        %v804 = vrcp.pop %v773
        %v805 = vmul.f32 %v741, %v804
        %v806 = vrcp.pop %v775
        %v807 = vmul.f32 %v743, %v806
        %v808 = vrcp.pop %v777
        %v809 = vmul.f32 %v745, %v808
        %v810 = vrcp.pop %v779
        %v811 = vmul.f32 %v747, %v810
        %v812 = vrcp.pop %v781
        %v813 = vmul.f32 %v749, %v812
        %v814 = vrcp.pop %v783
        %v815 = vmul.f32 %v751, %v814
        %v816 = vrcp.pop %v785
        %v817 = vmul.f32 %v753, %v816
        %v818 = vrcp.pop %v787
        %v819 = vmul.f32 %v755, %v818
        %v820 = vrcp.pop %v789
        %v821 = vmul.f32 %v757, %v820
        %v822 = vrcp.pop %v791
        %v823 = vmul.f32 %v759, %v822
        %v824 = vrcp.pop %v793
        %v825 = vmul.f32 %v761, %v824
        %v826 = vrcp.pop %v795
        %v827 = vmul.f32 %v763, %v826
        %v828 = vrcp.pop %v797
        %v829 = vmul.f32 %v765, %v828
        %v830 = vrcp.pop %v799
        %v831 = vmul.f32 %v767, %v830
        %v832 = vpack.c.bf16 %v803, %v801
        %v833 = vpack.c.bf16 %v807, %v805
        %v834 = vpack.c.bf16 %v811, %v809
        %v835 = vpack.c.bf16 %v815, %v813
        %v836 = vpack.c.bf16 %v819, %v817
        %v837 = vpack.c.bf16 %v823, %v821
        %v838 = vpack.c.bf16 %v827, %v825
        %v839 = vpack.c.bf16 %v831, %v829
        %v848 = vunpack.c.l.b16 %v832
        %v849 = vunpack.c.h.b16 %v832
        %v850 = vunpack.c.l.b16 %v833
        %v851 = vunpack.c.h.b16 %v833
        %v852 = vunpack.c.l.b16 %v834
        %v853 = vunpack.c.h.b16 %v834
        %v854 = vunpack.c.l.b16 %v835
        %v855 = vunpack.c.h.b16 %v835
        %v856 = vunpack.c.l.b16 %v836
        %v857 = vunpack.c.h.b16 %v836
        %v858 = vunpack.c.l.b16 %v837
        %v859 = vunpack.c.h.b16 %v837
        %v860 = vunpack.c.l.b16 %v838
        %v861 = vunpack.c.h.b16 %v838
        %v862 = vunpack.c.l.b16 %v839
        %v863 = vunpack.c.h.b16 %v839
        %v864 = vpack.c.b16 %v848, %v848
        %v865 = vpack.c.b16 %v849, %v849
        %v866 = vpack.c.b16 %v850, %v850
        %v867 = vpack.c.b16 %v851, %v851
        %v868 = vpack.c.b16 %v852, %v852
        %v869 = vpack.c.b16 %v853, %v853
        %v870 = vpack.c.b16 %v854, %v854
        %v871 = vpack.c.b16 %v855, %v855
        %v872 = vpack.c.b16 %v856, %v856
        %v873 = vpack.c.b16 %v857, %v857
        %v874 = vpack.c.b16 %v858, %v858
        %v875 = vpack.c.b16 %v859, %v859
        %v876 = vpack.c.b16 %v860, %v860
        %v877 = vpack.c.b16 %v861, %v861
        %v878 = vpack.c.b16 %v862, %v862
        %v879 = vpack.c.b16 %v863, %v863
        %896 = vst [vmem:[%s245] sm:$0xf] %v864
        %897 = vst [vmem:[%s245 + $0x4] sm:$0xf] %v865
        %898 = vst [vmem:[%s245 + $0x8] sm:$0xf] %v866
        %899 = vst [vmem:[%s245 + $0xc] sm:$0xf] %v867
        %900 = vst [vmem:[%s245 + $0x10] sm:$0xf] %v868
        %901 = vst [vmem:[%s245 + $0x14] sm:$0xf] %v869
        %902 = vst [vmem:[%s245 + $0x18] sm:$0xf] %v870
        %903 = vst [vmem:[%s245 + $0x1c] sm:$0xf] %v871
        %904 = vst [vmem:[%s245 + $0x20] sm:$0xf] %v872
        %905 = vst [vmem:[%s245 + $0x24] sm:$0xf] %v873
        %906 = vst [vmem:[%s245 + $0x28] sm:$0xf] %v874
        %907 = vst [vmem:[%s245 + $0x2c] sm:$0xf] %v875
        %908 = vst [vmem:[%s245 + $0x30] sm:$0xf] %v876
        %909 = vst [vmem:[%s245 + $0x34] sm:$0xf] %v877
        %910 = vst [vmem:[%s245 + $0x38] sm:$0xf] %v878
        %911 = vst [vmem:[%s245 + $0x3c] sm:$0xf] %v879
        %912 = vrot.lane.b32.xlu0 %v494, 64
        %v913 = vpop.permute.xlu0 %912
        %914 = vrot.lane.b32.xlu0 %v495, 64
        %v915 = vpop.permute.xlu0 %914
        %916 = vrot.lane.b32.xlu0 %v496, 64
        %v917 = vpop.permute.xlu0 %916
        %918 = vrot.lane.b32.xlu0 %v497, 64
        %v919 = vpop.permute.xlu0 %918
        %920 = vrot.lane.b32.xlu0 %v498, 64
        %v921 = vpop.permute.xlu0 %920
        %922 = vrot.lane.b32.xlu0 %v499, 64
        %v923 = vpop.permute.xlu0 %922
        %924 = vrot.lane.b32.xlu0 %v500, 64
        %v925 = vpop.permute.xlu0 %924
        %926 = vrot.lane.b32.xlu0 %v501, 64
        %v927 = vpop.permute.xlu0 %926
        %936 = vmatprep.subr.bf16.mxu0 0
        %937 = vmatpush1.bf16.msra.mxu0 %v913
        %938 = vmatprep.subr.bf16.mxu0 0
        %939 = vmatpush1.bf16.msra.mxu0 %v915
        %940 = vmatprep.subr.bf16.mxu0 0
        %941 = vmatpush1.bf16.msra.mxu0 %v917
        %942 = vmatprep.subr.bf16.mxu0 0
        %943 = vmatpush1.bf16.msra.mxu0 %v919
        %944 = vmatprep.subr.bf16.mxu0 0
        %945 = vmatpush1.bf16.msra.mxu0 %v921
        %946 = vmatprep.subr.bf16.mxu0 0
        %947 = vmatpush1.bf16.msra.mxu0 %v923
        %948 = vmatprep.subr.bf16.mxu0 0
        %949 = vmatpush1.bf16.msra.mxu0 %v925
        %950 = vmatprep.subr.bf16.mxu0 0
        %951 = vmatpush1.bf16.msra.mxu0 %v927
        %952 = vmatprep.subr.bf16.mxu0 0
        %953 = vmatpush1.bf16.msra.mxu0 0
        %954 = vmatprep.subr.bf16.mxu0 0
        %955 = vmatpush1.bf16.msra.mxu0 0
        %956 = vmatprep.subr.bf16.mxu0 0
        %957 = vmatpush1.bf16.msra.mxu0 0
        %958 = vmatprep.subr.bf16.mxu0 0
        %959 = vmatpush1.bf16.msra.mxu0 0
        %960 = vmatprep.subr.bf16.mxu0 0
        %961 = vmatpush1.bf16.msra.mxu0 0
        %962 = vmatprep.subr.bf16.mxu0 0
        %963 = vmatpush1.bf16.msra.mxu0 0
        %964 = vmatprep.subr.bf16.mxu0 0
        %965 = vmatpush1.bf16.msra.mxu0 0
        %966 = vmatprep.subr.bf16.mxu0 0
        %967 = vmatpush1.bf16.msra.mxu0 0
        %968 = vmatprep.mubr.bf16.mxu0 0
        %969 = vmatmul.mubr.bf16.gmra.mrb[0].mxu0 %v832
        %v970 = vpop.f32.mrb[0].mxu0
        %v971 = vadd.f32 0.0, %v970
        %v972 = vpop.f32.mrb[0].mxu0
        %v973 = vpop.f32.mrb[0].mxu0
        %v974 = vadd.f32 0.0, %v973
        %v975 = vpop.f32.mrb[0].mxu0
        %976 = vmatprep.mubr.bf16.mxu0 0
        %977 = vmatmul.mubr.bf16.gmra.mrb[0].mxu0 %v833
        %v978 = vpop.f32.mrb[0].mxu0
        %v979 = vadd.f32 0.0, %v978
        %v980 = vpop.f32.mrb[0].mxu0
        %v981 = vpop.f32.mrb[0].mxu0
        %v982 = vadd.f32 0.0, %v981
        %v983 = vpop.f32.mrb[0].mxu0
        %984 = vmatprep.mubr.bf16.mxu0 0
        %985 = vmatmul.mubr.bf16.gmra.mrb[0].mxu0 %v834
        %v986 = vpop.f32.mrb[0].mxu0
        %v987 = vadd.f32 0.0, %v986
        %v988 = vpop.f32.mrb[0].mxu0
        %v989 = vpop.f32.mrb[0].mxu0
        %v990 = vadd.f32 0.0, %v989
        %v991 = vpop.f32.mrb[0].mxu0
        %992 = vmatprep.mubr.bf16.mxu0 0
        %993 = vmatmul.mubr.bf16.gmra.mrb[0].mxu0 %v835
        %v994 = vpop.f32.mrb[0].mxu0
        %v995 = vadd.f32 0.0, %v994
        %v996 = vpop.f32.mrb[0].mxu0
        %v997 = vpop.f32.mrb[0].mxu0
        %v998 = vadd.f32 0.0, %v997
        %v999 = vpop.f32.mrb[0].mxu0
        %1000 = vmatprep.mubr.bf16.mxu0 0
        %1001 = vmatmul.mubr.bf16.gmra.mrb[0].mxu0 %v836
        %v1002 = vpop.f32.mrb[0].mxu0
        %v1003 = vadd.f32 0.0, %v1002
        %v1004 = vpop.f32.mrb[0].mxu0
        %v1005 = vpop.f32.mrb[0].mxu0
        %v1006 = vadd.f32 0.0, %v1005
        %v1007 = vpop.f32.mrb[0].mxu0
        %1008 = vmatprep.mubr.bf16.mxu0 0
        %1009 = vmatmul.mubr.bf16.gmra.mrb[0].mxu0 %v837
        %v1010 = vpop.f32.mrb[0].mxu0
        %v1011 = vadd.f32 0.0, %v1010
        %v1012 = vpop.f32.mrb[0].mxu0
        %v1013 = vpop.f32.mrb[0].mxu0
        %v1014 = vadd.f32 0.0, %v1013
        %v1015 = vpop.f32.mrb[0].mxu0
        %1016 = vmatprep.mubr.bf16.mxu0 0
        %1017 = vmatmul.mubr.bf16.gmra.mrb[0].mxu0 %v838
        %v1018 = vpop.f32.mrb[0].mxu0
        %v1019 = vadd.f32 0.0, %v1018
        %v1020 = vpop.f32.mrb[0].mxu0
        %v1021 = vpop.f32.mrb[0].mxu0
        %v1022 = vadd.f32 0.0, %v1021
        %v1023 = vpop.f32.mrb[0].mxu0
        %1024 = vmatprep.mubr.bf16.mxu0 0
        %1025 = vmatmul.mubr.bf16.gmra.mrb[0].mxu0 %v839
        %v1026 = vpop.f32.mrb[0].mxu0
        %v1027 = vadd.f32 0.0, %v1026
        %v1028 = vpop.f32.mrb[0].mxu0
        %v1029 = vpop.f32.mrb[0].mxu0
        %v1030 = vadd.f32 0.0, %v1029
        %v1031 = vpop.f32.mrb[0].mxu0
        %1032 = vdwg.mxu0
        %v1033 = vpack.c.bf16 %v974, %v971
        %v1034 = vpack.c.bf16 %v982, %v979
        %v1035 = vpack.c.bf16 %v990, %v987
        %v1036 = vpack.c.bf16 %v998, %v995
        %v1037 = vpack.c.bf16 %v1006, %v1003
        %v1038 = vpack.c.bf16 %v1014, %v1011
        %v1039 = vpack.c.bf16 %v1022, %v1019
        %v1040 = vpack.c.bf16 %v1030, %v1027
        %1041 = vst.msk [vmem:[#allocation3] sm:$0xff] %vm526, %v1033
        %1042 = vst.msk [vmem:[#allocation3 + $0x8] sm:$0xff] %vm526, %v1034
        %1043 = vst.msk [vmem:[#allocation3 + $0x10] sm:$0xff] %vm526, %v1035
        %1044 = vst.msk [vmem:[#allocation3 + $0x18] sm:$0xff] %vm526, %v1036
        %1045 = vst.msk [vmem:[#allocation3 + $0x20] sm:$0xff] %vm526, %v1037
        %1046 = vst.msk [vmem:[#allocation3 + $0x28] sm:$0xff] %vm526, %v1038
        %1047 = vst.msk [vmem:[#allocation3 + $0x30] sm:$0xff] %vm526, %v1039
        %1048 = vst.msk [vmem:[#allocation3 + $0x38] sm:$0xff] %vm526, %v1040
        %v1049 = vld [vmem:[%s485] sm:$0xff]
        %v1050 = vld [vmem:[%s485 + $0x8] sm:$0xff]
        %v1051 = vld [vmem:[%s485 + $0x10] sm:$0xff]
        %v1052 = vld [vmem:[%s485 + $0x18] sm:$0xff]
        %v1053 = vld [vmem:[%s485 + $0x20] sm:$0xff]
        %v1054 = vld [vmem:[%s485 + $0x28] sm:$0xff]
        %v1055 = vld [vmem:[%s485 + $0x30] sm:$0xff]
        %v1056 = vld [vmem:[%s485 + $0x38] sm:$0xff]
        %v1057 = vld [vmem:[#allocation2] sm:$0xff]
        %v1058 = vld [vmem:[#allocation2 + $0x8] sm:$0xff]
        %v1059 = vld [vmem:[#allocation2 + $0x10] sm:$0xff]
        %v1060 = vld [vmem:[#allocation2 + $0x18] sm:$0xff]
        %v1061 = vld [vmem:[#allocation2 + $0x20] sm:$0xff]
        %v1062 = vld [vmem:[#allocation2 + $0x28] sm:$0xff]
        %v1063 = vld [vmem:[#allocation2 + $0x30] sm:$0xff]
        %v1064 = vld [vmem:[#allocation2 + $0x38] sm:$0xff]
        %1073 = vrot.lane.b32.xlu0 %v1049, 124
        %v1074 = vpop.permute.xlu0 %1073
        %1075 = vrot.lane.b32.xlu0 %v1050, 124
        %v1076 = vpop.permute.xlu0 %1075
        %1077 = vrot.lane.b32.xlu0 %v1051, 124
        %v1078 = vpop.permute.xlu0 %1077
        %1079 = vrot.lane.b32.xlu0 %v1052, 124
        %v1080 = vpop.permute.xlu0 %1079
        %1081 = vrot.lane.b32.xlu0 %v1053, 124
        %v1082 = vpop.permute.xlu0 %1081
        %1083 = vrot.lane.b32.xlu0 %v1054, 124
        %v1084 = vpop.permute.xlu0 %1083
        %1085 = vrot.lane.b32.xlu0 %v1055, 124
        %v1086 = vpop.permute.xlu0 %1085
        %1087 = vrot.lane.b32.xlu0 %v1056, 124
        %v1088 = vpop.permute.xlu0 %1087
        %1097 = vrot.lane.b32.xlu0 %v1057, 92
        %v1098 = vpop.permute.xlu0 %1097
        %1099 = vrot.lane.b32.xlu0 %v1058, 92
        %v1100 = vpop.permute.xlu0 %1099
        %1101 = vrot.lane.b32.xlu0 %v1059, 92
        %v1102 = vpop.permute.xlu0 %1101
        %1103 = vrot.lane.b32.xlu0 %v1060, 92
        %v1104 = vpop.permute.xlu0 %1103
        %1105 = vrot.lane.b32.xlu0 %v1061, 92
        %v1106 = vpop.permute.xlu0 %1105
        %1107 = vrot.lane.b32.xlu0 %v1062, 92
        %v1108 = vpop.permute.xlu0 %1107
        %1109 = vrot.lane.b32.xlu0 %v1063, 92
        %v1110 = vpop.permute.xlu0 %1109
        %1111 = vrot.lane.b32.xlu0 %v1064, 92
        %v1112 = vpop.permute.xlu0 %1111
        %v1114 = vsel %vm526, %v1074, 0
        %v1117 = vsel %vm526, %v1076, 0
        %v1120 = vsel %vm526, %v1078, 0
        %v1123 = vsel %vm526, %v1080, 0
        %v1126 = vsel %vm526, %v1082, 0
        %v1129 = vsel %vm526, %v1084, 0
        %v1132 = vsel %vm526, %v1086, 0
        %v1135 = vsel %vm526, %v1088, 0
        %v1138 = vsel %vm526, %v1098, 0
        %v1141 = vsel %vm526, %v1100, 0
        %v1144 = vsel %vm526, %v1102, 0
        %v1147 = vsel %vm526, %v1104, 0
        %v1150 = vsel %vm526, %v1106, 0
        %v1153 = vsel %vm526, %v1108, 0
        %v1156 = vsel %vm526, %v1110, 0
        %v1159 = vsel %vm526, %v1112, 0
        %1161 = vmatprep.subr.bf16.mxu0 0
        %1162 = vmatpush1.bf16.xpose.msra.mxu0 %v1138
        %1163 = vmatprep.subr.bf16.mxu0 0
        %1164 = vmatpush1.bf16.xpose.msra.mxu0 %v1141
        %1165 = vmatprep.subr.bf16.mxu0 0
        %1166 = vmatpush1.bf16.xpose.msra.mxu0 %v1144
        %1167 = vmatprep.subr.bf16.mxu0 0
        %1168 = vmatpush1.bf16.xpose.msra.mxu0 %v1147
        %1169 = vmatprep.subr.bf16.mxu0 0
        %1170 = vmatpush1.bf16.xpose.msra.mxu0 %v1150
        %1171 = vmatprep.subr.bf16.mxu0 0
        %1172 = vmatpush1.bf16.xpose.msra.mxu0 %v1153
        %1173 = vmatprep.subr.bf16.mxu0 0
        %1174 = vmatpush1.bf16.xpose.msra.mxu0 %v1156
        %1175 = vmatprep.subr.bf16.mxu0 0
        %1176 = vmatpush1.bf16.xpose.msra.mxu0 %v1159
        %1177 = vmatprep.subr.bf16.mxu0 0
        %1178 = vmatpush1.bf16.xpose.msra.mxu0 0
        %1179 = vmatprep.subr.bf16.mxu0 0
        %1180 = vmatpush1.bf16.xpose.msra.mxu0 0
        %1181 = vmatprep.subr.bf16.mxu0 0
        %1182 = vmatpush1.bf16.xpose.msra.mxu0 0
        %1183 = vmatprep.subr.bf16.mxu0 0
        %1184 = vmatpush1.bf16.xpose.msra.mxu0 0
        %1185 = vmatprep.subr.bf16.mxu0 0
        %1186 = vmatpush1.bf16.xpose.msra.mxu0 0
        %1187 = vmatprep.subr.bf16.mxu0 0
        %1188 = vmatpush1.bf16.xpose.msra.mxu0 0
        %1189 = vmatprep.subr.bf16.mxu0 0
        %1190 = vmatpush1.bf16.xpose.msra.mxu0 0
        %1191 = vmatprep.subr.bf16.mxu0 0
        %1192 = vmatpush1.bf16.xpose.msra.mxu0 0
        %1193 = vmatprep.mubr.bf16.mxu0 0
        %1194 = vmatmul.mubr.bf16.gmra.mrb[0].mxu0 %v1114
        %v1195 = vpop.f32.mrb[0].mxu0
        %v1196 = vadd.f32 0.0, %v1195
        %v1197 = vpop.f32.mrb[0].mxu0
        %v1198 = vpop.f32.mrb[0].mxu0
        %v1199 = vadd.f32 0.0, %v1198
        %v1200 = vpop.f32.mrb[0].mxu0
        %1201 = vmatprep.mubr.bf16.mxu0 0
        %1202 = vmatmul.mubr.bf16.gmra.mrb[0].mxu0 %v1117
        %v1203 = vpop.f32.mrb[0].mxu0
        %v1204 = vadd.f32 0.0, %v1203
        %v1205 = vpop.f32.mrb[0].mxu0
        %v1206 = vpop.f32.mrb[0].mxu0
        %v1207 = vadd.f32 0.0, %v1206
        %v1208 = vpop.f32.mrb[0].mxu0
        %1209 = vmatprep.mubr.bf16.mxu0 0
        %1210 = vmatmul.mubr.bf16.gmra.mrb[0].mxu0 %v1120
        %v1211 = vpop.f32.mrb[0].mxu0
        %v1212 = vadd.f32 0.0, %v1211
        %v1213 = vpop.f32.mrb[0].mxu0
        %v1214 = vpop.f32.mrb[0].mxu0
        %v1215 = vadd.f32 0.0, %v1214
        %v1216 = vpop.f32.mrb[0].mxu0
        %1217 = vmatprep.mubr.bf16.mxu0 0
        %1218 = vmatmul.mubr.bf16.gmra.mrb[0].mxu0 %v1123
        %v1219 = vpop.f32.mrb[0].mxu0
        %v1220 = vadd.f32 0.0, %v1219
        %v1221 = vpop.f32.mrb[0].mxu0
        %v1222 = vpop.f32.mrb[0].mxu0
        %v1223 = vadd.f32 0.0, %v1222
        %v1224 = vpop.f32.mrb[0].mxu0
        %1225 = vmatprep.mubr.bf16.mxu0 0
        %1226 = vmatmul.mubr.bf16.gmra.mrb[0].mxu0 %v1126
        %v1227 = vpop.f32.mrb[0].mxu0
        %v1228 = vadd.f32 0.0, %v1227
        %v1229 = vpop.f32.mrb[0].mxu0
        %v1230 = vpop.f32.mrb[0].mxu0
        %v1231 = vadd.f32 0.0, %v1230
        %v1232 = vpop.f32.mrb[0].mxu0
        %1233 = vmatprep.mubr.bf16.mxu0 0
        %1234 = vmatmul.mubr.bf16.gmra.mrb[0].mxu0 %v1129
        %v1235 = vpop.f32.mrb[0].mxu0
        %v1236 = vadd.f32 0.0, %v1235
        %v1237 = vpop.f32.mrb[0].mxu0
        %v1238 = vpop.f32.mrb[0].mxu0
        %v1239 = vadd.f32 0.0, %v1238
        %v1240 = vpop.f32.mrb[0].mxu0
        %1241 = vmatprep.mubr.bf16.mxu0 0
        %1242 = vmatmul.mubr.bf16.gmra.mrb[0].mxu0 %v1132
        %v1243 = vpop.f32.mrb[0].mxu0
        %v1244 = vadd.f32 0.0, %v1243
        %v1245 = vpop.f32.mrb[0].mxu0
        %v1246 = vpop.f32.mrb[0].mxu0
        %v1247 = vadd.f32 0.0, %v1246
        %v1248 = vpop.f32.mrb[0].mxu0
        %1249 = vmatprep.mubr.bf16.mxu0 0
        %1250 = vmatmul.mubr.bf16.gmra.mrb[0].mxu0 %v1135
        %v1251 = vpop.f32.mrb[0].mxu0
        %v1252 = vadd.f32 0.0, %v1251
        %v1253 = vpop.f32.mrb[0].mxu0
        %v1254 = vpop.f32.mrb[0].mxu0
        %v1255 = vadd.f32 0.0, %v1254
        %v1256 = vpop.f32.mrb[0].mxu0
        %1257 = vdwg.mxu0
        %v1258 = vsel %vm481, %v1196, -1e+30
        %v1259 = vsel %vm481, %v1199, -1e+30
        %v1260 = vsel %vm481, %v1204, -1e+30
        %v1261 = vsel %vm481, %v1207, -1e+30
        %v1262 = vsel %vm481, %v1212, -1e+30
        %v1263 = vsel %vm481, %v1215, -1e+30
        %v1264 = vsel %vm481, %v1220, -1e+30
        %v1265 = vsel %vm481, %v1223, -1e+30
        %v1266 = vsel %vm481, %v1228, -1e+30
        %v1267 = vsel %vm481, %v1231, -1e+30
        %v1268 = vsel %vm481, %v1236, -1e+30
        %v1269 = vsel %vm481, %v1239, -1e+30
        %v1270 = vsel %vm481, %v1244, -1e+30
        %v1271 = vsel %vm481, %v1247, -1e+30
        %v1272 = vsel %vm481, %v1252, -1e+30
        %v1273 = vsel %vm481, %v1255, -1e+30
        %1274 = vmax.xlane.f32.xlu0 %v1258
        %v1275 = vpop.xlane.xlu0 %1274
        %1276 = vmax.xlane.f32.xlu0 %v1259
        %v1277 = vpop.xlane.xlu0 %1276
        %1278 = vmax.xlane.f32.xlu0 %v1260
        %v1279 = vpop.xlane.xlu0 %1278
        %1280 = vmax.xlane.f32.xlu0 %v1261
        %v1281 = vpop.xlane.xlu0 %1280
        %1282 = vmax.xlane.f32.xlu0 %v1262
        %v1283 = vpop.xlane.xlu0 %1282
        %1284 = vmax.xlane.f32.xlu0 %v1263
        %v1285 = vpop.xlane.xlu0 %1284
        %1286 = vmax.xlane.f32.xlu0 %v1264
        %v1287 = vpop.xlane.xlu0 %1286
        %1288 = vmax.xlane.f32.xlu0 %v1265
        %v1289 = vpop.xlane.xlu0 %1288
        %1290 = vmax.xlane.f32.xlu0 %v1266
        %v1291 = vpop.xlane.xlu0 %1290
        %1292 = vmax.xlane.f32.xlu0 %v1267
        %v1293 = vpop.xlane.xlu0 %1292
        %1294 = vmax.xlane.f32.xlu0 %v1268
        %v1295 = vpop.xlane.xlu0 %1294
        %1296 = vmax.xlane.f32.xlu0 %v1269
        %v1297 = vpop.xlane.xlu0 %1296
        %1298 = vmax.xlane.f32.xlu0 %v1270
        %v1299 = vpop.xlane.xlu0 %1298
        %1300 = vmax.xlane.f32.xlu0 %v1271
        %v1301 = vpop.xlane.xlu0 %1300
        %1302 = vmax.xlane.f32.xlu0 %v1272
        %v1303 = vpop.xlane.xlu0 %1302
        %1304 = vmax.xlane.f32.xlu0 %v1273
        %v1305 = vpop.xlane.xlu0 %1304
        %v1306 = vsub.f32 %v1258, %v1275
        %v1307 = vsub.f32 %v1259, %v1277
        %v1308 = vsub.f32 %v1260, %v1279
        %v1309 = vsub.f32 %v1261, %v1281
        %v1310 = vsub.f32 %v1262, %v1283
        %v1311 = vsub.f32 %v1263, %v1285
        %v1312 = vsub.f32 %v1264, %v1287
        %v1313 = vsub.f32 %v1265, %v1289
        %v1314 = vsub.f32 %v1266, %v1291
        %v1315 = vsub.f32 %v1267, %v1293
        %v1316 = vsub.f32 %v1268, %v1295
        %v1317 = vsub.f32 %v1269, %v1297
        %v1318 = vsub.f32 %v1270, %v1299
        %v1319 = vsub.f32 %v1271, %v1301
        %v1320 = vsub.f32 %v1272, %v1303
        %v1321 = vsub.f32 %v1273, %v1305
        %v1322 = vmul.f32 %v1306, 1.442695
        %v1323 = vpow.pop %v1322
        %v1324 = vmul.f32 %v1307, 1.442695
        %v1325 = vpow.pop %v1324
        %v1326 = vmul.f32 %v1308, 1.442695
        %v1327 = vpow.pop %v1326
        %v1328 = vmul.f32 %v1309, 1.442695
        %v1329 = vpow.pop %v1328
        %v1330 = vmul.f32 %v1310, 1.442695
        %v1331 = vpow.pop %v1330
        %v1332 = vmul.f32 %v1311, 1.442695
        %v1333 = vpow.pop %v1332
        %v1334 = vmul.f32 %v1312, 1.442695
        %v1335 = vpow.pop %v1334
        %v1336 = vmul.f32 %v1313, 1.442695
        %v1337 = vpow.pop %v1336
        %v1338 = vmul.f32 %v1314, 1.442695
        %v1339 = vpow.pop %v1338
        %v1340 = vmul.f32 %v1315, 1.442695
        %v1341 = vpow.pop %v1340
        %v1342 = vmul.f32 %v1316, 1.442695
        %v1343 = vpow.pop %v1342
        %v1344 = vmul.f32 %v1317, 1.442695
        %v1345 = vpow.pop %v1344
        %v1346 = vmul.f32 %v1318, 1.442695
        %v1347 = vpow.pop %v1346
        %v1348 = vmul.f32 %v1319, 1.442695
        %v1349 = vpow.pop %v1348
        %v1350 = vmul.f32 %v1320, 1.442695
        %v1351 = vpow.pop %v1350
        %v1352 = vmul.f32 %v1321, 1.442695
        %v1353 = vpow.pop %v1352
        %1354 = vadd.xlane.f32.xlu0 %v1323
        %v1355 = vpop.xlane.xlu0 %1354
        %1356 = vadd.xlane.f32.xlu0 %v1325
        %v1357 = vpop.xlane.xlu0 %1356
        %1358 = vadd.xlane.f32.xlu0 %v1327
        %v1359 = vpop.xlane.xlu0 %1358
        %1360 = vadd.xlane.f32.xlu0 %v1329
        %v1361 = vpop.xlane.xlu0 %1360
        %1362 = vadd.xlane.f32.xlu0 %v1331
        %v1363 = vpop.xlane.xlu0 %1362
        %1364 = vadd.xlane.f32.xlu0 %v1333
        %v1365 = vpop.xlane.xlu0 %1364
        %1366 = vadd.xlane.f32.xlu0 %v1335
        %v1367 = vpop.xlane.xlu0 %1366
        %1368 = vadd.xlane.f32.xlu0 %v1337
        %v1369 = vpop.xlane.xlu0 %1368
        %1370 = vadd.xlane.f32.xlu0 %v1339
        %v1371 = vpop.xlane.xlu0 %1370
        %1372 = vadd.xlane.f32.xlu0 %v1341
        %v1373 = vpop.xlane.xlu0 %1372
        %1374 = vadd.xlane.f32.xlu0 %v1343
        %v1375 = vpop.xlane.xlu0 %1374
        %1376 = vadd.xlane.f32.xlu0 %v1345
        %v1377 = vpop.xlane.xlu0 %1376
        %1378 = vadd.xlane.f32.xlu0 %v1347
        %v1379 = vpop.xlane.xlu0 %1378
        %1380 = vadd.xlane.f32.xlu0 %v1349
        %v1381 = vpop.xlane.xlu0 %1380
        %1382 = vadd.xlane.f32.xlu0 %v1351
        %v1383 = vpop.xlane.xlu0 %1382
        %1384 = vadd.xlane.f32.xlu0 %v1353
        %v1385 = vpop.xlane.xlu0 %1384
        %v1386 = vrcp.pop %v1355
        %v1387 = vmul.f32 %v1323, %v1386
        %v1388 = vrcp.pop %v1357
        %v1389 = vmul.f32 %v1325, %v1388
        %v1390 = vrcp.pop %v1359
        %v1391 = vmul.f32 %v1327, %v1390
        %v1392 = vrcp.pop %v1361
        %v1393 = vmul.f32 %v1329, %v1392
        %v1394 = vrcp.pop %v1363
        %v1395 = vmul.f32 %v1331, %v1394
        %v1396 = vrcp.pop %v1365
        %v1397 = vmul.f32 %v1333, %v1396
        %v1398 = vrcp.pop %v1367
        %v1399 = vmul.f32 %v1335, %v1398
        %v1400 = vrcp.pop %v1369
        %v1401 = vmul.f32 %v1337, %v1400
        %v1402 = vrcp.pop %v1371
        %v1403 = vmul.f32 %v1339, %v1402
        %v1404 = vrcp.pop %v1373
        %v1405 = vmul.f32 %v1341, %v1404
        %v1406 = vrcp.pop %v1375
        %v1407 = vmul.f32 %v1343, %v1406
        %v1408 = vrcp.pop %v1377
        %v1409 = vmul.f32 %v1345, %v1408
        %v1410 = vrcp.pop %v1379
        %v1411 = vmul.f32 %v1347, %v1410
        %v1412 = vrcp.pop %v1381
        %v1413 = vmul.f32 %v1349, %v1412
        %v1414 = vrcp.pop %v1383
        %v1415 = vmul.f32 %v1351, %v1414
        %v1416 = vrcp.pop %v1385
        %v1417 = vmul.f32 %v1353, %v1416
        %v1418 = vpack.c.bf16 %v1389, %v1387
        %v1419 = vpack.c.bf16 %v1393, %v1391
        %v1420 = vpack.c.bf16 %v1397, %v1395
        %v1421 = vpack.c.bf16 %v1401, %v1399
        %v1422 = vpack.c.bf16 %v1405, %v1403
        %v1423 = vpack.c.bf16 %v1409, %v1407
        %v1424 = vpack.c.bf16 %v1413, %v1411
        %v1425 = vpack.c.bf16 %v1417, %v1415
        %v1434 = vunpack.c.l.b16 %v1418
        %v1435 = vunpack.c.h.b16 %v1418
        %v1436 = vunpack.c.l.b16 %v1419
        %v1437 = vunpack.c.h.b16 %v1419
        %v1438 = vunpack.c.l.b16 %v1420
        %v1439 = vunpack.c.h.b16 %v1420
        %v1440 = vunpack.c.l.b16 %v1421
        %v1441 = vunpack.c.h.b16 %v1421
        %v1442 = vunpack.c.l.b16 %v1422
        %v1443 = vunpack.c.h.b16 %v1422
        %v1444 = vunpack.c.l.b16 %v1423
        %v1445 = vunpack.c.h.b16 %v1423
        %v1446 = vunpack.c.l.b16 %v1424
        %v1447 = vunpack.c.h.b16 %v1424
        %v1448 = vunpack.c.l.b16 %v1425
        %v1449 = vunpack.c.h.b16 %v1425
        %v1450 = vpack.c.b16 %v1434, %v1434
        %v1451 = vpack.c.b16 %v1435, %v1435
        %v1452 = vpack.c.b16 %v1436, %v1436
        %v1453 = vpack.c.b16 %v1437, %v1437
        %v1454 = vpack.c.b16 %v1438, %v1438
        %v1455 = vpack.c.b16 %v1439, %v1439
        %v1456 = vpack.c.b16 %v1440, %v1440
        %v1457 = vpack.c.b16 %v1441, %v1441
        %v1458 = vpack.c.b16 %v1442, %v1442
        %v1459 = vpack.c.b16 %v1443, %v1443
        %v1460 = vpack.c.b16 %v1444, %v1444
        %v1461 = vpack.c.b16 %v1445, %v1445
        %v1462 = vpack.c.b16 %v1446, %v1446
        %v1463 = vpack.c.b16 %v1447, %v1447
        %v1464 = vpack.c.b16 %v1448, %v1448
        %v1465 = vpack.c.b16 %v1449, %v1449
        %s1482 = scalar_lea.vmem %s245, 64 [#allocation4]
        %1483 = vst [vmem:[%s1482] sm:$0xf] %v1450
        %1484 = vst [vmem:[%s1482 + $0x4] sm:$0xf] %v1451
        %1485 = vst [vmem:[%s1482 + $0x8] sm:$0xf] %v1452
        %1486 = vst [vmem:[%s1482 + $0xc] sm:$0xf] %v1453
        %1487 = vst [vmem:[%s1482 + $0x10] sm:$0xf] %v1454
        %1488 = vst [vmem:[%s1482 + $0x14] sm:$0xf] %v1455
        %1489 = vst [vmem:[%s1482 + $0x18] sm:$0xf] %v1456
        %1490 = vst [vmem:[%s1482 + $0x1c] sm:$0xf] %v1457
        %1491 = vst [vmem:[%s1482 + $0x20] sm:$0xf] %v1458
        %1492 = vst [vmem:[%s1482 + $0x24] sm:$0xf] %v1459
        %1493 = vst [vmem:[%s1482 + $0x28] sm:$0xf] %v1460
        %1494 = vst [vmem:[%s1482 + $0x2c] sm:$0xf] %v1461
        %1495 = vst [vmem:[%s1482 + $0x30] sm:$0xf] %v1462
        %1496 = vst [vmem:[%s1482 + $0x34] sm:$0xf] %v1463
        %1497 = vst [vmem:[%s1482 + $0x38] sm:$0xf] %v1464
        %1498 = vst [vmem:[%s1482 + $0x3c] sm:$0xf] %v1465
        %1499 = vrot.lane.b32.xlu0 %v1057, 60
        %v1500 = vpop.permute.xlu0 %1499
        %1501 = vrot.lane.b32.xlu0 %v1058, 60
        %v1502 = vpop.permute.xlu0 %1501
        %1503 = vrot.lane.b32.xlu0 %v1059, 60
        %v1504 = vpop.permute.xlu0 %1503
        %1505 = vrot.lane.b32.xlu0 %v1060, 60
        %v1506 = vpop.permute.xlu0 %1505
        %1507 = vrot.lane.b32.xlu0 %v1061, 60
        %v1508 = vpop.permute.xlu0 %1507
        %1509 = vrot.lane.b32.xlu0 %v1062, 60
        %v1510 = vpop.permute.xlu0 %1509
        %1511 = vrot.lane.b32.xlu0 %v1063, 60
        %v1512 = vpop.permute.xlu0 %1511
        %1513 = vrot.lane.b32.xlu0 %v1064, 60
        %v1514 = vpop.permute.xlu0 %1513
        %1523 = vmatprep.subr.bf16.mxu0 0
        %1524 = vmatpush1.bf16.msra.mxu0 %v1500
        %1525 = vmatprep.subr.bf16.mxu0 0
        %1526 = vmatpush1.bf16.msra.mxu0 %v1502
        %1527 = vmatprep.subr.bf16.mxu0 0
        %1528 = vmatpush1.bf16.msra.mxu0 %v1504
        %1529 = vmatprep.subr.bf16.mxu0 0
        %1530 = vmatpush1.bf16.msra.mxu0 %v1506
        %1531 = vmatprep.subr.bf16.mxu0 0
        %1532 = vmatpush1.bf16.msra.mxu0 %v1508
        %1533 = vmatprep.subr.bf16.mxu0 0
        %1534 = vmatpush1.bf16.msra.mxu0 %v1510
        %1535 = vmatprep.subr.bf16.mxu0 0
        %1536 = vmatpush1.bf16.msra.mxu0 %v1512
        %1537 = vmatprep.subr.bf16.mxu0 0
        %1538 = vmatpush1.bf16.msra.mxu0 %v1514
        %1539 = vmatprep.subr.bf16.mxu0 0
        %1540 = vmatpush1.bf16.msra.mxu0 0
        %1541 = vmatprep.subr.bf16.mxu0 0
        %1542 = vmatpush1.bf16.msra.mxu0 0
        %1543 = vmatprep.subr.bf16.mxu0 0
        %1544 = vmatpush1.bf16.msra.mxu0 0
        %1545 = vmatprep.subr.bf16.mxu0 0
        %1546 = vmatpush1.bf16.msra.mxu0 0
        %1547 = vmatprep.subr.bf16.mxu0 0
        %1548 = vmatpush1.bf16.msra.mxu0 0
        %1549 = vmatprep.subr.bf16.mxu0 0
        %1550 = vmatpush1.bf16.msra.mxu0 0
        %1551 = vmatprep.subr.bf16.mxu0 0
        %1552 = vmatpush1.bf16.msra.mxu0 0
        %1553 = vmatprep.subr.bf16.mxu0 0
        %1554 = vmatpush1.bf16.msra.mxu0 0
        %1555 = vmatprep.mubr.bf16.mxu0 0
        %1556 = vmatmul.mubr.bf16.gmra.mrb[0].mxu0 %v1418
        %v1557 = vpop.f32.mrb[0].mxu0
        %v1558 = vadd.f32 0.0, %v1557
        %v1559 = vpop.f32.mrb[0].mxu0
        %v1560 = vpop.f32.mrb[0].mxu0
        %v1561 = vadd.f32 0.0, %v1560
        %v1562 = vpop.f32.mrb[0].mxu0
        %1563 = vmatprep.mubr.bf16.mxu0 0
        %1564 = vmatmul.mubr.bf16.gmra.mrb[0].mxu0 %v1419
        %v1565 = vpop.f32.mrb[0].mxu0
        %v1566 = vadd.f32 0.0, %v1565
        %v1567 = vpop.f32.mrb[0].mxu0
        %v1568 = vpop.f32.mrb[0].mxu0
        %v1569 = vadd.f32 0.0, %v1568
        %v1570 = vpop.f32.mrb[0].mxu0
        %1571 = vmatprep.mubr.bf16.mxu0 0
        %1572 = vmatmul.mubr.bf16.gmra.mrb[0].mxu0 %v1420
        %v1573 = vpop.f32.mrb[0].mxu0
        %v1574 = vadd.f32 0.0, %v1573
        %v1575 = vpop.f32.mrb[0].mxu0
        %v1576 = vpop.f32.mrb[0].mxu0
        %v1577 = vadd.f32 0.0, %v1576
        %v1578 = vpop.f32.mrb[0].mxu0
        %1579 = vmatprep.mubr.bf16.mxu0 0
        %1580 = vmatmul.mubr.bf16.gmra.mrb[0].mxu0 %v1421
        %v1581 = vpop.f32.mrb[0].mxu0
        %v1582 = vadd.f32 0.0, %v1581
        %v1583 = vpop.f32.mrb[0].mxu0
        %v1584 = vpop.f32.mrb[0].mxu0
        %v1585 = vadd.f32 0.0, %v1584
        %v1586 = vpop.f32.mrb[0].mxu0
        %1587 = vmatprep.mubr.bf16.mxu0 0
        %1588 = vmatmul.mubr.bf16.gmra.mrb[0].mxu0 %v1422
        %v1589 = vpop.f32.mrb[0].mxu0
        %v1590 = vadd.f32 0.0, %v1589
        %v1591 = vpop.f32.mrb[0].mxu0
        %v1592 = vpop.f32.mrb[0].mxu0
        %v1593 = vadd.f32 0.0, %v1592
        %v1594 = vpop.f32.mrb[0].mxu0
        %1595 = vmatprep.mubr.bf16.mxu0 0
        %1596 = vmatmul.mubr.bf16.gmra.mrb[0].mxu0 %v1423
        %v1597 = vpop.f32.mrb[0].mxu0
        %v1598 = vadd.f32 0.0, %v1597
        %v1599 = vpop.f32.mrb[0].mxu0
        %v1600 = vpop.f32.mrb[0].mxu0
        %v1601 = vadd.f32 0.0, %v1600
        %v1602 = vpop.f32.mrb[0].mxu0
        %1603 = vmatprep.mubr.bf16.mxu0 0
        %1604 = vmatmul.mubr.bf16.gmra.mrb[0].mxu0 %v1424
        %v1605 = vpop.f32.mrb[0].mxu0
        %v1606 = vadd.f32 0.0, %v1605
        %v1607 = vpop.f32.mrb[0].mxu0
        %v1608 = vpop.f32.mrb[0].mxu0
        %v1609 = vadd.f32 0.0, %v1608
        %v1610 = vpop.f32.mrb[0].mxu0
        %1611 = vmatprep.mubr.bf16.mxu0 0
        %1612 = vmatmul.mubr.bf16.gmra.mrb[0].mxu0 %v1425
        %v1613 = vpop.f32.mrb[0].mxu0
        %v1614 = vadd.f32 0.0, %v1613
        %v1615 = vpop.f32.mrb[0].mxu0
        %v1616 = vpop.f32.mrb[0].mxu0
        %v1617 = vadd.f32 0.0, %v1616
        %v1618 = vpop.f32.mrb[0].mxu0
        %1619 = vdwg.mxu0
        %v1620 = vpack.c.bf16 %v1561, %v1558
        %v1621 = vpack.c.bf16 %v1569, %v1566
        %v1622 = vpack.c.bf16 %v1577, %v1574
        %v1623 = vpack.c.bf16 %v1585, %v1582
        %v1624 = vpack.c.bf16 %v1593, %v1590
        %v1625 = vpack.c.bf16 %v1601, %v1598
        %v1626 = vpack.c.bf16 %v1609, %v1606
        %v1627 = vpack.c.bf16 %v1617, %v1614
        %1636 = vrot.lane.b32.xlu0 %v1620, 4
        %v1637 = vpop.permute.xlu0 %1636
        %1638 = vrot.lane.b32.xlu0 %v1621, 4
        %v1639 = vpop.permute.xlu0 %1638
        %1640 = vrot.lane.b32.xlu0 %v1622, 4
        %v1641 = vpop.permute.xlu0 %1640
        %1642 = vrot.lane.b32.xlu0 %v1623, 4
        %v1643 = vpop.permute.xlu0 %1642
        %1644 = vrot.lane.b32.xlu0 %v1624, 4
        %v1645 = vpop.permute.xlu0 %1644
        %1646 = vrot.lane.b32.xlu0 %v1625, 4
        %v1647 = vpop.permute.xlu0 %1646
        %1648 = vrot.lane.b32.xlu0 %v1626, 4
        %v1649 = vpop.permute.xlu0 %1648
        %1650 = vrot.lane.b32.xlu0 %v1627, 4
        %v1651 = vpop.permute.xlu0 %1650
        %vm1660 = vcmask 64544
        %1661 = vst.msk [vmem:[#allocation3] sm:$0xff] %vm1660, %v1637
        %1662 = vst.msk [vmem:[#allocation3 + $0x8] sm:$0xff] %vm1660, %v1639
        %1663 = vst.msk [vmem:[#allocation3 + $0x10] sm:$0xff] %vm1660, %v1641
        %1664 = vst.msk [vmem:[#allocation3 + $0x18] sm:$0xff] %vm1660, %v1643
        %1665 = vst.msk [vmem:[#allocation3 + $0x20] sm:$0xff] %vm1660, %v1645
        %1666 = vst.msk [vmem:[#allocation3 + $0x28] sm:$0xff] %vm1660, %v1647
        %1667 = vst.msk [vmem:[#allocation3 + $0x30] sm:$0xff] %vm1660, %v1649
        %1668 = vst.msk [vmem:[#allocation3 + $0x38] sm:$0xff] %vm1660, %v1651
        %v1669 = vld [vmem:[%s485] sm:$0xff]
        %v1670 = vld [vmem:[%s485 + $0x8] sm:$0xff]
        %v1671 = vld [vmem:[%s485 + $0x10] sm:$0xff]
        %v1672 = vld [vmem:[%s485 + $0x18] sm:$0xff]
        %v1673 = vld [vmem:[%s485 + $0x20] sm:$0xff]
        %v1674 = vld [vmem:[%s485 + $0x28] sm:$0xff]
        %v1675 = vld [vmem:[%s485 + $0x30] sm:$0xff]
        %v1676 = vld [vmem:[%s485 + $0x38] sm:$0xff]
        %v1677 = vld [vmem:[#allocation2] sm:$0xff]
        %v1678 = vld [vmem:[#allocation2 + $0x8] sm:$0xff]
        %v1679 = vld [vmem:[#allocation2 + $0x10] sm:$0xff]
        %v1680 = vld [vmem:[#allocation2 + $0x18] sm:$0xff]
        %v1681 = vld [vmem:[#allocation2 + $0x20] sm:$0xff]
        %v1682 = vld [vmem:[#allocation2 + $0x28] sm:$0xff]
        %v1683 = vld [vmem:[#allocation2 + $0x30] sm:$0xff]
        %v1684 = vld [vmem:[#allocation2 + $0x38] sm:$0xff]
        %1693 = vrot.lane.b32.xlu0 %v1669, 120
        %v1694 = vpop.permute.xlu0 %1693
        %1695 = vrot.lane.b32.xlu0 %v1670, 120
        %v1696 = vpop.permute.xlu0 %1695
        %1697 = vrot.lane.b32.xlu0 %v1671, 120
        %v1698 = vpop.permute.xlu0 %1697
        %1699 = vrot.lane.b32.xlu0 %v1672, 120
        %v1700 = vpop.permute.xlu0 %1699
        %1701 = vrot.lane.b32.xlu0 %v1673, 120
        %v1702 = vpop.permute.xlu0 %1701
        %1703 = vrot.lane.b32.xlu0 %v1674, 120
        %v1704 = vpop.permute.xlu0 %1703
        %1705 = vrot.lane.b32.xlu0 %v1675, 120
        %v1706 = vpop.permute.xlu0 %1705
        %1707 = vrot.lane.b32.xlu0 %v1676, 120
        %v1708 = vpop.permute.xlu0 %1707
        %1717 = vrot.lane.b32.xlu0 %v1677, 88
        %v1718 = vpop.permute.xlu0 %1717
        %1719 = vrot.lane.b32.xlu0 %v1678, 88
        %v1720 = vpop.permute.xlu0 %1719
        %1721 = vrot.lane.b32.xlu0 %v1679, 88
        %v1722 = vpop.permute.xlu0 %1721
        %1723 = vrot.lane.b32.xlu0 %v1680, 88
        %v1724 = vpop.permute.xlu0 %1723
        %1725 = vrot.lane.b32.xlu0 %v1681, 88
        %v1726 = vpop.permute.xlu0 %1725
        %1727 = vrot.lane.b32.xlu0 %v1682, 88
        %v1728 = vpop.permute.xlu0 %1727
        %1729 = vrot.lane.b32.xlu0 %v1683, 88
        %v1730 = vpop.permute.xlu0 %1729
        %1731 = vrot.lane.b32.xlu0 %v1684, 88
        %v1732 = vpop.permute.xlu0 %1731
        %v1734 = vsel %vm526, %v1694, 0
        %v1737 = vsel %vm526, %v1696, 0
        %v1740 = vsel %vm526, %v1698, 0
        %v1743 = vsel %vm526, %v1700, 0
        %v1746 = vsel %vm526, %v1702, 0
        %v1749 = vsel %vm526, %v1704, 0
        %v1752 = vsel %vm526, %v1706, 0
        %v1755 = vsel %vm526, %v1708, 0
        %v1758 = vsel %vm526, %v1718, 0
        %v1761 = vsel %vm526, %v1720, 0
        %v1764 = vsel %vm526, %v1722, 0
        %v1767 = vsel %vm526, %v1724, 0
        %v1770 = vsel %vm526, %v1726, 0
        %v1773 = vsel %vm526, %v1728, 0
        %v1776 = vsel %vm526, %v1730, 0
        %v1779 = vsel %vm526, %v1732, 0
        %1781 = vmatprep.subr.bf16.mxu0 0
        %1782 = vmatpush1.bf16.xpose.msra.mxu0 %v1758
        %1783 = vmatprep.subr.bf16.mxu0 0
        %1784 = vmatpush1.bf16.xpose.msra.mxu0 %v1761
        %1785 = vmatprep.subr.bf16.mxu0 0
        %1786 = vmatpush1.bf16.xpose.msra.mxu0 %v1764
        %1787 = vmatprep.subr.bf16.mxu0 0
        %1788 = vmatpush1.bf16.xpose.msra.mxu0 %v1767
        %1789 = vmatprep.subr.bf16.mxu0 0
        %1790 = vmatpush1.bf16.xpose.msra.mxu0 %v1770
        %1791 = vmatprep.subr.bf16.mxu0 0
        %1792 = vmatpush1.bf16.xpose.msra.mxu0 %v1773
        %1793 = vmatprep.subr.bf16.mxu0 0
        %1794 = vmatpush1.bf16.xpose.msra.mxu0 %v1776
        %1795 = vmatprep.subr.bf16.mxu0 0
        %1796 = vmatpush1.bf16.xpose.msra.mxu0 %v1779
        %1797 = vmatprep.subr.bf16.mxu0 0
        %1798 = vmatpush1.bf16.xpose.msra.mxu0 0
        %1799 = vmatprep.subr.bf16.mxu0 0
        %1800 = vmatpush1.bf16.xpose.msra.mxu0 0
        %1801 = vmatprep.subr.bf16.mxu0 0
        %1802 = vmatpush1.bf16.xpose.msra.mxu0 0
        %1803 = vmatprep.subr.bf16.mxu0 0
        %1804 = vmatpush1.bf16.xpose.msra.mxu0 0
        %1805 = vmatprep.subr.bf16.mxu0 0
        %1806 = vmatpush1.bf16.xpose.msra.mxu0 0
        %1807 = vmatprep.subr.bf16.mxu0 0
        %1808 = vmatpush1.bf16.xpose.msra.mxu0 0
        %1809 = vmatprep.subr.bf16.mxu0 0
        %1810 = vmatpush1.bf16.xpose.msra.mxu0 0
        %1811 = vmatprep.subr.bf16.mxu0 0
        %1812 = vmatpush1.bf16.xpose.msra.mxu0 0
        %1813 = vmatprep.mubr.bf16.mxu0 0
        %1814 = vmatmul.mubr.bf16.gmra.mrb[0].mxu0 %v1734
        %v1815 = vpop.f32.mrb[0].mxu0
        %v1816 = vadd.f32 0.0, %v1815
        %v1817 = vpop.f32.mrb[0].mxu0
        %v1818 = vpop.f32.mrb[0].mxu0
        %v1819 = vadd.f32 0.0, %v1818
        %v1820 = vpop.f32.mrb[0].mxu0
        %1821 = vmatprep.mubr.bf16.mxu0 0
        %1822 = vmatmul.mubr.bf16.gmra.mrb[0].mxu0 %v1737
        %v1823 = vpop.f32.mrb[0].mxu0
        %v1824 = vadd.f32 0.0, %v1823
        %v1825 = vpop.f32.mrb[0].mxu0
        %v1826 = vpop.f32.mrb[0].mxu0
        %v1827 = vadd.f32 0.0, %v1826
        %v1828 = vpop.f32.mrb[0].mxu0
        %1829 = vmatprep.mubr.bf16.mxu0 0
        %1830 = vmatmul.mubr.bf16.gmra.mrb[0].mxu0 %v1740
        %v1831 = vpop.f32.mrb[0].mxu0
        %v1832 = vadd.f32 0.0, %v1831
        %v1833 = vpop.f32.mrb[0].mxu0
        %v1834 = vpop.f32.mrb[0].mxu0
        %v1835 = vadd.f32 0.0, %v1834
        %v1836 = vpop.f32.mrb[0].mxu0
        %1837 = vmatprep.mubr.bf16.mxu0 0
        %1838 = vmatmul.mubr.bf16.gmra.mrb[0].mxu0 %v1743
        %v1839 = vpop.f32.mrb[0].mxu0
        %v1840 = vadd.f32 0.0, %v1839
        %v1841 = vpop.f32.mrb[0].mxu0
        %v1842 = vpop.f32.mrb[0].mxu0
        %v1843 = vadd.f32 0.0, %v1842
        %v1844 = vpop.f32.mrb[0].mxu0
        %1845 = vmatprep.mubr.bf16.mxu0 0
        %1846 = vmatmul.mubr.bf16.gmra.mrb[0].mxu0 %v1746
        %v1847 = vpop.f32.mrb[0].mxu0
        %v1848 = vadd.f32 0.0, %v1847
        %v1849 = vpop.f32.mrb[0].mxu0
        %v1850 = vpop.f32.mrb[0].mxu0
        %v1851 = vadd.f32 0.0, %v1850
        %v1852 = vpop.f32.mrb[0].mxu0
        %1853 = vmatprep.mubr.bf16.mxu0 0
        %1854 = vmatmul.mubr.bf16.gmra.mrb[0].mxu0 %v1749
        %v1855 = vpop.f32.mrb[0].mxu0
        %v1856 = vadd.f32 0.0, %v1855
        %v1857 = vpop.f32.mrb[0].mxu0
        %v1858 = vpop.f32.mrb[0].mxu0
        %v1859 = vadd.f32 0.0, %v1858
        %v1860 = vpop.f32.mrb[0].mxu0
        %1861 = vmatprep.mubr.bf16.mxu0 0
        %1862 = vmatmul.mubr.bf16.gmra.mrb[0].mxu0 %v1752
        %v1863 = vpop.f32.mrb[0].mxu0
        %v1864 = vadd.f32 0.0, %v1863
        %v1865 = vpop.f32.mrb[0].mxu0
        %v1866 = vpop.f32.mrb[0].mxu0
        %v1867 = vadd.f32 0.0, %v1866
        %v1868 = vpop.f32.mrb[0].mxu0
        %1869 = vmatprep.mubr.bf16.mxu0 0
        %1870 = vmatmul.mubr.bf16.gmra.mrb[0].mxu0 %v1755
        %v1871 = vpop.f32.mrb[0].mxu0
        %v1872 = vadd.f32 0.0, %v1871
        %v1873 = vpop.f32.mrb[0].mxu0
        %v1874 = vpop.f32.mrb[0].mxu0
        %v1875 = vadd.f32 0.0, %v1874
        %v1876 = vpop.f32.mrb[0].mxu0
        %1877 = vdwg.mxu0
        %v1878 = vsel %vm481, %v1816, -1e+30
        %v1879 = vsel %vm481, %v1819, -1e+30
        %v1880 = vsel %vm481, %v1824, -1e+30
        %v1881 = vsel %vm481, %v1827, -1e+30
        %v1882 = vsel %vm481, %v1832, -1e+30
        %v1883 = vsel %vm481, %v1835, -1e+30
        %v1884 = vsel %vm481, %v1840, -1e+30
        %v1885 = vsel %vm481, %v1843, -1e+30
        %v1886 = vsel %vm481, %v1848, -1e+30
        %v1887 = vsel %vm481, %v1851, -1e+30
        %v1888 = vsel %vm481, %v1856, -1e+30
        %v1889 = vsel %vm481, %v1859, -1e+30
        %v1890 = vsel %vm481, %v1864, -1e+30
        %v1891 = vsel %vm481, %v1867, -1e+30
        %v1892 = vsel %vm481, %v1872, -1e+30
        %v1893 = vsel %vm481, %v1875, -1e+30
        %1894 = vmax.xlane.f32.xlu0 %v1878
        %v1895 = vpop.xlane.xlu0 %1894
        %1896 = vmax.xlane.f32.xlu0 %v1879
        %v1897 = vpop.xlane.xlu0 %1896
        %1898 = vmax.xlane.f32.xlu0 %v1880
        %v1899 = vpop.xlane.xlu0 %1898
        %1900 = vmax.xlane.f32.xlu0 %v1881
        %v1901 = vpop.xlane.xlu0 %1900
        %1902 = vmax.xlane.f32.xlu0 %v1882
        %v1903 = vpop.xlane.xlu0 %1902
        %1904 = vmax.xlane.f32.xlu0 %v1883
        %v1905 = vpop.xlane.xlu0 %1904
        %1906 = vmax.xlane.f32.xlu0 %v1884
        %v1907 = vpop.xlane.xlu0 %1906
        %1908 = vmax.xlane.f32.xlu0 %v1885
        %v1909 = vpop.xlane.xlu0 %1908
        %1910 = vmax.xlane.f32.xlu0 %v1886
        %v1911 = vpop.xlane.xlu0 %1910
        %1912 = vmax.xlane.f32.xlu0 %v1887
        %v1913 = vpop.xlane.xlu0 %1912
        %1914 = vmax.xlane.f32.xlu0 %v1888
        %v1915 = vpop.xlane.xlu0 %1914
        %1916 = vmax.xlane.f32.xlu0 %v1889
        %v1917 = vpop.xlane.xlu0 %1916
        %1918 = vmax.xlane.f32.xlu0 %v1890
        %v1919 = vpop.xlane.xlu0 %1918
        %1920 = vmax.xlane.f32.xlu0 %v1891
        %v1921 = vpop.xlane.xlu0 %1920
        %1922 = vmax.xlane.f32.xlu0 %v1892
        %v1923 = vpop.xlane.xlu0 %1922
        %1924 = vmax.xlane.f32.xlu0 %v1893
        %v1925 = vpop.xlane.xlu0 %1924
        %v1926 = vsub.f32 %v1878, %v1895
        %v1927 = vsub.f32 %v1879, %v1897
        %v1928 = vsub.f32 %v1880, %v1899
        %v1929 = vsub.f32 %v1881, %v1901
        %v1930 = vsub.f32 %v1882, %v1903
        %v1931 = vsub.f32 %v1883, %v1905
        %v1932 = vsub.f32 %v1884, %v1907
        %v1933 = vsub.f32 %v1885, %v1909
        %v1934 = vsub.f32 %v1886, %v1911
        %v1935 = vsub.f32 %v1887, %v1913
        %v1936 = vsub.f32 %v1888, %v1915
        %v1937 = vsub.f32 %v1889, %v1917
        %v1938 = vsub.f32 %v1890, %v1919
        %v1939 = vsub.f32 %v1891, %v1921
        %v1940 = vsub.f32 %v1892, %v1923
        %v1941 = vsub.f32 %v1893, %v1925
        %v1942 = vmul.f32 %v1926, 1.442695
        %v1943 = vpow.pop %v1942
        %v1944 = vmul.f32 %v1927, 1.442695
        %v1945 = vpow.pop %v1944
        %v1946 = vmul.f32 %v1928, 1.442695
        %v1947 = vpow.pop %v1946
        %v1948 = vmul.f32 %v1929, 1.442695
        %v1949 = vpow.pop %v1948
        %v1950 = vmul.f32 %v1930, 1.442695
        %v1951 = vpow.pop %v1950
        %v1952 = vmul.f32 %v1931, 1.442695
        %v1953 = vpow.pop %v1952
        %v1954 = vmul.f32 %v1932, 1.442695
        %v1955 = vpow.pop %v1954
        %v1956 = vmul.f32 %v1933, 1.442695
        %v1957 = vpow.pop %v1956
        %v1958 = vmul.f32 %v1934, 1.442695
        %v1959 = vpow.pop %v1958
        %v1960 = vmul.f32 %v1935, 1.442695
        %v1961 = vpow.pop %v1960
        %v1962 = vmul.f32 %v1936, 1.442695
        %v1963 = vpow.pop %v1962
        %v1964 = vmul.f32 %v1937, 1.442695
        %v1965 = vpow.pop %v1964
        %v1966 = vmul.f32 %v1938, 1.442695
        %v1967 = vpow.pop %v1966
        %v1968 = vmul.f32 %v1939, 1.442695
        %v1969 = vpow.pop %v1968
        %v1970 = vmul.f32 %v1940, 1.442695
        %v1971 = vpow.pop %v1970
        %v1972 = vmul.f32 %v1941, 1.442695
        %v1973 = vpow.pop %v1972
        %1974 = vadd.xlane.f32.xlu0 %v1943
        %v1975 = vpop.xlane.xlu0 %1974
        %1976 = vadd.xlane.f32.xlu0 %v1945
        %v1977 = vpop.xlane.xlu0 %1976
        %1978 = vadd.xlane.f32.xlu0 %v1947
        %v1979 = vpop.xlane.xlu0 %1978
        %1980 = vadd.xlane.f32.xlu0 %v1949
        %v1981 = vpop.xlane.xlu0 %1980
        %1982 = vadd.xlane.f32.xlu0 %v1951
        %v1983 = vpop.xlane.xlu0 %1982
        %1984 = vadd.xlane.f32.xlu0 %v1953
        %v1985 = vpop.xlane.xlu0 %1984
        %1986 = vadd.xlane.f32.xlu0 %v1955
        %v1987 = vpop.xlane.xlu0 %1986
        %1988 = vadd.xlane.f32.xlu0 %v1957
        %v1989 = vpop.xlane.xlu0 %1988
        %1990 = vadd.xlane.f32.xlu0 %v1959
        %v1991 = vpop.xlane.xlu0 %1990
        %1992 = vadd.xlane.f32.xlu0 %v1961
        %v1993 = vpop.xlane.xlu0 %1992
        %1994 = vadd.xlane.f32.xlu0 %v1963
        %v1995 = vpop.xlane.xlu0 %1994
        %1996 = vadd.xlane.f32.xlu0 %v1965
        %v1997 = vpop.xlane.xlu0 %1996
        %1998 = vadd.xlane.f32.xlu0 %v1967
        %v1999 = vpop.xlane.xlu0 %1998
        %2000 = vadd.xlane.f32.xlu0 %v1969
        %v2001 = vpop.xlane.xlu0 %2000
        %2002 = vadd.xlane.f32.xlu0 %v1971
        %v2003 = vpop.xlane.xlu0 %2002
        %2004 = vadd.xlane.f32.xlu0 %v1973
        %v2005 = vpop.xlane.xlu0 %2004
        %v2006 = vrcp.pop %v1975
        %v2007 = vmul.f32 %v1943, %v2006
        %v2008 = vrcp.pop %v1977
        %v2009 = vmul.f32 %v1945, %v2008
        %v2010 = vrcp.pop %v1979
        %v2011 = vmul.f32 %v1947, %v2010
        %v2012 = vrcp.pop %v1981
        %v2013 = vmul.f32 %v1949, %v2012
        %v2014 = vrcp.pop %v1983
        %v2015 = vmul.f32 %v1951, %v2014
        %v2016 = vrcp.pop %v1985
        %v2017 = vmul.f32 %v1953, %v2016
        %v2018 = vrcp.pop %v1987
        %v2019 = vmul.f32 %v1955, %v2018
        %v2020 = vrcp.pop %v1989
        %v2021 = vmul.f32 %v1957, %v2020
        %v2022 = vrcp.pop %v1991
        %v2023 = vmul.f32 %v1959, %v2022
        %v2024 = vrcp.pop %v1993
        %v2025 = vmul.f32 %v1961, %v2024
        %v2026 = vrcp.pop %v1995
        %v2027 = vmul.f32 %v1963, %v2026
        %v2028 = vrcp.pop %v1997
        %v2029 = vmul.f32 %v1965, %v2028
        %v2030 = vrcp.pop %v1999
        %v2031 = vmul.f32 %v1967, %v2030
        %v2032 = vrcp.pop %v2001
        %v2033 = vmul.f32 %v1969, %v2032
        %v2034 = vrcp.pop %v2003
        %v2035 = vmul.f32 %v1971, %v2034
        %v2036 = vrcp.pop %v2005
        %v2037 = vmul.f32 %v1973, %v2036
        %v2038 = vpack.c.bf16 %v2009, %v2007
        %v2039 = vpack.c.bf16 %v2013, %v2011
        %v2040 = vpack.c.bf16 %v2017, %v2015
        %v2041 = vpack.c.bf16 %v2021, %v2019
        %v2042 = vpack.c.bf16 %v2025, %v2023
        %v2043 = vpack.c.bf16 %v2029, %v2027
        %v2044 = vpack.c.bf16 %v2033, %v2031
        %v2045 = vpack.c.bf16 %v2037, %v2035
        %v2054 = vunpack.c.l.b16 %v2038
        %v2055 = vunpack.c.h.b16 %v2038
        %v2056 = vunpack.c.l.b16 %v2039
        %v2057 = vunpack.c.h.b16 %v2039
        %v2058 = vunpack.c.l.b16 %v2040
        %v2059 = vunpack.c.h.b16 %v2040
        %v2060 = vunpack.c.l.b16 %v2041
        %v2061 = vunpack.c.h.b16 %v2041
        %v2062 = vunpack.c.l.b16 %v2042
        %v2063 = vunpack.c.h.b16 %v2042
        %v2064 = vunpack.c.l.b16 %v2043
        %v2065 = vunpack.c.h.b16 %v2043
        %v2066 = vunpack.c.l.b16 %v2044
        %v2067 = vunpack.c.h.b16 %v2044
        %v2068 = vunpack.c.l.b16 %v2045
        %v2069 = vunpack.c.h.b16 %v2045
        %v2070 = vpack.c.b16 %v2054, %v2054
        %v2071 = vpack.c.b16 %v2055, %v2055
        %v2072 = vpack.c.b16 %v2056, %v2056
        %v2073 = vpack.c.b16 %v2057, %v2057
        %v2074 = vpack.c.b16 %v2058, %v2058
        %v2075 = vpack.c.b16 %v2059, %v2059
        %v2076 = vpack.c.b16 %v2060, %v2060
        %v2077 = vpack.c.b16 %v2061, %v2061
        %v2078 = vpack.c.b16 %v2062, %v2062
        %v2079 = vpack.c.b16 %v2063, %v2063
        %v2080 = vpack.c.b16 %v2064, %v2064
        %v2081 = vpack.c.b16 %v2065, %v2065
        %v2082 = vpack.c.b16 %v2066, %v2066
        %v2083 = vpack.c.b16 %v2067, %v2067
        %v2084 = vpack.c.b16 %v2068, %v2068
        %v2085 = vpack.c.b16 %v2069, %v2069
        %s2102 = scalar_lea.vmem %s245, 128 [#allocation4]
        %2103 = vst [vmem:[%s2102] sm:$0xf] %v2070
        %2104 = vst [vmem:[%s2102 + $0x4] sm:$0xf] %v2071
        %2105 = vst [vmem:[%s2102 + $0x8] sm:$0xf] %v2072
        %2106 = vst [vmem:[%s2102 + $0xc] sm:$0xf] %v2073
        %2107 = vst [vmem:[%s2102 + $0x10] sm:$0xf] %v2074
        %2108 = vst [vmem:[%s2102 + $0x14] sm:$0xf] %v2075
        %2109 = vst [vmem:[%s2102 + $0x18] sm:$0xf] %v2076
        %2110 = vst [vmem:[%s2102 + $0x1c] sm:$0xf] %v2077
        %2111 = vst [vmem:[%s2102 + $0x20] sm:$0xf] %v2078
        %2112 = vst [vmem:[%s2102 + $0x24] sm:$0xf] %v2079
        %2113 = vst [vmem:[%s2102 + $0x28] sm:$0xf] %v2080
        %2114 = vst [vmem:[%s2102 + $0x2c] sm:$0xf] %v2081
        %2115 = vst [vmem:[%s2102 + $0x30] sm:$0xf] %v2082
        %2116 = vst [vmem:[%s2102 + $0x34] sm:$0xf] %v2083
        %2117 = vst [vmem:[%s2102 + $0x38] sm:$0xf] %v2084
        %2118 = vst [vmem:[%s2102 + $0x3c] sm:$0xf] %v2085
        %2119 = vrot.lane.b32.xlu0 %v1677, 56
        %v2120 = vpop.permute.xlu0 %2119
        %2121 = vrot.lane.b32.xlu0 %v1678, 56
        %v2122 = vpop.permute.xlu0 %2121
        %2123 = vrot.lane.b32.xlu0 %v1679, 56
        %v2124 = vpop.permute.xlu0 %2123
        %2125 = vrot.lane.b32.xlu0 %v1680, 56
        %v2126 = vpop.permute.xlu0 %2125
        %2127 = vrot.lane.b32.xlu0 %v1681, 56
        %v2128 = vpop.permute.xlu0 %2127
        %2129 = vrot.lane.b32.xlu0 %v1682, 56
        %v2130 = vpop.permute.xlu0 %2129
        %2131 = vrot.lane.b32.xlu0 %v1683, 56
        %v2132 = vpop.permute.xlu0 %2131
        %2133 = vrot.lane.b32.xlu0 %v1684, 56
        %v2134 = vpop.permute.xlu0 %2133
        %2143 = vmatprep.subr.bf16.mxu0 0
        %2144 = vmatpush1.bf16.msra.mxu0 %v2120
        %2145 = vmatprep.subr.bf16.mxu0 0
        %2146 = vmatpush1.bf16.msra.mxu0 %v2122
        %2147 = vmatprep.subr.bf16.mxu0 0
        %2148 = vmatpush1.bf16.msra.mxu0 %v2124
        %2149 = vmatprep.subr.bf16.mxu0 0
        %2150 = vmatpush1.bf16.msra.mxu0 %v2126
        %2151 = vmatprep.subr.bf16.mxu0 0
        %2152 = vmatpush1.bf16.msra.mxu0 %v2128
        %2153 = vmatprep.subr.bf16.mxu0 0
        %2154 = vmatpush1.bf16.msra.mxu0 %v2130
        %2155 = vmatprep.subr.bf16.mxu0 0
        %2156 = vmatpush1.bf16.msra.mxu0 %v2132
        %2157 = vmatprep.subr.bf16.mxu0 0
        %2158 = vmatpush1.bf16.msra.mxu0 %v2134
        %2159 = vmatprep.subr.bf16.mxu0 0
        %2160 = vmatpush1.bf16.msra.mxu0 0
        %2161 = vmatprep.subr.bf16.mxu0 0
        %2162 = vmatpush1.bf16.msra.mxu0 0
        %2163 = vmatprep.subr.bf16.mxu0 0
        %2164 = vmatpush1.bf16.msra.mxu0 0
        %2165 = vmatprep.subr.bf16.mxu0 0
        %2166 = vmatpush1.bf16.msra.mxu0 0
        %2167 = vmatprep.subr.bf16.mxu0 0
        %2168 = vmatpush1.bf16.msra.mxu0 0
        %2169 = vmatprep.subr.bf16.mxu0 0
        %2170 = vmatpush1.bf16.msra.mxu0 0
        %2171 = vmatprep.subr.bf16.mxu0 0
        %2172 = vmatpush1.bf16.msra.mxu0 0
        %2173 = vmatprep.subr.bf16.mxu0 0
        %2174 = vmatpush1.bf16.msra.mxu0 0
        %2175 = vmatprep.mubr.bf16.mxu0 0
        %2176 = vmatmul.mubr.bf16.gmra.mrb[0].mxu0 %v2038
        %v2177 = vpop.f32.mrb[0].mxu0
        %v2178 = vadd.f32 0.0, %v2177
        %v2179 = vpop.f32.mrb[0].mxu0
        %v2180 = vpop.f32.mrb[0].mxu0
        %v2181 = vadd.f32 0.0, %v2180
        %v2182 = vpop.f32.mrb[0].mxu0
        %2183 = vmatprep.mubr.bf16.mxu0 0
        %2184 = vmatmul.mubr.bf16.gmra.mrb[0].mxu0 %v2039
        %v2185 = vpop.f32.mrb[0].mxu0
        %v2186 = vadd.f32 0.0, %v2185
        %v2187 = vpop.f32.mrb[0].mxu0
        %v2188 = vpop.f32.mrb[0].mxu0
        %v2189 = vadd.f32 0.0, %v2188
        %v2190 = vpop.f32.mrb[0].mxu0
        %2191 = vmatprep.mubr.bf16.mxu0 0
        %2192 = vmatmul.mubr.bf16.gmra.mrb[0].mxu0 %v2040
        %v2193 = vpop.f32.mrb[0].mxu0
        %v2194 = vadd.f32 0.0, %v2193
        %v2195 = vpop.f32.mrb[0].mxu0
        %v2196 = vpop.f32.mrb[0].mxu0
        %v2197 = vadd.f32 0.0, %v2196
        %v2198 = vpop.f32.mrb[0].mxu0
        %2199 = vmatprep.mubr.bf16.mxu0 0
        %2200 = vmatmul.mubr.bf16.gmra.mrb[0].mxu0 %v2041
        %v2201 = vpop.f32.mrb[0].mxu0
        %v2202 = vadd.f32 0.0, %v2201
        %v2203 = vpop.f32.mrb[0].mxu0
        %v2204 = vpop.f32.mrb[0].mxu0
        %v2205 = vadd.f32 0.0, %v2204
        %v2206 = vpop.f32.mrb[0].mxu0
        %2207 = vmatprep.mubr.bf16.mxu0 0
        %2208 = vmatmul.mubr.bf16.gmra.mrb[0].mxu0 %v2042
        %v2209 = vpop.f32.mrb[0].mxu0
        %v2210 = vadd.f32 0.0, %v2209
        %v2211 = vpop.f32.mrb[0].mxu0
        %v2212 = vpop.f32.mrb[0].mxu0
        %v2213 = vadd.f32 0.0, %v2212
        %v2214 = vpop.f32.mrb[0].mxu0
        %2215 = vmatprep.mubr.bf16.mxu0 0
        %2216 = vmatmul.mubr.bf16.gmra.mrb[0].mxu0 %v2043
        %v2217 = vpop.f32.mrb[0].mxu0
        %v2218 = vadd.f32 0.0, %v2217
        %v2219 = vpop.f32.mrb[0].mxu0
        %v2220 = vpop.f32.mrb[0].mxu0
        %v2221 = vadd.f32 0.0, %v2220
        %v2222 = vpop.f32.mrb[0].mxu0
        %2223 = vmatprep.mubr.bf16.mxu0 0
        %2224 = vmatmul.mubr.bf16.gmra.mrb[0].mxu0 %v2044
        %v2225 = vpop.f32.mrb[0].mxu0
        %v2226 = vadd.f32 0.0, %v2225
        %v2227 = vpop.f32.mrb[0].mxu0
        %v2228 = vpop.f32.mrb[0].mxu0
        %v2229 = vadd.f32 0.0, %v2228
        %v2230 = vpop.f32.mrb[0].mxu0
        %2231 = vmatprep.mubr.bf16.mxu0 0
        %2232 = vmatmul.mubr.bf16.gmra.mrb[0].mxu0 %v2045
        %v2233 = vpop.f32.mrb[0].mxu0
        %v2234 = vadd.f32 0.0, %v2233
        %v2235 = vpop.f32.mrb[0].mxu0
        %v2236 = vpop.f32.mrb[0].mxu0
        %v2237 = vadd.f32 0.0, %v2236
        %v2238 = vpop.f32.mrb[0].mxu0
        %2239 = vdwg.mxu0
        %v2240 = vpack.c.bf16 %v2181, %v2178
        %v2241 = vpack.c.bf16 %v2189, %v2186
        %v2242 = vpack.c.bf16 %v2197, %v2194
        %v2243 = vpack.c.bf16 %v2205, %v2202
        %v2244 = vpack.c.bf16 %v2213, %v2210
        %v2245 = vpack.c.bf16 %v2221, %v2218
        %v2246 = vpack.c.bf16 %v2229, %v2226
        %v2247 = vpack.c.bf16 %v2237, %v2234
        %2256 = vrot.lane.b32.xlu0 %v2240, 8
        %v2257 = vpop.permute.xlu0 %2256
        %2258 = vrot.lane.b32.xlu0 %v2241, 8
        %v2259 = vpop.permute.xlu0 %2258
        %2260 = vrot.lane.b32.xlu0 %v2242, 8
        %v2261 = vpop.permute.xlu0 %2260
        %2262 = vrot.lane.b32.xlu0 %v2243, 8
        %v2263 = vpop.permute.xlu0 %2262
        %2264 = vrot.lane.b32.xlu0 %v2244, 8
        %v2265 = vpop.permute.xlu0 %2264
        %2266 = vrot.lane.b32.xlu0 %v2245, 8
        %v2267 = vpop.permute.xlu0 %2266
        %2268 = vrot.lane.b32.xlu0 %v2246, 8
        %v2269 = vpop.permute.xlu0 %2268
        %2270 = vrot.lane.b32.xlu0 %v2247, 8
        %v2271 = vpop.permute.xlu0 %2270
        %vm2280 = vcmask 97344
        %2281 = vst.msk [vmem:[#allocation3] sm:$0xff] %vm2280, %v2257
        %2282 = vst.msk [vmem:[#allocation3 + $0x8] sm:$0xff] %vm2280, %v2259
        %2283 = vst.msk [vmem:[#allocation3 + $0x10] sm:$0xff] %vm2280, %v2261
        %2284 = vst.msk [vmem:[#allocation3 + $0x18] sm:$0xff] %vm2280, %v2263
        %2285 = vst.msk [vmem:[#allocation3 + $0x20] sm:$0xff] %vm2280, %v2265
        %2286 = vst.msk [vmem:[#allocation3 + $0x28] sm:$0xff] %vm2280, %v2267
        %2287 = vst.msk [vmem:[#allocation3 + $0x30] sm:$0xff] %vm2280, %v2269
        %2288 = vst.msk [vmem:[#allocation3 + $0x38] sm:$0xff] %vm2280, %v2271
        %v2289 = vld [vmem:[%s485] sm:$0xff]
        %v2290 = vld [vmem:[%s485 + $0x8] sm:$0xff]
        %v2291 = vld [vmem:[%s485 + $0x10] sm:$0xff]
        %v2292 = vld [vmem:[%s485 + $0x18] sm:$0xff]
        %v2293 = vld [vmem:[%s485 + $0x20] sm:$0xff]
        %v2294 = vld [vmem:[%s485 + $0x28] sm:$0xff]
        %v2295 = vld [vmem:[%s485 + $0x30] sm:$0xff]
        %v2296 = vld [vmem:[%s485 + $0x38] sm:$0xff]
        %v2297 = vld [vmem:[#allocation2] sm:$0xff]
        %v2298 = vld [vmem:[#allocation2 + $0x8] sm:$0xff]
        %v2299 = vld [vmem:[#allocation2 + $0x10] sm:$0xff]
        %v2300 = vld [vmem:[#allocation2 + $0x18] sm:$0xff]
        %v2301 = vld [vmem:[#allocation2 + $0x20] sm:$0xff]
        %v2302 = vld [vmem:[#allocation2 + $0x28] sm:$0xff]
        %v2303 = vld [vmem:[#allocation2 + $0x30] sm:$0xff]
        %v2304 = vld [vmem:[#allocation2 + $0x38] sm:$0xff]
        %2313 = vrot.lane.b32.xlu0 %v2289, 116
        %v2314 = vpop.permute.xlu0 %2313
        %2315 = vrot.lane.b32.xlu0 %v2290, 116
        %v2316 = vpop.permute.xlu0 %2315
        %2317 = vrot.lane.b32.xlu0 %v2291, 116
        %v2318 = vpop.permute.xlu0 %2317
        %2319 = vrot.lane.b32.xlu0 %v2292, 116
        %v2320 = vpop.permute.xlu0 %2319
        %2321 = vrot.lane.b32.xlu0 %v2293, 116
        %v2322 = vpop.permute.xlu0 %2321
        %2323 = vrot.lane.b32.xlu0 %v2294, 116
        %v2324 = vpop.permute.xlu0 %2323
        %2325 = vrot.lane.b32.xlu0 %v2295, 116
        %v2326 = vpop.permute.xlu0 %2325
        %2327 = vrot.lane.b32.xlu0 %v2296, 116
        %v2328 = vpop.permute.xlu0 %2327
        %2337 = vrot.lane.b32.xlu0 %v2297, 84
        %v2338 = vpop.permute.xlu0 %2337
        %2339 = vrot.lane.b32.xlu0 %v2298, 84
        %v2340 = vpop.permute.xlu0 %2339
        %2341 = vrot.lane.b32.xlu0 %v2299, 84
        %v2342 = vpop.permute.xlu0 %2341
        %2343 = vrot.lane.b32.xlu0 %v2300, 84
        %v2344 = vpop.permute.xlu0 %2343
        %2345 = vrot.lane.b32.xlu0 %v2301, 84
        %v2346 = vpop.permute.xlu0 %2345
        %2347 = vrot.lane.b32.xlu0 %v2302, 84
        %v2348 = vpop.permute.xlu0 %2347
        %2349 = vrot.lane.b32.xlu0 %v2303, 84
        %v2350 = vpop.permute.xlu0 %2349
        %2351 = vrot.lane.b32.xlu0 %v2304, 84
        %v2352 = vpop.permute.xlu0 %2351
        %v2354 = vsel %vm526, %v2314, 0
        %v2357 = vsel %vm526, %v2316, 0
        %v2360 = vsel %vm526, %v2318, 0
        %v2363 = vsel %vm526, %v2320, 0
        %v2366 = vsel %vm526, %v2322, 0
        %v2369 = vsel %vm526, %v2324, 0
        %v2372 = vsel %vm526, %v2326, 0
        %v2375 = vsel %vm526, %v2328, 0
        %v2378 = vsel %vm526, %v2338, 0
        %v2381 = vsel %vm526, %v2340, 0
        %v2384 = vsel %vm526, %v2342, 0
        %v2387 = vsel %vm526, %v2344, 0
        %v2390 = vsel %vm526, %v2346, 0
        %v2393 = vsel %vm526, %v2348, 0
        %v2396 = vsel %vm526, %v2350, 0
        %v2399 = vsel %vm526, %v2352, 0
        %2401 = vmatprep.subr.bf16.mxu0 0
        %2402 = vmatpush1.bf16.xpose.msra.mxu0 %v2378
        %2403 = vmatprep.subr.bf16.mxu0 0
        %2404 = vmatpush1.bf16.xpose.msra.mxu0 %v2381
        %2405 = vmatprep.subr.bf16.mxu0 0
        %2406 = vmatpush1.bf16.xpose.msra.mxu0 %v2384
        %2407 = vmatprep.subr.bf16.mxu0 0
        %2408 = vmatpush1.bf16.xpose.msra.mxu0 %v2387
        %2409 = vmatprep.subr.bf16.mxu0 0
        %2410 = vmatpush1.bf16.xpose.msra.mxu0 %v2390
        %2411 = vmatprep.subr.bf16.mxu0 0
        %2412 = vmatpush1.bf16.xpose.msra.mxu0 %v2393
        %2413 = vmatprep.subr.bf16.mxu0 0
        %2414 = vmatpush1.bf16.xpose.msra.mxu0 %v2396
        %2415 = vmatprep.subr.bf16.mxu0 0
        %2416 = vmatpush1.bf16.xpose.msra.mxu0 %v2399
        %2417 = vmatprep.subr.bf16.mxu0 0
        %2418 = vmatpush1.bf16.xpose.msra.mxu0 0
        %2419 = vmatprep.subr.bf16.mxu0 0
        %2420 = vmatpush1.bf16.xpose.msra.mxu0 0
        %2421 = vmatprep.subr.bf16.mxu0 0
        %2422 = vmatpush1.bf16.xpose.msra.mxu0 0
        %2423 = vmatprep.subr.bf16.mxu0 0
        %2424 = vmatpush1.bf16.xpose.msra.mxu0 0
        %2425 = vmatprep.subr.bf16.mxu0 0
        %2426 = vmatpush1.bf16.xpose.msra.mxu0 0
        %2427 = vmatprep.subr.bf16.mxu0 0
        %2428 = vmatpush1.bf16.xpose.msra.mxu0 0
        %2429 = vmatprep.subr.bf16.mxu0 0
        %2430 = vmatpush1.bf16.xpose.msra.mxu0 0
        %2431 = vmatprep.subr.bf16.mxu0 0
        %2432 = vmatpush1.bf16.xpose.msra.mxu0 0
        %2433 = vmatprep.mubr.bf16.mxu0 0
        %2434 = vmatmul.mubr.bf16.gmra.mrb[0].mxu0 %v2354
        %v2435 = vpop.f32.mrb[0].mxu0
        %v2436 = vadd.f32 0.0, %v2435
        %v2437 = vpop.f32.mrb[0].mxu0
        %v2438 = vpop.f32.mrb[0].mxu0
        %v2439 = vadd.f32 0.0, %v2438
        %v2440 = vpop.f32.mrb[0].mxu0
        %2441 = vmatprep.mubr.bf16.mxu0 0
        %2442 = vmatmul.mubr.bf16.gmra.mrb[0].mxu0 %v2357
        %v2443 = vpop.f32.mrb[0].mxu0
        %v2444 = vadd.f32 0.0, %v2443
        %v2445 = vpop.f32.mrb[0].mxu0
        %v2446 = vpop.f32.mrb[0].mxu0
        %v2447 = vadd.f32 0.0, %v2446
        %v2448 = vpop.f32.mrb[0].mxu0
        %2449 = vmatprep.mubr.bf16.mxu0 0
        %2450 = vmatmul.mubr.bf16.gmra.mrb[0].mxu0 %v2360
        %v2451 = vpop.f32.mrb[0].mxu0
        %v2452 = vadd.f32 0.0, %v2451
        %v2453 = vpop.f32.mrb[0].mxu0
        %v2454 = vpop.f32.mrb[0].mxu0
        %v2455 = vadd.f32 0.0, %v2454
        %v2456 = vpop.f32.mrb[0].mxu0
        %2457 = vmatprep.mubr.bf16.mxu0 0
        %2458 = vmatmul.mubr.bf16.gmra.mrb[0].mxu0 %v2363
        %v2459 = vpop.f32.mrb[0].mxu0
        %v2460 = vadd.f32 0.0, %v2459
        %v2461 = vpop.f32.mrb[0].mxu0
        %v2462 = vpop.f32.mrb[0].mxu0
        %v2463 = vadd.f32 0.0, %v2462
        %v2464 = vpop.f32.mrb[0].mxu0
        %2465 = vmatprep.mubr.bf16.mxu0 0
        %2466 = vmatmul.mubr.bf16.gmra.mrb[0].mxu0 %v2366
        %v2467 = vpop.f32.mrb[0].mxu0
        %v2468 = vadd.f32 0.0, %v2467
        %v2469 = vpop.f32.mrb[0].mxu0
        %v2470 = vpop.f32.mrb[0].mxu0
        %v2471 = vadd.f32 0.0, %v2470
        %v2472 = vpop.f32.mrb[0].mxu0
        %2473 = vmatprep.mubr.bf16.mxu0 0
        %2474 = vmatmul.mubr.bf16.gmra.mrb[0].mxu0 %v2369
        %v2475 = vpop.f32.mrb[0].mxu0
        %v2476 = vadd.f32 0.0, %v2475
        %v2477 = vpop.f32.mrb[0].mxu0
        %v2478 = vpop.f32.mrb[0].mxu0
        %v2479 = vadd.f32 0.0, %v2478
        %v2480 = vpop.f32.mrb[0].mxu0
        %2481 = vmatprep.mubr.bf16.mxu0 0
        %2482 = vmatmul.mubr.bf16.gmra.mrb[0].mxu0 %v2372
        %v2483 = vpop.f32.mrb[0].mxu0
        %v2484 = vadd.f32 0.0, %v2483
        %v2485 = vpop.f32.mrb[0].mxu0
        %v2486 = vpop.f32.mrb[0].mxu0
        %v2487 = vadd.f32 0.0, %v2486
        %v2488 = vpop.f32.mrb[0].mxu0
        %2489 = vmatprep.mubr.bf16.mxu0 0
        %2490 = vmatmul.mubr.bf16.gmra.mrb[0].mxu0 %v2375
        %v2491 = vpop.f32.mrb[0].mxu0
        %v2492 = vadd.f32 0.0, %v2491
        %v2493 = vpop.f32.mrb[0].mxu0
        %v2494 = vpop.f32.mrb[0].mxu0
        %v2495 = vadd.f32 0.0, %v2494
        %v2496 = vpop.f32.mrb[0].mxu0
        %2497 = vdwg.mxu0
        %v2498 = vsel %vm481, %v2436, -1e+30
        %v2499 = vsel %vm481, %v2439, -1e+30
        %v2500 = vsel %vm481, %v2444, -1e+30
        %v2501 = vsel %vm481, %v2447, -1e+30
        %v2502 = vsel %vm481, %v2452, -1e+30
        %v2503 = vsel %vm481, %v2455, -1e+30
        %v2504 = vsel %vm481, %v2460, -1e+30
        %v2505 = vsel %vm481, %v2463, -1e+30
        %v2506 = vsel %vm481, %v2468, -1e+30
        %v2507 = vsel %vm481, %v2471, -1e+30
        %v2508 = vsel %vm481, %v2476, -1e+30
        %v2509 = vsel %vm481, %v2479, -1e+30
        %v2510 = vsel %vm481, %v2484, -1e+30
        %v2511 = vsel %vm481, %v2487, -1e+30
        %v2512 = vsel %vm481, %v2492, -1e+30
        %v2513 = vsel %vm481, %v2495, -1e+30
        %2514 = vmax.xlane.f32.xlu0 %v2498
        %v2515 = vpop.xlane.xlu0 %2514
        %2516 = vmax.xlane.f32.xlu0 %v2499
        %v2517 = vpop.xlane.xlu0 %2516
        %2518 = vmax.xlane.f32.xlu0 %v2500
        %v2519 = vpop.xlane.xlu0 %2518
        %2520 = vmax.xlane.f32.xlu0 %v2501
        %v2521 = vpop.xlane.xlu0 %2520
        %2522 = vmax.xlane.f32.xlu0 %v2502
        %v2523 = vpop.xlane.xlu0 %2522
        %2524 = vmax.xlane.f32.xlu0 %v2503
        %v2525 = vpop.xlane.xlu0 %2524
        %2526 = vmax.xlane.f32.xlu0 %v2504
        %v2527 = vpop.xlane.xlu0 %2526
        %2528 = vmax.xlane.f32.xlu0 %v2505
        %v2529 = vpop.xlane.xlu0 %2528
        %2530 = vmax.xlane.f32.xlu0 %v2506
        %v2531 = vpop.xlane.xlu0 %2530
        %2532 = vmax.xlane.f32.xlu0 %v2507
        %v2533 = vpop.xlane.xlu0 %2532
        %2534 = vmax.xlane.f32.xlu0 %v2508
        %v2535 = vpop.xlane.xlu0 %2534
        %2536 = vmax.xlane.f32.xlu0 %v2509
        %v2537 = vpop.xlane.xlu0 %2536
        %2538 = vmax.xlane.f32.xlu0 %v2510
        %v2539 = vpop.xlane.xlu0 %2538
        %2540 = vmax.xlane.f32.xlu0 %v2511
        %v2541 = vpop.xlane.xlu0 %2540
        %2542 = vmax.xlane.f32.xlu0 %v2512
        %v2543 = vpop.xlane.xlu0 %2542
        %2544 = vmax.xlane.f32.xlu0 %v2513
        %v2545 = vpop.xlane.xlu0 %2544
        %v2546 = vsub.f32 %v2498, %v2515
        %v2547 = vsub.f32 %v2499, %v2517
        %v2548 = vsub.f32 %v2500, %v2519
        %v2549 = vsub.f32 %v2501, %v2521
        %v2550 = vsub.f32 %v2502, %v2523
        %v2551 = vsub.f32 %v2503, %v2525
        %v2552 = vsub.f32 %v2504, %v2527
        %v2553 = vsub.f32 %v2505, %v2529
        %v2554 = vsub.f32 %v2506, %v2531
        %v2555 = vsub.f32 %v2507, %v2533
        %v2556 = vsub.f32 %v2508, %v2535
        %v2557 = vsub.f32 %v2509, %v2537
        %v2558 = vsub.f32 %v2510, %v2539
        %v2559 = vsub.f32 %v2511, %v2541
        %v2560 = vsub.f32 %v2512, %v2543
        %v2561 = vsub.f32 %v2513, %v2545
        %v2562 = vmul.f32 %v2546, 1.442695
        %v2563 = vpow.pop %v2562
        %v2564 = vmul.f32 %v2547, 1.442695
        %v2565 = vpow.pop %v2564
        %v2566 = vmul.f32 %v2548, 1.442695
        %v2567 = vpow.pop %v2566
        %v2568 = vmul.f32 %v2549, 1.442695
        %v2569 = vpow.pop %v2568
        %v2570 = vmul.f32 %v2550, 1.442695
        %v2571 = vpow.pop %v2570
        %v2572 = vmul.f32 %v2551, 1.442695
        %v2573 = vpow.pop %v2572
        %v2574 = vmul.f32 %v2552, 1.442695
        %v2575 = vpow.pop %v2574
        %v2576 = vmul.f32 %v2553, 1.442695
        %v2577 = vpow.pop %v2576
        %v2578 = vmul.f32 %v2554, 1.442695
        %v2579 = vpow.pop %v2578
        %v2580 = vmul.f32 %v2555, 1.442695
        %v2581 = vpow.pop %v2580
        %v2582 = vmul.f32 %v2556, 1.442695
        %v2583 = vpow.pop %v2582
        %v2584 = vmul.f32 %v2557, 1.442695
        %v2585 = vpow.pop %v2584
        %v2586 = vmul.f32 %v2558, 1.442695
        %v2587 = vpow.pop %v2586
        %v2588 = vmul.f32 %v2559, 1.442695
        %v2589 = vpow.pop %v2588
        %v2590 = vmul.f32 %v2560, 1.442695
        %v2591 = vpow.pop %v2590
        %v2592 = vmul.f32 %v2561, 1.442695
        %v2593 = vpow.pop %v2592
        %2594 = vadd.xlane.f32.xlu0 %v2563
        %v2595 = vpop.xlane.xlu0 %2594
        %2596 = vadd.xlane.f32.xlu0 %v2565
        %v2597 = vpop.xlane.xlu0 %2596
        %2598 = vadd.xlane.f32.xlu0 %v2567
        %v2599 = vpop.xlane.xlu0 %2598
        %2600 = vadd.xlane.f32.xlu0 %v2569
        %v2601 = vpop.xlane.xlu0 %2600
        %2602 = vadd.xlane.f32.xlu0 %v2571
        %v2603 = vpop.xlane.xlu0 %2602
        %2604 = vadd.xlane.f32.xlu0 %v2573
        %v2605 = vpop.xlane.xlu0 %2604
        %2606 = vadd.xlane.f32.xlu0 %v2575
        %v2607 = vpop.xlane.xlu0 %2606
        %2608 = vadd.xlane.f32.xlu0 %v2577
        %v2609 = vpop.xlane.xlu0 %2608
        %2610 = vadd.xlane.f32.xlu0 %v2579
        %v2611 = vpop.xlane.xlu0 %2610
        %2612 = vadd.xlane.f32.xlu0 %v2581
        %v2613 = vpop.xlane.xlu0 %2612
        %2614 = vadd.xlane.f32.xlu0 %v2583
        %v2615 = vpop.xlane.xlu0 %2614
        %2616 = vadd.xlane.f32.xlu0 %v2585
        %v2617 = vpop.xlane.xlu0 %2616
        %2618 = vadd.xlane.f32.xlu0 %v2587
        %v2619 = vpop.xlane.xlu0 %2618
        %2620 = vadd.xlane.f32.xlu0 %v2589
        %v2621 = vpop.xlane.xlu0 %2620
        %2622 = vadd.xlane.f32.xlu0 %v2591
        %v2623 = vpop.xlane.xlu0 %2622
        %2624 = vadd.xlane.f32.xlu0 %v2593
        %v2625 = vpop.xlane.xlu0 %2624
        %v2626 = vrcp.pop %v2595
        %v2627 = vmul.f32 %v2563, %v2626
        %v2628 = vrcp.pop %v2597
        %v2629 = vmul.f32 %v2565, %v2628
        %v2630 = vrcp.pop %v2599
        %v2631 = vmul.f32 %v2567, %v2630
        %v2632 = vrcp.pop %v2601
        %v2633 = vmul.f32 %v2569, %v2632
        %v2634 = vrcp.pop %v2603
        %v2635 = vmul.f32 %v2571, %v2634
        %v2636 = vrcp.pop %v2605
        %v2637 = vmul.f32 %v2573, %v2636
        %v2638 = vrcp.pop %v2607
        %v2639 = vmul.f32 %v2575, %v2638
        %v2640 = vrcp.pop %v2609
        %v2641 = vmul.f32 %v2577, %v2640
        %v2642 = vrcp.pop %v2611
        %v2643 = vmul.f32 %v2579, %v2642
        %v2644 = vrcp.pop %v2613
        %v2645 = vmul.f32 %v2581, %v2644
        %v2646 = vrcp.pop %v2615
        %v2647 = vmul.f32 %v2583, %v2646
        %v2648 = vrcp.pop %v2617
        %v2649 = vmul.f32 %v2585, %v2648
        %v2650 = vrcp.pop %v2619
        %v2651 = vmul.f32 %v2587, %v2650
        %v2652 = vrcp.pop %v2621
        %v2653 = vmul.f32 %v2589, %v2652
        %v2654 = vrcp.pop %v2623
        %v2655 = vmul.f32 %v2591, %v2654
        %v2656 = vrcp.pop %v2625
        %v2657 = vmul.f32 %v2593, %v2656
        %v2658 = vpack.c.bf16 %v2629, %v2627
        %v2659 = vpack.c.bf16 %v2633, %v2631
        %v2660 = vpack.c.bf16 %v2637, %v2635
        %v2661 = vpack.c.bf16 %v2641, %v2639
        %v2662 = vpack.c.bf16 %v2645, %v2643
        %v2663 = vpack.c.bf16 %v2649, %v2647
        %v2664 = vpack.c.bf16 %v2653, %v2651
        %v2665 = vpack.c.bf16 %v2657, %v2655
        %v2674 = vunpack.c.l.b16 %v2658
        %v2675 = vunpack.c.h.b16 %v2658
        %v2676 = vunpack.c.l.b16 %v2659
        %v2677 = vunpack.c.h.b16 %v2659
        %v2678 = vunpack.c.l.b16 %v2660
        %v2679 = vunpack.c.h.b16 %v2660
        %v2680 = vunpack.c.l.b16 %v2661
        %v2681 = vunpack.c.h.b16 %v2661
        %v2682 = vunpack.c.l.b16 %v2662
        %v2683 = vunpack.c.h.b16 %v2662
        %v2684 = vunpack.c.l.b16 %v2663
        %v2685 = vunpack.c.h.b16 %v2663
        %v2686 = vunpack.c.l.b16 %v2664
        %v2687 = vunpack.c.h.b16 %v2664
        %v2688 = vunpack.c.l.b16 %v2665
        %v2689 = vunpack.c.h.b16 %v2665
        %v2690 = vpack.c.b16 %v2674, %v2674
        %v2691 = vpack.c.b16 %v2675, %v2675
        %v2692 = vpack.c.b16 %v2676, %v2676
        %v2693 = vpack.c.b16 %v2677, %v2677
        %v2694 = vpack.c.b16 %v2678, %v2678
        %v2695 = vpack.c.b16 %v2679, %v2679
        %v2696 = vpack.c.b16 %v2680, %v2680
        %v2697 = vpack.c.b16 %v2681, %v2681
        %v2698 = vpack.c.b16 %v2682, %v2682
        %v2699 = vpack.c.b16 %v2683, %v2683
        %v2700 = vpack.c.b16 %v2684, %v2684
        %v2701 = vpack.c.b16 %v2685, %v2685
        %v2702 = vpack.c.b16 %v2686, %v2686
        %v2703 = vpack.c.b16 %v2687, %v2687
        %v2704 = vpack.c.b16 %v2688, %v2688
        %v2705 = vpack.c.b16 %v2689, %v2689
        %s2722 = scalar_lea.vmem %s245, 192 [#allocation4]
        %2723 = vst [vmem:[%s2722] sm:$0xf] %v2690
        %2724 = vst [vmem:[%s2722 + $0x4] sm:$0xf] %v2691
        %2725 = vst [vmem:[%s2722 + $0x8] sm:$0xf] %v2692
        %2726 = vst [vmem:[%s2722 + $0xc] sm:$0xf] %v2693
        %2727 = vst [vmem:[%s2722 + $0x10] sm:$0xf] %v2694
        %2728 = vst [vmem:[%s2722 + $0x14] sm:$0xf] %v2695
        %2729 = vst [vmem:[%s2722 + $0x18] sm:$0xf] %v2696
        %2730 = vst [vmem:[%s2722 + $0x1c] sm:$0xf] %v2697
        %2731 = vst [vmem:[%s2722 + $0x20] sm:$0xf] %v2698
        %2732 = vst [vmem:[%s2722 + $0x24] sm:$0xf] %v2699
        %2733 = vst [vmem:[%s2722 + $0x28] sm:$0xf] %v2700
        %2734 = vst [vmem:[%s2722 + $0x2c] sm:$0xf] %v2701
        %2735 = vst [vmem:[%s2722 + $0x30] sm:$0xf] %v2702
        %2736 = vst [vmem:[%s2722 + $0x34] sm:$0xf] %v2703
        %2737 = vst [vmem:[%s2722 + $0x38] sm:$0xf] %v2704
        %2738 = vst [vmem:[%s2722 + $0x3c] sm:$0xf] %v2705
        %2739 = vrot.lane.b32.xlu0 %v2297, 52
        %v2740 = vpop.permute.xlu0 %2739
        %2741 = vrot.lane.b32.xlu0 %v2298, 52
        %v2742 = vpop.permute.xlu0 %2741
        %2743 = vrot.lane.b32.xlu0 %v2299, 52
        %v2744 = vpop.permute.xlu0 %2743
        %2745 = vrot.lane.b32.xlu0 %v2300, 52
        %v2746 = vpop.permute.xlu0 %2745
        %2747 = vrot.lane.b32.xlu0 %v2301, 52
        %v2748 = vpop.permute.xlu0 %2747
        %2749 = vrot.lane.b32.xlu0 %v2302, 52
        %v2750 = vpop.permute.xlu0 %2749
        %2751 = vrot.lane.b32.xlu0 %v2303, 52
        %v2752 = vpop.permute.xlu0 %2751
        %2753 = vrot.lane.b32.xlu0 %v2304, 52
        %v2754 = vpop.permute.xlu0 %2753
        %2763 = vmatprep.subr.bf16.mxu0 0
        %2764 = vmatpush1.bf16.msra.mxu0 %v2740
        %2765 = vmatprep.subr.bf16.mxu0 0
        %2766 = vmatpush1.bf16.msra.mxu0 %v2742
        %2767 = vmatprep.subr.bf16.mxu0 0
        %2768 = vmatpush1.bf16.msra.mxu0 %v2744
        %2769 = vmatprep.subr.bf16.mxu0 0
        %2770 = vmatpush1.bf16.msra.mxu0 %v2746
        %2771 = vmatprep.subr.bf16.mxu0 0
        %2772 = vmatpush1.bf16.msra.mxu0 %v2748
        %2773 = vmatprep.subr.bf16.mxu0 0
        %2774 = vmatpush1.bf16.msra.mxu0 %v2750
        %2775 = vmatprep.subr.bf16.mxu0 0
        %2776 = vmatpush1.bf16.msra.mxu0 %v2752
        %2777 = vmatprep.subr.bf16.mxu0 0
        %2778 = vmatpush1.bf16.msra.mxu0 %v2754
        %2779 = vmatprep.subr.bf16.mxu0 0
        %2780 = vmatpush1.bf16.msra.mxu0 0
        %2781 = vmatprep.subr.bf16.mxu0 0
        %2782 = vmatpush1.bf16.msra.mxu0 0
        %2783 = vmatprep.subr.bf16.mxu0 0
        %2784 = vmatpush1.bf16.msra.mxu0 0
        %2785 = vmatprep.subr.bf16.mxu0 0
        %2786 = vmatpush1.bf16.msra.mxu0 0
        %2787 = vmatprep.subr.bf16.mxu0 0
        %2788 = vmatpush1.bf16.msra.mxu0 0
        %2789 = vmatprep.subr.bf16.mxu0 0
        %2790 = vmatpush1.bf16.msra.mxu0 0
        %2791 = vmatprep.subr.bf16.mxu0 0
        %2792 = vmatpush1.bf16.msra.mxu0 0
        %2793 = vmatprep.subr.bf16.mxu0 0
        %2794 = vmatpush1.bf16.msra.mxu0 0
        %2795 = vmatprep.mubr.bf16.mxu0 0
        %2796 = vmatmul.mubr.bf16.gmra.mrb[0].mxu0 %v2658
        %v2797 = vpop.f32.mrb[0].mxu0
        %v2798 = vadd.f32 0.0, %v2797
        %v2799 = vpop.f32.mrb[0].mxu0
        %v2800 = vpop.f32.mrb[0].mxu0
        %v2801 = vadd.f32 0.0, %v2800
        %v2802 = vpop.f32.mrb[0].mxu0
        %2803 = vmatprep.mubr.bf16.mxu0 0
        %2804 = vmatmul.mubr.bf16.gmra.mrb[0].mxu0 %v2659
        %v2805 = vpop.f32.mrb[0].mxu0
        %v2806 = vadd.f32 0.0, %v2805
        %v2807 = vpop.f32.mrb[0].mxu0
        %v2808 = vpop.f32.mrb[0].mxu0
        %v2809 = vadd.f32 0.0, %v2808
        %v2810 = vpop.f32.mrb[0].mxu0
        %2811 = vmatprep.mubr.bf16.mxu0 0
        %2812 = vmatmul.mubr.bf16.gmra.mrb[0].mxu0 %v2660
        %v2813 = vpop.f32.mrb[0].mxu0
        %v2814 = vadd.f32 0.0, %v2813
        %v2815 = vpop.f32.mrb[0].mxu0
        %v2816 = vpop.f32.mrb[0].mxu0
        %v2817 = vadd.f32 0.0, %v2816
        %v2818 = vpop.f32.mrb[0].mxu0
        %2819 = vmatprep.mubr.bf16.mxu0 0
        %2820 = vmatmul.mubr.bf16.gmra.mrb[0].mxu0 %v2661
        %v2821 = vpop.f32.mrb[0].mxu0
        %v2822 = vadd.f32 0.0, %v2821
        %v2823 = vpop.f32.mrb[0].mxu0
        %v2824 = vpop.f32.mrb[0].mxu0
        %v2825 = vadd.f32 0.0, %v2824
        %v2826 = vpop.f32.mrb[0].mxu0
        %2827 = vmatprep.mubr.bf16.mxu0 0
        %2828 = vmatmul.mubr.bf16.gmra.mrb[0].mxu0 %v2662
        %v2829 = vpop.f32.mrb[0].mxu0
        %v2830 = vadd.f32 0.0, %v2829
        %v2831 = vpop.f32.mrb[0].mxu0
        %v2832 = vpop.f32.mrb[0].mxu0
        %v2833 = vadd.f32 0.0, %v2832
        %v2834 = vpop.f32.mrb[0].mxu0
        %2835 = vmatprep.mubr.bf16.mxu0 0
        %2836 = vmatmul.mubr.bf16.gmra.mrb[0].mxu0 %v2663
        %v2837 = vpop.f32.mrb[0].mxu0
        %v2838 = vadd.f32 0.0, %v2837
        %v2839 = vpop.f32.mrb[0].mxu0
        %v2840 = vpop.f32.mrb[0].mxu0
        %v2841 = vadd.f32 0.0, %v2840
        %v2842 = vpop.f32.mrb[0].mxu0
        %2843 = vmatprep.mubr.bf16.mxu0 0
        %2844 = vmatmul.mubr.bf16.gmra.mrb[0].mxu0 %v2664
        %v2845 = vpop.f32.mrb[0].mxu0
        %v2846 = vadd.f32 0.0, %v2845
        %v2847 = vpop.f32.mrb[0].mxu0
        %v2848 = vpop.f32.mrb[0].mxu0
        %v2849 = vadd.f32 0.0, %v2848
        %v2850 = vpop.f32.mrb[0].mxu0
        %2851 = vmatprep.mubr.bf16.mxu0 0
        %2852 = vmatmul.mubr.bf16.gmra.mrb[0].mxu0 %v2665
        %v2853 = vpop.f32.mrb[0].mxu0
        %v2854 = vadd.f32 0.0, %v2853
        %v2855 = vpop.f32.mrb[0].mxu0
        %v2856 = vpop.f32.mrb[0].mxu0
        %v2857 = vadd.f32 0.0, %v2856
        %v2858 = vpop.f32.mrb[0].mxu0
        %2859 = vdwg.mxu0
        %v2860 = vpack.c.bf16 %v2801, %v2798
        %v2861 = vpack.c.bf16 %v2809, %v2806
        %v2862 = vpack.c.bf16 %v2817, %v2814
        %v2863 = vpack.c.bf16 %v2825, %v2822
        %v2864 = vpack.c.bf16 %v2833, %v2830
        %v2865 = vpack.c.bf16 %v2841, %v2838
        %v2866 = vpack.c.bf16 %v2849, %v2846
        %v2867 = vpack.c.bf16 %v2857, %v2854
        %2876 = vrot.lane.b32.xlu0 %v2860, 12
        %v2877 = vpop.permute.xlu0 %2876
        %2878 = vrot.lane.b32.xlu0 %v2861, 12
        %v2879 = vpop.permute.xlu0 %2878
        %2880 = vrot.lane.b32.xlu0 %v2862, 12
        %v2881 = vpop.permute.xlu0 %2880
        %2882 = vrot.lane.b32.xlu0 %v2863, 12
        %v2883 = vpop.permute.xlu0 %2882
        %2884 = vrot.lane.b32.xlu0 %v2864, 12
        %v2885 = vpop.permute.xlu0 %2884
        %2886 = vrot.lane.b32.xlu0 %v2865, 12
        %v2887 = vpop.permute.xlu0 %2886
        %2888 = vrot.lane.b32.xlu0 %v2866, 12
        %v2889 = vpop.permute.xlu0 %2888
        %2890 = vrot.lane.b32.xlu0 %v2867, 12
        %v2891 = vpop.permute.xlu0 %2890
        %vm2900 = vcmask 130144
        %2901 = vst.msk [vmem:[#allocation3] sm:$0xff] %vm2900, %v2877
        %2902 = vst.msk [vmem:[#allocation3 + $0x8] sm:$0xff] %vm2900, %v2879
        %2903 = vst.msk [vmem:[#allocation3 + $0x10] sm:$0xff] %vm2900, %v2881
        %2904 = vst.msk [vmem:[#allocation3 + $0x18] sm:$0xff] %vm2900, %v2883
        %2905 = vst.msk [vmem:[#allocation3 + $0x20] sm:$0xff] %vm2900, %v2885
        %2906 = vst.msk [vmem:[#allocation3 + $0x28] sm:$0xff] %vm2900, %v2887
        %2907 = vst.msk [vmem:[#allocation3 + $0x30] sm:$0xff] %vm2900, %v2889
        %2908 = vst.msk [vmem:[#allocation3 + $0x38] sm:$0xff] %vm2900, %v2891
        %v2909 = vld [vmem:[%s485] sm:$0xff]
        %v2910 = vld [vmem:[%s485 + $0x8] sm:$0xff]
        %v2911 = vld [vmem:[%s485 + $0x10] sm:$0xff]
        %v2912 = vld [vmem:[%s485 + $0x18] sm:$0xff]
        %v2913 = vld [vmem:[%s485 + $0x20] sm:$0xff]
        %v2914 = vld [vmem:[%s485 + $0x28] sm:$0xff]
        %v2915 = vld [vmem:[%s485 + $0x30] sm:$0xff]
        %v2916 = vld [vmem:[%s485 + $0x38] sm:$0xff]
        %v2917 = vld [vmem:[#allocation2] sm:$0xff]
        %v2918 = vld [vmem:[#allocation2 + $0x8] sm:$0xff]
        %v2919 = vld [vmem:[#allocation2 + $0x10] sm:$0xff]
        %v2920 = vld [vmem:[#allocation2 + $0x18] sm:$0xff]
        %v2921 = vld [vmem:[#allocation2 + $0x20] sm:$0xff]
        %v2922 = vld [vmem:[#allocation2 + $0x28] sm:$0xff]
        %v2923 = vld [vmem:[#allocation2 + $0x30] sm:$0xff]
        %v2924 = vld [vmem:[#allocation2 + $0x38] sm:$0xff]
        %2933 = vrot.lane.b32.xlu0 %v2909, 112
        %v2934 = vpop.permute.xlu0 %2933
        %2935 = vrot.lane.b32.xlu0 %v2910, 112
        %v2936 = vpop.permute.xlu0 %2935
        %2937 = vrot.lane.b32.xlu0 %v2911, 112
        %v2938 = vpop.permute.xlu0 %2937
        %2939 = vrot.lane.b32.xlu0 %v2912, 112
        %v2940 = vpop.permute.xlu0 %2939
        %2941 = vrot.lane.b32.xlu0 %v2913, 112
        %v2942 = vpop.permute.xlu0 %2941
        %2943 = vrot.lane.b32.xlu0 %v2914, 112
        %v2944 = vpop.permute.xlu0 %2943
        %2945 = vrot.lane.b32.xlu0 %v2915, 112
        %v2946 = vpop.permute.xlu0 %2945
        %2947 = vrot.lane.b32.xlu0 %v2916, 112
        %v2948 = vpop.permute.xlu0 %2947
        %2957 = vrot.lane.b32.xlu0 %v2917, 80
        %v2958 = vpop.permute.xlu0 %2957
        %2959 = vrot.lane.b32.xlu0 %v2918, 80
        %v2960 = vpop.permute.xlu0 %2959
        %2961 = vrot.lane.b32.xlu0 %v2919, 80
        %v2962 = vpop.permute.xlu0 %2961
        %2963 = vrot.lane.b32.xlu0 %v2920, 80
        %v2964 = vpop.permute.xlu0 %2963
        %2965 = vrot.lane.b32.xlu0 %v2921, 80
        %v2966 = vpop.permute.xlu0 %2965
        %2967 = vrot.lane.b32.xlu0 %v2922, 80
        %v2968 = vpop.permute.xlu0 %2967
        %2969 = vrot.lane.b32.xlu0 %v2923, 80
        %v2970 = vpop.permute.xlu0 %2969
        %2971 = vrot.lane.b32.xlu0 %v2924, 80
        %v2972 = vpop.permute.xlu0 %2971
        %v2974 = vsel %vm526, %v2934, 0
        %v2977 = vsel %vm526, %v2936, 0
        %v2980 = vsel %vm526, %v2938, 0
        %v2983 = vsel %vm526, %v2940, 0
        %v2986 = vsel %vm526, %v2942, 0
        %v2989 = vsel %vm526, %v2944, 0
        %v2992 = vsel %vm526, %v2946, 0
        %v2995 = vsel %vm526, %v2948, 0
        %v2998 = vsel %vm526, %v2958, 0
        %v3001 = vsel %vm526, %v2960, 0
        %v3004 = vsel %vm526, %v2962, 0
        %v3007 = vsel %vm526, %v2964, 0
        %v3010 = vsel %vm526, %v2966, 0
        %v3013 = vsel %vm526, %v2968, 0
        %v3016 = vsel %vm526, %v2970, 0
        %v3019 = vsel %vm526, %v2972, 0
        %3021 = vmatprep.subr.bf16.mxu0 0
        %3022 = vmatpush1.bf16.xpose.msra.mxu0 %v2998
        %3023 = vmatprep.subr.bf16.mxu0 0
        %3024 = vmatpush1.bf16.xpose.msra.mxu0 %v3001
        %3025 = vmatprep.subr.bf16.mxu0 0
        %3026 = vmatpush1.bf16.xpose.msra.mxu0 %v3004
        %3027 = vmatprep.subr.bf16.mxu0 0
        %3028 = vmatpush1.bf16.xpose.msra.mxu0 %v3007
        %3029 = vmatprep.subr.bf16.mxu0 0
        %3030 = vmatpush1.bf16.xpose.msra.mxu0 %v3010
        %3031 = vmatprep.subr.bf16.mxu0 0
        %3032 = vmatpush1.bf16.xpose.msra.mxu0 %v3013
        %3033 = vmatprep.subr.bf16.mxu0 0
        %3034 = vmatpush1.bf16.xpose.msra.mxu0 %v3016
        %3035 = vmatprep.subr.bf16.mxu0 0
        %3036 = vmatpush1.bf16.xpose.msra.mxu0 %v3019
        %3037 = vmatprep.subr.bf16.mxu0 0
        %3038 = vmatpush1.bf16.xpose.msra.mxu0 0
        %3039 = vmatprep.subr.bf16.mxu0 0
        %3040 = vmatpush1.bf16.xpose.msra.mxu0 0
        %3041 = vmatprep.subr.bf16.mxu0 0
        %3042 = vmatpush1.bf16.xpose.msra.mxu0 0
        %3043 = vmatprep.subr.bf16.mxu0 0
        %3044 = vmatpush1.bf16.xpose.msra.mxu0 0
        %3045 = vmatprep.subr.bf16.mxu0 0
        %3046 = vmatpush1.bf16.xpose.msra.mxu0 0
        %3047 = vmatprep.subr.bf16.mxu0 0
        %3048 = vmatpush1.bf16.xpose.msra.mxu0 0
        %3049 = vmatprep.subr.bf16.mxu0 0
        %3050 = vmatpush1.bf16.xpose.msra.mxu0 0
        %3051 = vmatprep.subr.bf16.mxu0 0
        %3052 = vmatpush1.bf16.xpose.msra.mxu0 0
        %3053 = vmatprep.mubr.bf16.mxu0 0
        %3054 = vmatmul.mubr.bf16.gmra.mrb[0].mxu0 %v2974
        %v3055 = vpop.f32.mrb[0].mxu0
        %v3056 = vadd.f32 0.0, %v3055
        %v3057 = vpop.f32.mrb[0].mxu0
        %v3058 = vpop.f32.mrb[0].mxu0
        %v3059 = vadd.f32 0.0, %v3058
        %v3060 = vpop.f32.mrb[0].mxu0
        %3061 = vmatprep.mubr.bf16.mxu0 0
        %3062 = vmatmul.mubr.bf16.gmra.mrb[0].mxu0 %v2977
        %v3063 = vpop.f32.mrb[0].mxu0
        %v3064 = vadd.f32 0.0, %v3063
        %v3065 = vpop.f32.mrb[0].mxu0
        %v3066 = vpop.f32.mrb[0].mxu0
        %v3067 = vadd.f32 0.0, %v3066
        %v3068 = vpop.f32.mrb[0].mxu0
        %3069 = vmatprep.mubr.bf16.mxu0 0
        %3070 = vmatmul.mubr.bf16.gmra.mrb[0].mxu0 %v2980
        %v3071 = vpop.f32.mrb[0].mxu0
        %v3072 = vadd.f32 0.0, %v3071
        %v3073 = vpop.f32.mrb[0].mxu0
        %v3074 = vpop.f32.mrb[0].mxu0
        %v3075 = vadd.f32 0.0, %v3074
        %v3076 = vpop.f32.mrb[0].mxu0
        %3077 = vmatprep.mubr.bf16.mxu0 0
        %3078 = vmatmul.mubr.bf16.gmra.mrb[0].mxu0 %v2983
        %v3079 = vpop.f32.mrb[0].mxu0
        %v3080 = vadd.f32 0.0, %v3079
        %v3081 = vpop.f32.mrb[0].mxu0
        %v3082 = vpop.f32.mrb[0].mxu0
        %v3083 = vadd.f32 0.0, %v3082
        %v3084 = vpop.f32.mrb[0].mxu0
        %3085 = vmatprep.mubr.bf16.mxu0 0
        %3086 = vmatmul.mubr.bf16.gmra.mrb[0].mxu0 %v2986
        %v3087 = vpop.f32.mrb[0].mxu0
        %v3088 = vadd.f32 0.0, %v3087
        %v3089 = vpop.f32.mrb[0].mxu0
        %v3090 = vpop.f32.mrb[0].mxu0
        %v3091 = vadd.f32 0.0, %v3090
        %v3092 = vpop.f32.mrb[0].mxu0
        %3093 = vmatprep.mubr.bf16.mxu0 0
        %3094 = vmatmul.mubr.bf16.gmra.mrb[0].mxu0 %v2989
        %v3095 = vpop.f32.mrb[0].mxu0
        %v3096 = vadd.f32 0.0, %v3095
        %v3097 = vpop.f32.mrb[0].mxu0
        %v3098 = vpop.f32.mrb[0].mxu0
        %v3099 = vadd.f32 0.0, %v3098
        %v3100 = vpop.f32.mrb[0].mxu0
        %3101 = vmatprep.mubr.bf16.mxu0 0
        %3102 = vmatmul.mubr.bf16.gmra.mrb[0].mxu0 %v2992
        %v3103 = vpop.f32.mrb[0].mxu0
        %v3104 = vadd.f32 0.0, %v3103
        %v3105 = vpop.f32.mrb[0].mxu0
        %v3106 = vpop.f32.mrb[0].mxu0
        %v3107 = vadd.f32 0.0, %v3106
        %v3108 = vpop.f32.mrb[0].mxu0
        %3109 = vmatprep.mubr.bf16.mxu0 0
        %3110 = vmatmul.mubr.bf16.gmra.mrb[0].mxu0 %v2995
        %v3111 = vpop.f32.mrb[0].mxu0
        %v3112 = vadd.f32 0.0, %v3111
        %v3113 = vpop.f32.mrb[0].mxu0
        %v3114 = vpop.f32.mrb[0].mxu0
        %v3115 = vadd.f32 0.0, %v3114
        %v3116 = vpop.f32.mrb[0].mxu0
        %3117 = vdwg.mxu0
        %v3118 = vsel %vm481, %v3056, -1e+30
        %v3119 = vsel %vm481, %v3059, -1e+30
        %v3120 = vsel %vm481, %v3064, -1e+30
        %v3121 = vsel %vm481, %v3067, -1e+30
        %v3122 = vsel %vm481, %v3072, -1e+30
        %v3123 = vsel %vm481, %v3075, -1e+30
        %v3124 = vsel %vm481, %v3080, -1e+30
        %v3125 = vsel %vm481, %v3083, -1e+30
        %v3126 = vsel %vm481, %v3088, -1e+30
        %v3127 = vsel %vm481, %v3091, -1e+30
        %v3128 = vsel %vm481, %v3096, -1e+30
        %v3129 = vsel %vm481, %v3099, -1e+30
        %v3130 = vsel %vm481, %v3104, -1e+30
        %v3131 = vsel %vm481, %v3107, -1e+30
        %v3132 = vsel %vm481, %v3112, -1e+30
        %v3133 = vsel %vm481, %v3115, -1e+30
        %3134 = vmax.xlane.f32.xlu0 %v3118
        %v3135 = vpop.xlane.xlu0 %3134
        %3136 = vmax.xlane.f32.xlu0 %v3119
        %v3137 = vpop.xlane.xlu0 %3136
        %3138 = vmax.xlane.f32.xlu0 %v3120
        %v3139 = vpop.xlane.xlu0 %3138
        %3140 = vmax.xlane.f32.xlu0 %v3121
        %v3141 = vpop.xlane.xlu0 %3140
        %3142 = vmax.xlane.f32.xlu0 %v3122
        %v3143 = vpop.xlane.xlu0 %3142
        %3144 = vmax.xlane.f32.xlu0 %v3123
        %v3145 = vpop.xlane.xlu0 %3144
        %3146 = vmax.xlane.f32.xlu0 %v3124
        %v3147 = vpop.xlane.xlu0 %3146
        %3148 = vmax.xlane.f32.xlu0 %v3125
        %v3149 = vpop.xlane.xlu0 %3148
        %3150 = vmax.xlane.f32.xlu0 %v3126
        %v3151 = vpop.xlane.xlu0 %3150
        %3152 = vmax.xlane.f32.xlu0 %v3127
        %v3153 = vpop.xlane.xlu0 %3152
        %3154 = vmax.xlane.f32.xlu0 %v3128
        %v3155 = vpop.xlane.xlu0 %3154
        %3156 = vmax.xlane.f32.xlu0 %v3129
        %v3157 = vpop.xlane.xlu0 %3156
        %3158 = vmax.xlane.f32.xlu0 %v3130
        %v3159 = vpop.xlane.xlu0 %3158
        %3160 = vmax.xlane.f32.xlu0 %v3131
        %v3161 = vpop.xlane.xlu0 %3160
        %3162 = vmax.xlane.f32.xlu0 %v3132
        %v3163 = vpop.xlane.xlu0 %3162
        %3164 = vmax.xlane.f32.xlu0 %v3133
        %v3165 = vpop.xlane.xlu0 %3164
        %v3166 = vsub.f32 %v3118, %v3135
        %v3167 = vsub.f32 %v3119, %v3137
        %v3168 = vsub.f32 %v3120, %v3139
        %v3169 = vsub.f32 %v3121, %v3141
        %v3170 = vsub.f32 %v3122, %v3143
        %v3171 = vsub.f32 %v3123, %v3145
        %v3172 = vsub.f32 %v3124, %v3147
        %v3173 = vsub.f32 %v3125, %v3149
        %v3174 = vsub.f32 %v3126, %v3151
        %v3175 = vsub.f32 %v3127, %v3153
        %v3176 = vsub.f32 %v3128, %v3155
        %v3177 = vsub.f32 %v3129, %v3157
        %v3178 = vsub.f32 %v3130, %v3159
        %v3179 = vsub.f32 %v3131, %v3161
        %v3180 = vsub.f32 %v3132, %v3163
        %v3181 = vsub.f32 %v3133, %v3165
        %v3182 = vmul.f32 %v3166, 1.442695
        %v3183 = vpow.pop %v3182
        %v3184 = vmul.f32 %v3167, 1.442695
        %v3185 = vpow.pop %v3184
        %v3186 = vmul.f32 %v3168, 1.442695
        %v3187 = vpow.pop %v3186
        %v3188 = vmul.f32 %v3169, 1.442695
        %v3189 = vpow.pop %v3188
        %v3190 = vmul.f32 %v3170, 1.442695
        %v3191 = vpow.pop %v3190
        %v3192 = vmul.f32 %v3171, 1.442695
        %v3193 = vpow.pop %v3192
        %v3194 = vmul.f32 %v3172, 1.442695
        %v3195 = vpow.pop %v3194
        %v3196 = vmul.f32 %v3173, 1.442695
        %v3197 = vpow.pop %v3196
        %v3198 = vmul.f32 %v3174, 1.442695
        %v3199 = vpow.pop %v3198
        %v3200 = vmul.f32 %v3175, 1.442695
        %v3201 = vpow.pop %v3200
        %v3202 = vmul.f32 %v3176, 1.442695
        %v3203 = vpow.pop %v3202
        %v3204 = vmul.f32 %v3177, 1.442695
        %v3205 = vpow.pop %v3204
        %v3206 = vmul.f32 %v3178, 1.442695
        %v3207 = vpow.pop %v3206
        %v3208 = vmul.f32 %v3179, 1.442695
        %v3209 = vpow.pop %v3208
        %v3210 = vmul.f32 %v3180, 1.442695
        %v3211 = vpow.pop %v3210
        %v3212 = vmul.f32 %v3181, 1.442695
        %v3213 = vpow.pop %v3212
        %3214 = vadd.xlane.f32.xlu0 %v3183
        %v3215 = vpop.xlane.xlu0 %3214
        %3216 = vadd.xlane.f32.xlu0 %v3185
        %v3217 = vpop.xlane.xlu0 %3216
        %3218 = vadd.xlane.f32.xlu0 %v3187
        %v3219 = vpop.xlane.xlu0 %3218
        %3220 = vadd.xlane.f32.xlu0 %v3189
        %v3221 = vpop.xlane.xlu0 %3220
        %3222 = vadd.xlane.f32.xlu0 %v3191
        %v3223 = vpop.xlane.xlu0 %3222
        %3224 = vadd.xlane.f32.xlu0 %v3193
        %v3225 = vpop.xlane.xlu0 %3224
        %3226 = vadd.xlane.f32.xlu0 %v3195
        %v3227 = vpop.xlane.xlu0 %3226
        %3228 = vadd.xlane.f32.xlu0 %v3197
        %v3229 = vpop.xlane.xlu0 %3228
        %3230 = vadd.xlane.f32.xlu0 %v3199
        %v3231 = vpop.xlane.xlu0 %3230
        %3232 = vadd.xlane.f32.xlu0 %v3201
        %v3233 = vpop.xlane.xlu0 %3232
        %3234 = vadd.xlane.f32.xlu0 %v3203
        %v3235 = vpop.xlane.xlu0 %3234
        %3236 = vadd.xlane.f32.xlu0 %v3205
        %v3237 = vpop.xlane.xlu0 %3236
        %3238 = vadd.xlane.f32.xlu0 %v3207
        %v3239 = vpop.xlane.xlu0 %3238
        %3240 = vadd.xlane.f32.xlu0 %v3209
        %v3241 = vpop.xlane.xlu0 %3240
        %3242 = vadd.xlane.f32.xlu0 %v3211
        %v3243 = vpop.xlane.xlu0 %3242
        %3244 = vadd.xlane.f32.xlu0 %v3213
        %v3245 = vpop.xlane.xlu0 %3244
        %v3246 = vrcp.pop %v3215
        %v3247 = vmul.f32 %v3183, %v3246
        %v3248 = vrcp.pop %v3217
        %v3249 = vmul.f32 %v3185, %v3248
        %v3250 = vrcp.pop %v3219
        %v3251 = vmul.f32 %v3187, %v3250
        %v3252 = vrcp.pop %v3221
        %v3253 = vmul.f32 %v3189, %v3252
        %v3254 = vrcp.pop %v3223
        %v3255 = vmul.f32 %v3191, %v3254
        %v3256 = vrcp.pop %v3225
        %v3257 = vmul.f32 %v3193, %v3256
        %v3258 = vrcp.pop %v3227
        %v3259 = vmul.f32 %v3195, %v3258
        %v3260 = vrcp.pop %v3229
        %v3261 = vmul.f32 %v3197, %v3260
        %v3262 = vrcp.pop %v3231
        %v3263 = vmul.f32 %v3199, %v3262
        %v3264 = vrcp.pop %v3233
        %v3265 = vmul.f32 %v3201, %v3264
        %v3266 = vrcp.pop %v3235
        %v3267 = vmul.f32 %v3203, %v3266
        %v3268 = vrcp.pop %v3237
        %v3269 = vmul.f32 %v3205, %v3268
        %v3270 = vrcp.pop %v3239
        %v3271 = vmul.f32 %v3207, %v3270
        %v3272 = vrcp.pop %v3241
        %v3273 = vmul.f32 %v3209, %v3272
        %v3274 = vrcp.pop %v3243
        %v3275 = vmul.f32 %v3211, %v3274
        %v3276 = vrcp.pop %v3245
        %v3277 = vmul.f32 %v3213, %v3276
        %v3278 = vpack.c.bf16 %v3249, %v3247
        %v3279 = vpack.c.bf16 %v3253, %v3251
        %v3280 = vpack.c.bf16 %v3257, %v3255
        %v3281 = vpack.c.bf16 %v3261, %v3259
        %v3282 = vpack.c.bf16 %v3265, %v3263
        %v3283 = vpack.c.bf16 %v3269, %v3267
        %v3284 = vpack.c.bf16 %v3273, %v3271
        %v3285 = vpack.c.bf16 %v3277, %v3275
        %v3294 = vunpack.c.l.b16 %v3278
        %v3295 = vunpack.c.h.b16 %v3278
        %v3296 = vunpack.c.l.b16 %v3279
        %v3297 = vunpack.c.h.b16 %v3279
        %v3298 = vunpack.c.l.b16 %v3280
        %v3299 = vunpack.c.h.b16 %v3280
        %v3300 = vunpack.c.l.b16 %v3281
        %v3301 = vunpack.c.h.b16 %v3281
        %v3302 = vunpack.c.l.b16 %v3282
        %v3303 = vunpack.c.h.b16 %v3282
        %v3304 = vunpack.c.l.b16 %v3283
        %v3305 = vunpack.c.h.b16 %v3283
        %v3306 = vunpack.c.l.b16 %v3284
        %v3307 = vunpack.c.h.b16 %v3284
        %v3308 = vunpack.c.l.b16 %v3285
        %v3309 = vunpack.c.h.b16 %v3285
        %v3310 = vpack.c.b16 %v3294, %v3294
        %v3311 = vpack.c.b16 %v3295, %v3295
        %v3312 = vpack.c.b16 %v3296, %v3296
        %v3313 = vpack.c.b16 %v3297, %v3297
        %v3314 = vpack.c.b16 %v3298, %v3298
        %v3315 = vpack.c.b16 %v3299, %v3299
        %v3316 = vpack.c.b16 %v3300, %v3300
        %v3317 = vpack.c.b16 %v3301, %v3301
        %v3318 = vpack.c.b16 %v3302, %v3302
        %v3319 = vpack.c.b16 %v3303, %v3303
        %v3320 = vpack.c.b16 %v3304, %v3304
        %v3321 = vpack.c.b16 %v3305, %v3305
        %v3322 = vpack.c.b16 %v3306, %v3306
        %v3323 = vpack.c.b16 %v3307, %v3307
        %v3324 = vpack.c.b16 %v3308, %v3308
        %v3325 = vpack.c.b16 %v3309, %v3309
        %s3342 = scalar_lea.vmem %s245, 256 [#allocation4]
        %3343 = vst [vmem:[%s3342] sm:$0xf] %v3310
        %3344 = vst [vmem:[%s3342 + $0x4] sm:$0xf] %v3311
        %3345 = vst [vmem:[%s3342 + $0x8] sm:$0xf] %v3312
        %3346 = vst [vmem:[%s3342 + $0xc] sm:$0xf] %v3313
        %3347 = vst [vmem:[%s3342 + $0x10] sm:$0xf] %v3314
        %3348 = vst [vmem:[%s3342 + $0x14] sm:$0xf] %v3315
        %3349 = vst [vmem:[%s3342 + $0x18] sm:$0xf] %v3316
        %3350 = vst [vmem:[%s3342 + $0x1c] sm:$0xf] %v3317
        %3351 = vst [vmem:[%s3342 + $0x20] sm:$0xf] %v3318
        %3352 = vst [vmem:[%s3342 + $0x24] sm:$0xf] %v3319
        %3353 = vst [vmem:[%s3342 + $0x28] sm:$0xf] %v3320
        %3354 = vst [vmem:[%s3342 + $0x2c] sm:$0xf] %v3321
        %3355 = vst [vmem:[%s3342 + $0x30] sm:$0xf] %v3322
        %3356 = vst [vmem:[%s3342 + $0x34] sm:$0xf] %v3323
        %3357 = vst [vmem:[%s3342 + $0x38] sm:$0xf] %v3324
        %3358 = vst [vmem:[%s3342 + $0x3c] sm:$0xf] %v3325
        %3359 = vrot.lane.b32.xlu0 %v2917, 48
        %v3360 = vpop.permute.xlu0 %3359
        %3361 = vrot.lane.b32.xlu0 %v2918, 48
        %v3362 = vpop.permute.xlu0 %3361
        %3363 = vrot.lane.b32.xlu0 %v2919, 48
        %v3364 = vpop.permute.xlu0 %3363
        %3365 = vrot.lane.b32.xlu0 %v2920, 48
        %v3366 = vpop.permute.xlu0 %3365
        %3367 = vrot.lane.b32.xlu0 %v2921, 48
        %v3368 = vpop.permute.xlu0 %3367
        %3369 = vrot.lane.b32.xlu0 %v2922, 48
        %v3370 = vpop.permute.xlu0 %3369
        %3371 = vrot.lane.b32.xlu0 %v2923, 48
        %v3372 = vpop.permute.xlu0 %3371
        %3373 = vrot.lane.b32.xlu0 %v2924, 48
        %v3374 = vpop.permute.xlu0 %3373
        %3383 = vmatprep.subr.bf16.mxu0 0
        %3384 = vmatpush1.bf16.msra.mxu0 %v3360
        %3385 = vmatprep.subr.bf16.mxu0 0
        %3386 = vmatpush1.bf16.msra.mxu0 %v3362
        %3387 = vmatprep.subr.bf16.mxu0 0
        %3388 = vmatpush1.bf16.msra.mxu0 %v3364
        %3389 = vmatprep.subr.bf16.mxu0 0
        %3390 = vmatpush1.bf16.msra.mxu0 %v3366
        %3391 = vmatprep.subr.bf16.mxu0 0
        %3392 = vmatpush1.bf16.msra.mxu0 %v3368
        %3393 = vmatprep.subr.bf16.mxu0 0
        %3394 = vmatpush1.bf16.msra.mxu0 %v3370
        %3395 = vmatprep.subr.bf16.mxu0 0
        %3396 = vmatpush1.bf16.msra.mxu0 %v3372
        %3397 = vmatprep.subr.bf16.mxu0 0
        %3398 = vmatpush1.bf16.msra.mxu0 %v3374
        %3399 = vmatprep.subr.bf16.mxu0 0
        %3400 = vmatpush1.bf16.msra.mxu0 0
        %3401 = vmatprep.subr.bf16.mxu0 0
        %3402 = vmatpush1.bf16.msra.mxu0 0
        %3403 = vmatprep.subr.bf16.mxu0 0
        %3404 = vmatpush1.bf16.msra.mxu0 0
        %3405 = vmatprep.subr.bf16.mxu0 0
        %3406 = vmatpush1.bf16.msra.mxu0 0
        %3407 = vmatprep.subr.bf16.mxu0 0
        %3408 = vmatpush1.bf16.msra.mxu0 0
        %3409 = vmatprep.subr.bf16.mxu0 0
        %3410 = vmatpush1.bf16.msra.mxu0 0
        %3411 = vmatprep.subr.bf16.mxu0 0
        %3412 = vmatpush1.bf16.msra.mxu0 0
        %3413 = vmatprep.subr.bf16.mxu0 0
        %3414 = vmatpush1.bf16.msra.mxu0 0
        %3415 = vmatprep.mubr.bf16.mxu0 0
        %3416 = vmatmul.mubr.bf16.gmra.mrb[0].mxu0 %v3278
        %v3417 = vpop.f32.mrb[0].mxu0
        %v3418 = vadd.f32 0.0, %v3417
        %v3419 = vpop.f32.mrb[0].mxu0
        %v3420 = vpop.f32.mrb[0].mxu0
        %v3421 = vadd.f32 0.0, %v3420
        %v3422 = vpop.f32.mrb[0].mxu0
        %3423 = vmatprep.mubr.bf16.mxu0 0
        %3424 = vmatmul.mubr.bf16.gmra.mrb[0].mxu0 %v3279
        %v3425 = vpop.f32.mrb[0].mxu0
        %v3426 = vadd.f32 0.0, %v3425
        %v3427 = vpop.f32.mrb[0].mxu0
        %v3428 = vpop.f32.mrb[0].mxu0
        %v3429 = vadd.f32 0.0, %v3428
        %v3430 = vpop.f32.mrb[0].mxu0
        %3431 = vmatprep.mubr.bf16.mxu0 0
        %3432 = vmatmul.mubr.bf16.gmra.mrb[0].mxu0 %v3280
        %v3433 = vpop.f32.mrb[0].mxu0
        %v3434 = vadd.f32 0.0, %v3433
        %v3435 = vpop.f32.mrb[0].mxu0
        %v3436 = vpop.f32.mrb[0].mxu0
        %v3437 = vadd.f32 0.0, %v3436
        %v3438 = vpop.f32.mrb[0].mxu0
        %3439 = vmatprep.mubr.bf16.mxu0 0
        %3440 = vmatmul.mubr.bf16.gmra.mrb[0].mxu0 %v3281
        %v3441 = vpop.f32.mrb[0].mxu0
        %v3442 = vadd.f32 0.0, %v3441
        %v3443 = vpop.f32.mrb[0].mxu0
        %v3444 = vpop.f32.mrb[0].mxu0
        %v3445 = vadd.f32 0.0, %v3444
        %v3446 = vpop.f32.mrb[0].mxu0
        %3447 = vmatprep.mubr.bf16.mxu0 0
        %3448 = vmatmul.mubr.bf16.gmra.mrb[0].mxu0 %v3282
        %v3449 = vpop.f32.mrb[0].mxu0
        %v3450 = vadd.f32 0.0, %v3449
        %v3451 = vpop.f32.mrb[0].mxu0
        %v3452 = vpop.f32.mrb[0].mxu0
        %v3453 = vadd.f32 0.0, %v3452
        %v3454 = vpop.f32.mrb[0].mxu0
        %3455 = vmatprep.mubr.bf16.mxu0 0
        %3456 = vmatmul.mubr.bf16.gmra.mrb[0].mxu0 %v3283
        %v3457 = vpop.f32.mrb[0].mxu0
        %v3458 = vadd.f32 0.0, %v3457
        %v3459 = vpop.f32.mrb[0].mxu0
        %v3460 = vpop.f32.mrb[0].mxu0
        %v3461 = vadd.f32 0.0, %v3460
        %v3462 = vpop.f32.mrb[0].mxu0
        %3463 = vmatprep.mubr.bf16.mxu0 0
        %3464 = vmatmul.mubr.bf16.gmra.mrb[0].mxu0 %v3284
        %v3465 = vpop.f32.mrb[0].mxu0
        %v3466 = vadd.f32 0.0, %v3465
        %v3467 = vpop.f32.mrb[0].mxu0
        %v3468 = vpop.f32.mrb[0].mxu0
        %v3469 = vadd.f32 0.0, %v3468
        %v3470 = vpop.f32.mrb[0].mxu0
        %3471 = vmatprep.mubr.bf16.mxu0 0
        %3472 = vmatmul.mubr.bf16.gmra.mrb[0].mxu0 %v3285
        %v3473 = vpop.f32.mrb[0].mxu0
        %v3474 = vadd.f32 0.0, %v3473
        %v3475 = vpop.f32.mrb[0].mxu0
        %v3476 = vpop.f32.mrb[0].mxu0
        %v3477 = vadd.f32 0.0, %v3476
        %v3478 = vpop.f32.mrb[0].mxu0
        %3479 = vdwg.mxu0
        %v3480 = vpack.c.bf16 %v3421, %v3418
        %v3481 = vpack.c.bf16 %v3429, %v3426
        %v3482 = vpack.c.bf16 %v3437, %v3434
        %v3483 = vpack.c.bf16 %v3445, %v3442
        %v3484 = vpack.c.bf16 %v3453, %v3450
        %v3485 = vpack.c.bf16 %v3461, %v3458
        %v3486 = vpack.c.bf16 %v3469, %v3466
        %v3487 = vpack.c.bf16 %v3477, %v3474
        %3496 = vrot.lane.b32.xlu0 %v3480, 16
        %v3497 = vpop.permute.xlu0 %3496
        %3498 = vrot.lane.b32.xlu0 %v3481, 16
        %v3499 = vpop.permute.xlu0 %3498
        %3500 = vrot.lane.b32.xlu0 %v3482, 16
        %v3501 = vpop.permute.xlu0 %3500
        %3502 = vrot.lane.b32.xlu0 %v3483, 16
        %v3503 = vpop.permute.xlu0 %3502
        %3504 = vrot.lane.b32.xlu0 %v3484, 16
        %v3505 = vpop.permute.xlu0 %3504
        %3506 = vrot.lane.b32.xlu0 %v3485, 16
        %v3507 = vpop.permute.xlu0 %3506
        %3508 = vrot.lane.b32.xlu0 %v3486, 16
        %v3509 = vpop.permute.xlu0 %3508
        %3510 = vrot.lane.b32.xlu0 %v3487, 16
        %v3511 = vpop.permute.xlu0 %3510
        %vm3520 = vcmask 162944
        %3521 = vst.msk [vmem:[#allocation3] sm:$0xff] %vm3520, %v3497
        %3522 = vst.msk [vmem:[#allocation3 + $0x8] sm:$0xff] %vm3520, %v3499
        %3523 = vst.msk [vmem:[#allocation3 + $0x10] sm:$0xff] %vm3520, %v3501
        %3524 = vst.msk [vmem:[#allocation3 + $0x18] sm:$0xff] %vm3520, %v3503
        %3525 = vst.msk [vmem:[#allocation3 + $0x20] sm:$0xff] %vm3520, %v3505
        %3526 = vst.msk [vmem:[#allocation3 + $0x28] sm:$0xff] %vm3520, %v3507
        %3527 = vst.msk [vmem:[#allocation3 + $0x30] sm:$0xff] %vm3520, %v3509
        %3528 = vst.msk [vmem:[#allocation3 + $0x38] sm:$0xff] %vm3520, %v3511
        %v3529 = vld [vmem:[%s485] sm:$0xff]
        %v3530 = vld [vmem:[%s485 + $0x8] sm:$0xff]
        %v3531 = vld [vmem:[%s485 + $0x10] sm:$0xff]
        %v3532 = vld [vmem:[%s485 + $0x18] sm:$0xff]
        %v3533 = vld [vmem:[%s485 + $0x20] sm:$0xff]
        %v3534 = vld [vmem:[%s485 + $0x28] sm:$0xff]
        %v3535 = vld [vmem:[%s485 + $0x30] sm:$0xff]
        %v3536 = vld [vmem:[%s485 + $0x38] sm:$0xff]
        %v3537 = vld [vmem:[#allocation2] sm:$0xff]
        %v3538 = vld [vmem:[#allocation2 + $0x8] sm:$0xff]
        %v3539 = vld [vmem:[#allocation2 + $0x10] sm:$0xff]
        %v3540 = vld [vmem:[#allocation2 + $0x18] sm:$0xff]
        %v3541 = vld [vmem:[#allocation2 + $0x20] sm:$0xff]
        %v3542 = vld [vmem:[#allocation2 + $0x28] sm:$0xff]
        %v3543 = vld [vmem:[#allocation2 + $0x30] sm:$0xff]
        %v3544 = vld [vmem:[#allocation2 + $0x38] sm:$0xff]
        %3553 = vrot.lane.b32.xlu0 %v3529, 108
        %v3554 = vpop.permute.xlu0 %3553
        %3555 = vrot.lane.b32.xlu0 %v3530, 108
        %v3556 = vpop.permute.xlu0 %3555
        %3557 = vrot.lane.b32.xlu0 %v3531, 108
        %v3558 = vpop.permute.xlu0 %3557
        %3559 = vrot.lane.b32.xlu0 %v3532, 108
        %v3560 = vpop.permute.xlu0 %3559
        %3561 = vrot.lane.b32.xlu0 %v3533, 108
        %v3562 = vpop.permute.xlu0 %3561
        %3563 = vrot.lane.b32.xlu0 %v3534, 108
        %v3564 = vpop.permute.xlu0 %3563
        %3565 = vrot.lane.b32.xlu0 %v3535, 108
        %v3566 = vpop.permute.xlu0 %3565
        %3567 = vrot.lane.b32.xlu0 %v3536, 108
        %v3568 = vpop.permute.xlu0 %3567
        %3577 = vrot.lane.b32.xlu0 %v3537, 76
        %v3578 = vpop.permute.xlu0 %3577
        %3579 = vrot.lane.b32.xlu0 %v3538, 76
        %v3580 = vpop.permute.xlu0 %3579
        %3581 = vrot.lane.b32.xlu0 %v3539, 76
        %v3582 = vpop.permute.xlu0 %3581
        %3583 = vrot.lane.b32.xlu0 %v3540, 76
        %v3584 = vpop.permute.xlu0 %3583
        %3585 = vrot.lane.b32.xlu0 %v3541, 76
        %v3586 = vpop.permute.xlu0 %3585
        %3587 = vrot.lane.b32.xlu0 %v3542, 76
        %v3588 = vpop.permute.xlu0 %3587
        %3589 = vrot.lane.b32.xlu0 %v3543, 76
        %v3590 = vpop.permute.xlu0 %3589
        %3591 = vrot.lane.b32.xlu0 %v3544, 76
        %v3592 = vpop.permute.xlu0 %3591
        %v3594 = vsel %vm526, %v3554, 0
        %v3597 = vsel %vm526, %v3556, 0
        %v3600 = vsel %vm526, %v3558, 0
        %v3603 = vsel %vm526, %v3560, 0
        %v3606 = vsel %vm526, %v3562, 0
        %v3609 = vsel %vm526, %v3564, 0
        %v3612 = vsel %vm526, %v3566, 0
        %v3615 = vsel %vm526, %v3568, 0
        %v3618 = vsel %vm526, %v3578, 0
        %v3621 = vsel %vm526, %v3580, 0
        %v3624 = vsel %vm526, %v3582, 0
        %v3627 = vsel %vm526, %v3584, 0
        %v3630 = vsel %vm526, %v3586, 0
        %v3633 = vsel %vm526, %v3588, 0
        %v3636 = vsel %vm526, %v3590, 0
        %v3639 = vsel %vm526, %v3592, 0
        %3641 = vmatprep.subr.bf16.mxu0 0
        %3642 = vmatpush1.bf16.xpose.msra.mxu0 %v3618
        %3643 = vmatprep.subr.bf16.mxu0 0
        %3644 = vmatpush1.bf16.xpose.msra.mxu0 %v3621
        %3645 = vmatprep.subr.bf16.mxu0 0
        %3646 = vmatpush1.bf16.xpose.msra.mxu0 %v3624
        %3647 = vmatprep.subr.bf16.mxu0 0
        %3648 = vmatpush1.bf16.xpose.msra.mxu0 %v3627
        %3649 = vmatprep.subr.bf16.mxu0 0
        %3650 = vmatpush1.bf16.xpose.msra.mxu0 %v3630
        %3651 = vmatprep.subr.bf16.mxu0 0
        %3652 = vmatpush1.bf16.xpose.msra.mxu0 %v3633
        %3653 = vmatprep.subr.bf16.mxu0 0
        %3654 = vmatpush1.bf16.xpose.msra.mxu0 %v3636
        %3655 = vmatprep.subr.bf16.mxu0 0
        %3656 = vmatpush1.bf16.xpose.msra.mxu0 %v3639
        %3657 = vmatprep.subr.bf16.mxu0 0
        %3658 = vmatpush1.bf16.xpose.msra.mxu0 0
        %3659 = vmatprep.subr.bf16.mxu0 0
        %3660 = vmatpush1.bf16.xpose.msra.mxu0 0
        %3661 = vmatprep.subr.bf16.mxu0 0
        %3662 = vmatpush1.bf16.xpose.msra.mxu0 0
        %3663 = vmatprep.subr.bf16.mxu0 0
        %3664 = vmatpush1.bf16.xpose.msra.mxu0 0
        %3665 = vmatprep.subr.bf16.mxu0 0
        %3666 = vmatpush1.bf16.xpose.msra.mxu0 0
        %3667 = vmatprep.subr.bf16.mxu0 0
        %3668 = vmatpush1.bf16.xpose.msra.mxu0 0
        %3669 = vmatprep.subr.bf16.mxu0 0
        %3670 = vmatpush1.bf16.xpose.msra.mxu0 0
        %3671 = vmatprep.subr.bf16.mxu0 0
        %3672 = vmatpush1.bf16.xpose.msra.mxu0 0
        %3673 = vmatprep.mubr.bf16.mxu0 0
        %3674 = vmatmul.mubr.bf16.gmra.mrb[0].mxu0 %v3594
        %v3675 = vpop.f32.mrb[0].mxu0
        %v3676 = vadd.f32 0.0, %v3675
        %v3677 = vpop.f32.mrb[0].mxu0
        %v3678 = vpop.f32.mrb[0].mxu0
        %v3679 = vadd.f32 0.0, %v3678
        %v3680 = vpop.f32.mrb[0].mxu0
        %3681 = vmatprep.mubr.bf16.mxu0 0
        %3682 = vmatmul.mubr.bf16.gmra.mrb[0].mxu0 %v3597
        %v3683 = vpop.f32.mrb[0].mxu0
        %v3684 = vadd.f32 0.0, %v3683
        %v3685 = vpop.f32.mrb[0].mxu0
        %v3686 = vpop.f32.mrb[0].mxu0
        %v3687 = vadd.f32 0.0, %v3686
        %v3688 = vpop.f32.mrb[0].mxu0
        %3689 = vmatprep.mubr.bf16.mxu0 0
        %3690 = vmatmul.mubr.bf16.gmra.mrb[0].mxu0 %v3600
        %v3691 = vpop.f32.mrb[0].mxu0
        %v3692 = vadd.f32 0.0, %v3691
        %v3693 = vpop.f32.mrb[0].mxu0
        %v3694 = vpop.f32.mrb[0].mxu0
        %v3695 = vadd.f32 0.0, %v3694
        %v3696 = vpop.f32.mrb[0].mxu0
        %3697 = vmatprep.mubr.bf16.mxu0 0
        %3698 = vmatmul.mubr.bf16.gmra.mrb[0].mxu0 %v3603
        %v3699 = vpop.f32.mrb[0].mxu0
        %v3700 = vadd.f32 0.0, %v3699
        %v3701 = vpop.f32.mrb[0].mxu0
        %v3702 = vpop.f32.mrb[0].mxu0
        %v3703 = vadd.f32 0.0, %v3702
        %v3704 = vpop.f32.mrb[0].mxu0
        %3705 = vmatprep.mubr.bf16.mxu0 0
        %3706 = vmatmul.mubr.bf16.gmra.mrb[0].mxu0 %v3606
        %v3707 = vpop.f32.mrb[0].mxu0
        %v3708 = vadd.f32 0.0, %v3707
        %v3709 = vpop.f32.mrb[0].mxu0
        %v3710 = vpop.f32.mrb[0].mxu0
        %v3711 = vadd.f32 0.0, %v3710
        %v3712 = vpop.f32.mrb[0].mxu0
        %3713 = vmatprep.mubr.bf16.mxu0 0
        %3714 = vmatmul.mubr.bf16.gmra.mrb[0].mxu0 %v3609
        %v3715 = vpop.f32.mrb[0].mxu0
        %v3716 = vadd.f32 0.0, %v3715
        %v3717 = vpop.f32.mrb[0].mxu0
        %v3718 = vpop.f32.mrb[0].mxu0
        %v3719 = vadd.f32 0.0, %v3718
        %v3720 = vpop.f32.mrb[0].mxu0
        %3721 = vmatprep.mubr.bf16.mxu0 0
        %3722 = vmatmul.mubr.bf16.gmra.mrb[0].mxu0 %v3612
        %v3723 = vpop.f32.mrb[0].mxu0
        %v3724 = vadd.f32 0.0, %v3723
        %v3725 = vpop.f32.mrb[0].mxu0
        %v3726 = vpop.f32.mrb[0].mxu0
        %v3727 = vadd.f32 0.0, %v3726
        %v3728 = vpop.f32.mrb[0].mxu0
        %3729 = vmatprep.mubr.bf16.mxu0 0
        %3730 = vmatmul.mubr.bf16.gmra.mrb[0].mxu0 %v3615
        %v3731 = vpop.f32.mrb[0].mxu0
        %v3732 = vadd.f32 0.0, %v3731
        %v3733 = vpop.f32.mrb[0].mxu0
        %v3734 = vpop.f32.mrb[0].mxu0
        %v3735 = vadd.f32 0.0, %v3734
        %v3736 = vpop.f32.mrb[0].mxu0
        %3737 = vdwg.mxu0
        %v3738 = vsel %vm481, %v3676, -1e+30
        %v3739 = vsel %vm481, %v3679, -1e+30
        %v3740 = vsel %vm481, %v3684, -1e+30
        %v3741 = vsel %vm481, %v3687, -1e+30
        %v3742 = vsel %vm481, %v3692, -1e+30
        %v3743 = vsel %vm481, %v3695, -1e+30
        %v3744 = vsel %vm481, %v3700, -1e+30
        %v3745 = vsel %vm481, %v3703, -1e+30
        %v3746 = vsel %vm481, %v3708, -1e+30
        %v3747 = vsel %vm481, %v3711, -1e+30
        %v3748 = vsel %vm481, %v3716, -1e+30
        %v3749 = vsel %vm481, %v3719, -1e+30
        %v3750 = vsel %vm481, %v3724, -1e+30
        %v3751 = vsel %vm481, %v3727, -1e+30
        %v3752 = vsel %vm481, %v3732, -1e+30
        %v3753 = vsel %vm481, %v3735, -1e+30
        %3754 = vmax.xlane.f32.xlu0 %v3738
        %v3755 = vpop.xlane.xlu0 %3754
        %3756 = vmax.xlane.f32.xlu0 %v3739
        %v3757 = vpop.xlane.xlu0 %3756
        %3758 = vmax.xlane.f32.xlu0 %v3740
        %v3759 = vpop.xlane.xlu0 %3758
        %3760 = vmax.xlane.f32.xlu0 %v3741
        %v3761 = vpop.xlane.xlu0 %3760
        %3762 = vmax.xlane.f32.xlu0 %v3742
        %v3763 = vpop.xlane.xlu0 %3762
        %3764 = vmax.xlane.f32.xlu0 %v3743
        %v3765 = vpop.xlane.xlu0 %3764
        %3766 = vmax.xlane.f32.xlu0 %v3744
        %v3767 = vpop.xlane.xlu0 %3766
        %3768 = vmax.xlane.f32.xlu0 %v3745
        %v3769 = vpop.xlane.xlu0 %3768
        %3770 = vmax.xlane.f32.xlu0 %v3746
        %v3771 = vpop.xlane.xlu0 %3770
        %3772 = vmax.xlane.f32.xlu0 %v3747
        %v3773 = vpop.xlane.xlu0 %3772
        %3774 = vmax.xlane.f32.xlu0 %v3748
        %v3775 = vpop.xlane.xlu0 %3774
        %3776 = vmax.xlane.f32.xlu0 %v3749
        %v3777 = vpop.xlane.xlu0 %3776
        %3778 = vmax.xlane.f32.xlu0 %v3750
        %v3779 = vpop.xlane.xlu0 %3778
        %3780 = vmax.xlane.f32.xlu0 %v3751
        %v3781 = vpop.xlane.xlu0 %3780
        %3782 = vmax.xlane.f32.xlu0 %v3752
        %v3783 = vpop.xlane.xlu0 %3782
        %3784 = vmax.xlane.f32.xlu0 %v3753
        %v3785 = vpop.xlane.xlu0 %3784
        %v3786 = vsub.f32 %v3738, %v3755
        %v3787 = vsub.f32 %v3739, %v3757
        %v3788 = vsub.f32 %v3740, %v3759
        %v3789 = vsub.f32 %v3741, %v3761
        %v3790 = vsub.f32 %v3742, %v3763
        %v3791 = vsub.f32 %v3743, %v3765
        %v3792 = vsub.f32 %v3744, %v3767
        %v3793 = vsub.f32 %v3745, %v3769
        %v3794 = vsub.f32 %v3746, %v3771
        %v3795 = vsub.f32 %v3747, %v3773
        %v3796 = vsub.f32 %v3748, %v3775
        %v3797 = vsub.f32 %v3749, %v3777
        %v3798 = vsub.f32 %v3750, %v3779
        %v3799 = vsub.f32 %v3751, %v3781
        %v3800 = vsub.f32 %v3752, %v3783
        %v3801 = vsub.f32 %v3753, %v3785
        %v3802 = vmul.f32 %v3786, 1.442695
        %v3803 = vpow.pop %v3802
        %v3804 = vmul.f32 %v3787, 1.442695
        %v3805 = vpow.pop %v3804
        %v3806 = vmul.f32 %v3788, 1.442695
        %v3807 = vpow.pop %v3806
        %v3808 = vmul.f32 %v3789, 1.442695
        %v3809 = vpow.pop %v3808
        %v3810 = vmul.f32 %v3790, 1.442695
        %v3811 = vpow.pop %v3810
        %v3812 = vmul.f32 %v3791, 1.442695
        %v3813 = vpow.pop %v3812
        %v3814 = vmul.f32 %v3792, 1.442695
        %v3815 = vpow.pop %v3814
        %v3816 = vmul.f32 %v3793, 1.442695
        %v3817 = vpow.pop %v3816
        %v3818 = vmul.f32 %v3794, 1.442695
        %v3819 = vpow.pop %v3818
        %v3820 = vmul.f32 %v3795, 1.442695
        %v3821 = vpow.pop %v3820
        %v3822 = vmul.f32 %v3796, 1.442695
        %v3823 = vpow.pop %v3822
        %v3824 = vmul.f32 %v3797, 1.442695
        %v3825 = vpow.pop %v3824
        %v3826 = vmul.f32 %v3798, 1.442695
        %v3827 = vpow.pop %v3826
        %v3828 = vmul.f32 %v3799, 1.442695
        %v3829 = vpow.pop %v3828
        %v3830 = vmul.f32 %v3800, 1.442695
        %v3831 = vpow.pop %v3830
        %v3832 = vmul.f32 %v3801, 1.442695
        %v3833 = vpow.pop %v3832
        %3834 = vadd.xlane.f32.xlu0 %v3803
        %v3835 = vpop.xlane.xlu0 %3834
        %3836 = vadd.xlane.f32.xlu0 %v3805
        %v3837 = vpop.xlane.xlu0 %3836
        %3838 = vadd.xlane.f32.xlu0 %v3807
        %v3839 = vpop.xlane.xlu0 %3838
        %3840 = vadd.xlane.f32.xlu0 %v3809
        %v3841 = vpop.xlane.xlu0 %3840
        %3842 = vadd.xlane.f32.xlu0 %v3811
        %v3843 = vpop.xlane.xlu0 %3842
        %3844 = vadd.xlane.f32.xlu0 %v3813
        %v3845 = vpop.xlane.xlu0 %3844
        %3846 = vadd.xlane.f32.xlu0 %v3815
        %v3847 = vpop.xlane.xlu0 %3846
        %3848 = vadd.xlane.f32.xlu0 %v3817
        %v3849 = vpop.xlane.xlu0 %3848
        %3850 = vadd.xlane.f32.xlu0 %v3819
        %v3851 = vpop.xlane.xlu0 %3850
        %3852 = vadd.xlane.f32.xlu0 %v3821
        %v3853 = vpop.xlane.xlu0 %3852
        %3854 = vadd.xlane.f32.xlu0 %v3823
        %v3855 = vpop.xlane.xlu0 %3854
        %3856 = vadd.xlane.f32.xlu0 %v3825
        %v3857 = vpop.xlane.xlu0 %3856
        %3858 = vadd.xlane.f32.xlu0 %v3827
        %v3859 = vpop.xlane.xlu0 %3858
        %3860 = vadd.xlane.f32.xlu0 %v3829
        %v3861 = vpop.xlane.xlu0 %3860
        %3862 = vadd.xlane.f32.xlu0 %v3831
        %v3863 = vpop.xlane.xlu0 %3862
        %3864 = vadd.xlane.f32.xlu0 %v3833
        %v3865 = vpop.xlane.xlu0 %3864
        %v3866 = vrcp.pop %v3835
        %v3867 = vmul.f32 %v3803, %v3866
        %v3868 = vrcp.pop %v3837
        %v3869 = vmul.f32 %v3805, %v3868
        %v3870 = vrcp.pop %v3839
        %v3871 = vmul.f32 %v3807, %v3870
        %v3872 = vrcp.pop %v3841
        %v3873 = vmul.f32 %v3809, %v3872
        %v3874 = vrcp.pop %v3843
        %v3875 = vmul.f32 %v3811, %v3874
        %v3876 = vrcp.pop %v3845
        %v3877 = vmul.f32 %v3813, %v3876
        %v3878 = vrcp.pop %v3847
        %v3879 = vmul.f32 %v3815, %v3878
        %v3880 = vrcp.pop %v3849
        %v3881 = vmul.f32 %v3817, %v3880
        %v3882 = vrcp.pop %v3851
        %v3883 = vmul.f32 %v3819, %v3882
        %v3884 = vrcp.pop %v3853
        %v3885 = vmul.f32 %v3821, %v3884
        %v3886 = vrcp.pop %v3855
        %v3887 = vmul.f32 %v3823, %v3886
        %v3888 = vrcp.pop %v3857
        %v3889 = vmul.f32 %v3825, %v3888
        %v3890 = vrcp.pop %v3859
        %v3891 = vmul.f32 %v3827, %v3890
        %v3892 = vrcp.pop %v3861
        %v3893 = vmul.f32 %v3829, %v3892
        %v3894 = vrcp.pop %v3863
        %v3895 = vmul.f32 %v3831, %v3894
        %v3896 = vrcp.pop %v3865
        %v3897 = vmul.f32 %v3833, %v3896
        %v3898 = vpack.c.bf16 %v3869, %v3867
        %v3899 = vpack.c.bf16 %v3873, %v3871
        %v3900 = vpack.c.bf16 %v3877, %v3875
        %v3901 = vpack.c.bf16 %v3881, %v3879
        %v3902 = vpack.c.bf16 %v3885, %v3883
        %v3903 = vpack.c.bf16 %v3889, %v3887
        %v3904 = vpack.c.bf16 %v3893, %v3891
        %v3905 = vpack.c.bf16 %v3897, %v3895
        %v3914 = vunpack.c.l.b16 %v3898
        %v3915 = vunpack.c.h.b16 %v3898
        %v3916 = vunpack.c.l.b16 %v3899
        %v3917 = vunpack.c.h.b16 %v3899
        %v3918 = vunpack.c.l.b16 %v3900
        %v3919 = vunpack.c.h.b16 %v3900
        %v3920 = vunpack.c.l.b16 %v3901
        %v3921 = vunpack.c.h.b16 %v3901
        %v3922 = vunpack.c.l.b16 %v3902
        %v3923 = vunpack.c.h.b16 %v3902
        %v3924 = vunpack.c.l.b16 %v3903
        %v3925 = vunpack.c.h.b16 %v3903
        %v3926 = vunpack.c.l.b16 %v3904
        %v3927 = vunpack.c.h.b16 %v3904
        %v3928 = vunpack.c.l.b16 %v3905
        %v3929 = vunpack.c.h.b16 %v3905
        %v3930 = vpack.c.b16 %v3914, %v3914
        %v3931 = vpack.c.b16 %v3915, %v3915
        %v3932 = vpack.c.b16 %v3916, %v3916
        %v3933 = vpack.c.b16 %v3917, %v3917
        %v3934 = vpack.c.b16 %v3918, %v3918
        %v3935 = vpack.c.b16 %v3919, %v3919
        %v3936 = vpack.c.b16 %v3920, %v3920
        %v3937 = vpack.c.b16 %v3921, %v3921
        %v3938 = vpack.c.b16 %v3922, %v3922
        %v3939 = vpack.c.b16 %v3923, %v3923
        %v3940 = vpack.c.b16 %v3924, %v3924
        %v3941 = vpack.c.b16 %v3925, %v3925
        %v3942 = vpack.c.b16 %v3926, %v3926
        %v3943 = vpack.c.b16 %v3927, %v3927
        %v3944 = vpack.c.b16 %v3928, %v3928
        %v3945 = vpack.c.b16 %v3929, %v3929
        %s3962 = scalar_lea.vmem %s245, 320 [#allocation4]
        %3963 = vst [vmem:[%s3962] sm:$0xf] %v3930
        %3964 = vst [vmem:[%s3962 + $0x4] sm:$0xf] %v3931
        %3965 = vst [vmem:[%s3962 + $0x8] sm:$0xf] %v3932
        %3966 = vst [vmem:[%s3962 + $0xc] sm:$0xf] %v3933
        %3967 = vst [vmem:[%s3962 + $0x10] sm:$0xf] %v3934
        %3968 = vst [vmem:[%s3962 + $0x14] sm:$0xf] %v3935
        %3969 = vst [vmem:[%s3962 + $0x18] sm:$0xf] %v3936
        %3970 = vst [vmem:[%s3962 + $0x1c] sm:$0xf] %v3937
        %3971 = vst [vmem:[%s3962 + $0x20] sm:$0xf] %v3938
        %3972 = vst [vmem:[%s3962 + $0x24] sm:$0xf] %v3939
        %3973 = vst [vmem:[%s3962 + $0x28] sm:$0xf] %v3940
        %3974 = vst [vmem:[%s3962 + $0x2c] sm:$0xf] %v3941
        %3975 = vst [vmem:[%s3962 + $0x30] sm:$0xf] %v3942
        %3976 = vst [vmem:[%s3962 + $0x34] sm:$0xf] %v3943
        %3977 = vst [vmem:[%s3962 + $0x38] sm:$0xf] %v3944
        %3978 = vst [vmem:[%s3962 + $0x3c] sm:$0xf] %v3945
        %3979 = vrot.lane.b32.xlu0 %v3537, 44
        %v3980 = vpop.permute.xlu0 %3979
        %3981 = vrot.lane.b32.xlu0 %v3538, 44
        %v3982 = vpop.permute.xlu0 %3981
        %3983 = vrot.lane.b32.xlu0 %v3539, 44
        %v3984 = vpop.permute.xlu0 %3983
        %3985 = vrot.lane.b32.xlu0 %v3540, 44
        %v3986 = vpop.permute.xlu0 %3985
        %3987 = vrot.lane.b32.xlu0 %v3541, 44
        %v3988 = vpop.permute.xlu0 %3987
        %3989 = vrot.lane.b32.xlu0 %v3542, 44
        %v3990 = vpop.permute.xlu0 %3989
        %3991 = vrot.lane.b32.xlu0 %v3543, 44
        %v3992 = vpop.permute.xlu0 %3991
        %3993 = vrot.lane.b32.xlu0 %v3544, 44
        %v3994 = vpop.permute.xlu0 %3993
        %4003 = vmatprep.subr.bf16.mxu0 0
        %4004 = vmatpush1.bf16.msra.mxu0 %v3980
        %4005 = vmatprep.subr.bf16.mxu0 0
        %4006 = vmatpush1.bf16.msra.mxu0 %v3982
        %4007 = vmatprep.subr.bf16.mxu0 0
        %4008 = vmatpush1.bf16.msra.mxu0 %v3984
        %4009 = vmatprep.subr.bf16.mxu0 0
        %4010 = vmatpush1.bf16.msra.mxu0 %v3986
        %4011 = vmatprep.subr.bf16.mxu0 0
        %4012 = vmatpush1.bf16.msra.mxu0 %v3988
        %4013 = vmatprep.subr.bf16.mxu0 0
        %4014 = vmatpush1.bf16.msra.mxu0 %v3990
        %4015 = vmatprep.subr.bf16.mxu0 0
        %4016 = vmatpush1.bf16.msra.mxu0 %v3992
        %4017 = vmatprep.subr.bf16.mxu0 0
        %4018 = vmatpush1.bf16.msra.mxu0 %v3994
        %4019 = vmatprep.subr.bf16.mxu0 0
        %4020 = vmatpush1.bf16.msra.mxu0 0
        %4021 = vmatprep.subr.bf16.mxu0 0
        %4022 = vmatpush1.bf16.msra.mxu0 0
        %4023 = vmatprep.subr.bf16.mxu0 0
        %4024 = vmatpush1.bf16.msra.mxu0 0
        %4025 = vmatprep.subr.bf16.mxu0 0
        %4026 = vmatpush1.bf16.msra.mxu0 0
        %4027 = vmatprep.subr.bf16.mxu0 0
        %4028 = vmatpush1.bf16.msra.mxu0 0
        %4029 = vmatprep.subr.bf16.mxu0 0
        %4030 = vmatpush1.bf16.msra.mxu0 0
        %4031 = vmatprep.subr.bf16.mxu0 0
        %4032 = vmatpush1.bf16.msra.mxu0 0
        %4033 = vmatprep.subr.bf16.mxu0 0
        %4034 = vmatpush1.bf16.msra.mxu0 0
        %4035 = vmatprep.mubr.bf16.mxu0 0
        %4036 = vmatmul.mubr.bf16.gmra.mrb[0].mxu0 %v3898
        %v4037 = vpop.f32.mrb[0].mxu0
        %v4038 = vadd.f32 0.0, %v4037
        %v4039 = vpop.f32.mrb[0].mxu0
        %v4040 = vpop.f32.mrb[0].mxu0
        %v4041 = vadd.f32 0.0, %v4040
        %v4042 = vpop.f32.mrb[0].mxu0
        %4043 = vmatprep.mubr.bf16.mxu0 0
        %4044 = vmatmul.mubr.bf16.gmra.mrb[0].mxu0 %v3899
        %v4045 = vpop.f32.mrb[0].mxu0
        %v4046 = vadd.f32 0.0, %v4045
        %v4047 = vpop.f32.mrb[0].mxu0
        %v4048 = vpop.f32.mrb[0].mxu0
        %v4049 = vadd.f32 0.0, %v4048
        %v4050 = vpop.f32.mrb[0].mxu0
        %4051 = vmatprep.mubr.bf16.mxu0 0
        %4052 = vmatmul.mubr.bf16.gmra.mrb[0].mxu0 %v3900
        %v4053 = vpop.f32.mrb[0].mxu0
        %v4054 = vadd.f32 0.0, %v4053
        %v4055 = vpop.f32.mrb[0].mxu0
        %v4056 = vpop.f32.mrb[0].mxu0
        %v4057 = vadd.f32 0.0, %v4056
        %v4058 = vpop.f32.mrb[0].mxu0
        %4059 = vmatprep.mubr.bf16.mxu0 0
        %4060 = vmatmul.mubr.bf16.gmra.mrb[0].mxu0 %v3901
        %v4061 = vpop.f32.mrb[0].mxu0
        %v4062 = vadd.f32 0.0, %v4061
        %v4063 = vpop.f32.mrb[0].mxu0
        %v4064 = vpop.f32.mrb[0].mxu0
        %v4065 = vadd.f32 0.0, %v4064
        %v4066 = vpop.f32.mrb[0].mxu0
        %4067 = vmatprep.mubr.bf16.mxu0 0
        %4068 = vmatmul.mubr.bf16.gmra.mrb[0].mxu0 %v3902
        %v4069 = vpop.f32.mrb[0].mxu0
        %v4070 = vadd.f32 0.0, %v4069
        %v4071 = vpop.f32.mrb[0].mxu0
        %v4072 = vpop.f32.mrb[0].mxu0
        %v4073 = vadd.f32 0.0, %v4072
        %v4074 = vpop.f32.mrb[0].mxu0
        %4075 = vmatprep.mubr.bf16.mxu0 0
        %4076 = vmatmul.mubr.bf16.gmra.mrb[0].mxu0 %v3903
        %v4077 = vpop.f32.mrb[0].mxu0
        %v4078 = vadd.f32 0.0, %v4077
        %v4079 = vpop.f32.mrb[0].mxu0
        %v4080 = vpop.f32.mrb[0].mxu0
        %v4081 = vadd.f32 0.0, %v4080
        %v4082 = vpop.f32.mrb[0].mxu0
        %4083 = vmatprep.mubr.bf16.mxu0 0
        %4084 = vmatmul.mubr.bf16.gmra.mrb[0].mxu0 %v3904
        %v4085 = vpop.f32.mrb[0].mxu0
        %v4086 = vadd.f32 0.0, %v4085
        %v4087 = vpop.f32.mrb[0].mxu0
        %v4088 = vpop.f32.mrb[0].mxu0
        %v4089 = vadd.f32 0.0, %v4088
        %v4090 = vpop.f32.mrb[0].mxu0
        %4091 = vmatprep.mubr.bf16.mxu0 0
        %4092 = vmatmul.mubr.bf16.gmra.mrb[0].mxu0 %v3905
        %v4093 = vpop.f32.mrb[0].mxu0
        %v4094 = vadd.f32 0.0, %v4093
        %v4095 = vpop.f32.mrb[0].mxu0
        %v4096 = vpop.f32.mrb[0].mxu0
        %v4097 = vadd.f32 0.0, %v4096
        %v4098 = vpop.f32.mrb[0].mxu0
        %4099 = vdwg.mxu0
        %v4100 = vpack.c.bf16 %v4041, %v4038
        %v4101 = vpack.c.bf16 %v4049, %v4046
        %v4102 = vpack.c.bf16 %v4057, %v4054
        %v4103 = vpack.c.bf16 %v4065, %v4062
        %v4104 = vpack.c.bf16 %v4073, %v4070
        %v4105 = vpack.c.bf16 %v4081, %v4078
        %v4106 = vpack.c.bf16 %v4089, %v4086
        %v4107 = vpack.c.bf16 %v4097, %v4094
        %4116 = vrot.lane.b32.xlu0 %v4100, 20
        %v4117 = vpop.permute.xlu0 %4116
        %4118 = vrot.lane.b32.xlu0 %v4101, 20
        %v4119 = vpop.permute.xlu0 %4118
        %4120 = vrot.lane.b32.xlu0 %v4102, 20
        %v4121 = vpop.permute.xlu0 %4120
        %4122 = vrot.lane.b32.xlu0 %v4103, 20
        %v4123 = vpop.permute.xlu0 %4122
        %4124 = vrot.lane.b32.xlu0 %v4104, 20
        %v4125 = vpop.permute.xlu0 %4124
        %4126 = vrot.lane.b32.xlu0 %v4105, 20
        %v4127 = vpop.permute.xlu0 %4126
        %4128 = vrot.lane.b32.xlu0 %v4106, 20
        %v4129 = vpop.permute.xlu0 %4128
        %4130 = vrot.lane.b32.xlu0 %v4107, 20
        %v4131 = vpop.permute.xlu0 %4130
        %vm4140 = vcmask 195744
        %4141 = vst.msk [vmem:[#allocation3] sm:$0xff] %vm4140, %v4117
        %4142 = vst.msk [vmem:[#allocation3 + $0x8] sm:$0xff] %vm4140, %v4119
        %4143 = vst.msk [vmem:[#allocation3 + $0x10] sm:$0xff] %vm4140, %v4121
        %4144 = vst.msk [vmem:[#allocation3 + $0x18] sm:$0xff] %vm4140, %v4123
        %4145 = vst.msk [vmem:[#allocation3 + $0x20] sm:$0xff] %vm4140, %v4125
        %4146 = vst.msk [vmem:[#allocation3 + $0x28] sm:$0xff] %vm4140, %v4127
        %4147 = vst.msk [vmem:[#allocation3 + $0x30] sm:$0xff] %vm4140, %v4129
        %4148 = vst.msk [vmem:[#allocation3 + $0x38] sm:$0xff] %vm4140, %v4131
        %v4149 = vld [vmem:[%s485] sm:$0xff]
        %v4150 = vld [vmem:[%s485 + $0x8] sm:$0xff]
        %v4151 = vld [vmem:[%s485 + $0x10] sm:$0xff]
        %v4152 = vld [vmem:[%s485 + $0x18] sm:$0xff]
        %v4153 = vld [vmem:[%s485 + $0x20] sm:$0xff]
        %v4154 = vld [vmem:[%s485 + $0x28] sm:$0xff]
        %v4155 = vld [vmem:[%s485 + $0x30] sm:$0xff]
        %v4156 = vld [vmem:[%s485 + $0x38] sm:$0xff]
        %v4157 = vld [vmem:[#allocation2] sm:$0xff]
        %v4158 = vld [vmem:[#allocation2 + $0x8] sm:$0xff]
        %v4159 = vld [vmem:[#allocation2 + $0x10] sm:$0xff]
        %v4160 = vld [vmem:[#allocation2 + $0x18] sm:$0xff]
        %v4161 = vld [vmem:[#allocation2 + $0x20] sm:$0xff]
        %v4162 = vld [vmem:[#allocation2 + $0x28] sm:$0xff]
        %v4163 = vld [vmem:[#allocation2 + $0x30] sm:$0xff]
        %v4164 = vld [vmem:[#allocation2 + $0x38] sm:$0xff]
        %4173 = vrot.lane.b32.xlu0 %v4149, 104
        %v4174 = vpop.permute.xlu0 %4173
        %4175 = vrot.lane.b32.xlu0 %v4150, 104
        %v4176 = vpop.permute.xlu0 %4175
        %4177 = vrot.lane.b32.xlu0 %v4151, 104
        %v4178 = vpop.permute.xlu0 %4177
        %4179 = vrot.lane.b32.xlu0 %v4152, 104
        %v4180 = vpop.permute.xlu0 %4179
        %4181 = vrot.lane.b32.xlu0 %v4153, 104
        %v4182 = vpop.permute.xlu0 %4181
        %4183 = vrot.lane.b32.xlu0 %v4154, 104
        %v4184 = vpop.permute.xlu0 %4183
        %4185 = vrot.lane.b32.xlu0 %v4155, 104
        %v4186 = vpop.permute.xlu0 %4185
        %4187 = vrot.lane.b32.xlu0 %v4156, 104
        %v4188 = vpop.permute.xlu0 %4187
        %4197 = vrot.lane.b32.xlu0 %v4157, 72
        %v4198 = vpop.permute.xlu0 %4197
        %4199 = vrot.lane.b32.xlu0 %v4158, 72
        %v4200 = vpop.permute.xlu0 %4199
        %4201 = vrot.lane.b32.xlu0 %v4159, 72
        %v4202 = vpop.permute.xlu0 %4201
        %4203 = vrot.lane.b32.xlu0 %v4160, 72
        %v4204 = vpop.permute.xlu0 %4203
        %4205 = vrot.lane.b32.xlu0 %v4161, 72
        %v4206 = vpop.permute.xlu0 %4205
        %4207 = vrot.lane.b32.xlu0 %v4162, 72
        %v4208 = vpop.permute.xlu0 %4207
        %4209 = vrot.lane.b32.xlu0 %v4163, 72
        %v4210 = vpop.permute.xlu0 %4209
        %4211 = vrot.lane.b32.xlu0 %v4164, 72
        %v4212 = vpop.permute.xlu0 %4211
        %v4214 = vsel %vm526, %v4174, 0
        %v4217 = vsel %vm526, %v4176, 0
        %v4220 = vsel %vm526, %v4178, 0
        %v4223 = vsel %vm526, %v4180, 0
        %v4226 = vsel %vm526, %v4182, 0
        %v4229 = vsel %vm526, %v4184, 0
        %v4232 = vsel %vm526, %v4186, 0
        %v4235 = vsel %vm526, %v4188, 0
        %v4238 = vsel %vm526, %v4198, 0
        %v4241 = vsel %vm526, %v4200, 0
        %v4244 = vsel %vm526, %v4202, 0
        %v4247 = vsel %vm526, %v4204, 0
        %v4250 = vsel %vm526, %v4206, 0
        %v4253 = vsel %vm526, %v4208, 0
        %v4256 = vsel %vm526, %v4210, 0
        %v4259 = vsel %vm526, %v4212, 0
        %4261 = vmatprep.subr.bf16.mxu0 0
        %4262 = vmatpush1.bf16.xpose.msra.mxu0 %v4238
        %4263 = vmatprep.subr.bf16.mxu0 0
        %4264 = vmatpush1.bf16.xpose.msra.mxu0 %v4241
        %4265 = vmatprep.subr.bf16.mxu0 0
        %4266 = vmatpush1.bf16.xpose.msra.mxu0 %v4244
        %4267 = vmatprep.subr.bf16.mxu0 0
        %4268 = vmatpush1.bf16.xpose.msra.mxu0 %v4247
        %4269 = vmatprep.subr.bf16.mxu0 0
        %4270 = vmatpush1.bf16.xpose.msra.mxu0 %v4250
        %4271 = vmatprep.subr.bf16.mxu0 0
        %4272 = vmatpush1.bf16.xpose.msra.mxu0 %v4253
        %4273 = vmatprep.subr.bf16.mxu0 0
        %4274 = vmatpush1.bf16.xpose.msra.mxu0 %v4256
        %4275 = vmatprep.subr.bf16.mxu0 0
        %4276 = vmatpush1.bf16.xpose.msra.mxu0 %v4259
        %4277 = vmatprep.subr.bf16.mxu0 0
        %4278 = vmatpush1.bf16.xpose.msra.mxu0 0
        %4279 = vmatprep.subr.bf16.mxu0 0
        %4280 = vmatpush1.bf16.xpose.msra.mxu0 0
        %4281 = vmatprep.subr.bf16.mxu0 0
        %4282 = vmatpush1.bf16.xpose.msra.mxu0 0
        %4283 = vmatprep.subr.bf16.mxu0 0
        %4284 = vmatpush1.bf16.xpose.msra.mxu0 0
        %4285 = vmatprep.subr.bf16.mxu0 0
        %4286 = vmatpush1.bf16.xpose.msra.mxu0 0
        %4287 = vmatprep.subr.bf16.mxu0 0
        %4288 = vmatpush1.bf16.xpose.msra.mxu0 0
        %4289 = vmatprep.subr.bf16.mxu0 0
        %4290 = vmatpush1.bf16.xpose.msra.mxu0 0
        %4291 = vmatprep.subr.bf16.mxu0 0
        %4292 = vmatpush1.bf16.xpose.msra.mxu0 0
        %4293 = vmatprep.mubr.bf16.mxu0 0
        %4294 = vmatmul.mubr.bf16.gmra.mrb[0].mxu0 %v4214
        %v4295 = vpop.f32.mrb[0].mxu0
        %v4296 = vadd.f32 0.0, %v4295
        %v4297 = vpop.f32.mrb[0].mxu0
        %v4298 = vpop.f32.mrb[0].mxu0
        %v4299 = vadd.f32 0.0, %v4298
        %v4300 = vpop.f32.mrb[0].mxu0
        %4301 = vmatprep.mubr.bf16.mxu0 0
        %4302 = vmatmul.mubr.bf16.gmra.mrb[0].mxu0 %v4217
        %v4303 = vpop.f32.mrb[0].mxu0
        %v4304 = vadd.f32 0.0, %v4303
        %v4305 = vpop.f32.mrb[0].mxu0
        %v4306 = vpop.f32.mrb[0].mxu0
        %v4307 = vadd.f32 0.0, %v4306
        %v4308 = vpop.f32.mrb[0].mxu0
        %4309 = vmatprep.mubr.bf16.mxu0 0
        %4310 = vmatmul.mubr.bf16.gmra.mrb[0].mxu0 %v4220
        %v4311 = vpop.f32.mrb[0].mxu0
        %v4312 = vadd.f32 0.0, %v4311
        %v4313 = vpop.f32.mrb[0].mxu0
        %v4314 = vpop.f32.mrb[0].mxu0
        %v4315 = vadd.f32 0.0, %v4314
        %v4316 = vpop.f32.mrb[0].mxu0
        %4317 = vmatprep.mubr.bf16.mxu0 0
        %4318 = vmatmul.mubr.bf16.gmra.mrb[0].mxu0 %v4223
        %v4319 = vpop.f32.mrb[0].mxu0
        %v4320 = vadd.f32 0.0, %v4319
        %v4321 = vpop.f32.mrb[0].mxu0
        %v4322 = vpop.f32.mrb[0].mxu0
        %v4323 = vadd.f32 0.0, %v4322
        %v4324 = vpop.f32.mrb[0].mxu0
        %4325 = vmatprep.mubr.bf16.mxu0 0
        %4326 = vmatmul.mubr.bf16.gmra.mrb[0].mxu0 %v4226
        %v4327 = vpop.f32.mrb[0].mxu0
        %v4328 = vadd.f32 0.0, %v4327
        %v4329 = vpop.f32.mrb[0].mxu0
        %v4330 = vpop.f32.mrb[0].mxu0
        %v4331 = vadd.f32 0.0, %v4330
        %v4332 = vpop.f32.mrb[0].mxu0
        %4333 = vmatprep.mubr.bf16.mxu0 0
        %4334 = vmatmul.mubr.bf16.gmra.mrb[0].mxu0 %v4229
        %v4335 = vpop.f32.mrb[0].mxu0
        %v4336 = vadd.f32 0.0, %v4335
        %v4337 = vpop.f32.mrb[0].mxu0
        %v4338 = vpop.f32.mrb[0].mxu0
        %v4339 = vadd.f32 0.0, %v4338
        %v4340 = vpop.f32.mrb[0].mxu0
        %4341 = vmatprep.mubr.bf16.mxu0 0
        %4342 = vmatmul.mubr.bf16.gmra.mrb[0].mxu0 %v4232
        %v4343 = vpop.f32.mrb[0].mxu0
        %v4344 = vadd.f32 0.0, %v4343
        %v4345 = vpop.f32.mrb[0].mxu0
        %v4346 = vpop.f32.mrb[0].mxu0
        %v4347 = vadd.f32 0.0, %v4346
        %v4348 = vpop.f32.mrb[0].mxu0
        %4349 = vmatprep.mubr.bf16.mxu0 0
        %4350 = vmatmul.mubr.bf16.gmra.mrb[0].mxu0 %v4235
        %v4351 = vpop.f32.mrb[0].mxu0
        %v4352 = vadd.f32 0.0, %v4351
        %v4353 = vpop.f32.mrb[0].mxu0
        %v4354 = vpop.f32.mrb[0].mxu0
        %v4355 = vadd.f32 0.0, %v4354
        %v4356 = vpop.f32.mrb[0].mxu0
        %4357 = vdwg.mxu0
        %v4358 = vsel %vm481, %v4296, -1e+30
        %v4359 = vsel %vm481, %v4299, -1e+30
        %v4360 = vsel %vm481, %v4304, -1e+30
        %v4361 = vsel %vm481, %v4307, -1e+30
        %v4362 = vsel %vm481, %v4312, -1e+30
        %v4363 = vsel %vm481, %v4315, -1e+30
        %v4364 = vsel %vm481, %v4320, -1e+30
        %v4365 = vsel %vm481, %v4323, -1e+30
        %v4366 = vsel %vm481, %v4328, -1e+30
        %v4367 = vsel %vm481, %v4331, -1e+30
        %v4368 = vsel %vm481, %v4336, -1e+30
        %v4369 = vsel %vm481, %v4339, -1e+30
        %v4370 = vsel %vm481, %v4344, -1e+30
        %v4371 = vsel %vm481, %v4347, -1e+30
        %v4372 = vsel %vm481, %v4352, -1e+30
        %v4373 = vsel %vm481, %v4355, -1e+30
        %4374 = vmax.xlane.f32.xlu0 %v4358
        %v4375 = vpop.xlane.xlu0 %4374
        %4376 = vmax.xlane.f32.xlu0 %v4359
        %v4377 = vpop.xlane.xlu0 %4376
        %4378 = vmax.xlane.f32.xlu0 %v4360
        %v4379 = vpop.xlane.xlu0 %4378
        %4380 = vmax.xlane.f32.xlu0 %v4361
        %v4381 = vpop.xlane.xlu0 %4380
        %4382 = vmax.xlane.f32.xlu0 %v4362
        %v4383 = vpop.xlane.xlu0 %4382
        %4384 = vmax.xlane.f32.xlu0 %v4363
        %v4385 = vpop.xlane.xlu0 %4384
        %4386 = vmax.xlane.f32.xlu0 %v4364
        %v4387 = vpop.xlane.xlu0 %4386
        %4388 = vmax.xlane.f32.xlu0 %v4365
        %v4389 = vpop.xlane.xlu0 %4388
        %4390 = vmax.xlane.f32.xlu0 %v4366
        %v4391 = vpop.xlane.xlu0 %4390
        %4392 = vmax.xlane.f32.xlu0 %v4367
        %v4393 = vpop.xlane.xlu0 %4392
        %4394 = vmax.xlane.f32.xlu0 %v4368
        %v4395 = vpop.xlane.xlu0 %4394
        %4396 = vmax.xlane.f32.xlu0 %v4369
        %v4397 = vpop.xlane.xlu0 %4396
        %4398 = vmax.xlane.f32.xlu0 %v4370
        %v4399 = vpop.xlane.xlu0 %4398
        %4400 = vmax.xlane.f32.xlu0 %v4371
        %v4401 = vpop.xlane.xlu0 %4400
        %4402 = vmax.xlane.f32.xlu0 %v4372
        %v4403 = vpop.xlane.xlu0 %4402
        %4404 = vmax.xlane.f32.xlu0 %v4373
        %v4405 = vpop.xlane.xlu0 %4404
        %v4406 = vsub.f32 %v4358, %v4375
        %v4407 = vsub.f32 %v4359, %v4377
        %v4408 = vsub.f32 %v4360, %v4379
        %v4409 = vsub.f32 %v4361, %v4381
        %v4410 = vsub.f32 %v4362, %v4383
        %v4411 = vsub.f32 %v4363, %v4385
        %v4412 = vsub.f32 %v4364, %v4387
        %v4413 = vsub.f32 %v4365, %v4389
        %v4414 = vsub.f32 %v4366, %v4391
        %v4415 = vsub.f32 %v4367, %v4393
        %v4416 = vsub.f32 %v4368, %v4395
        %v4417 = vsub.f32 %v4369, %v4397
        %v4418 = vsub.f32 %v4370, %v4399
        %v4419 = vsub.f32 %v4371, %v4401
        %v4420 = vsub.f32 %v4372, %v4403
        %v4421 = vsub.f32 %v4373, %v4405
        %v4422 = vmul.f32 %v4406, 1.442695
        %v4423 = vpow.pop %v4422
        %v4424 = vmul.f32 %v4407, 1.442695
        %v4425 = vpow.pop %v4424
        %v4426 = vmul.f32 %v4408, 1.442695
        %v4427 = vpow.pop %v4426
        %v4428 = vmul.f32 %v4409, 1.442695
        %v4429 = vpow.pop %v4428
        %v4430 = vmul.f32 %v4410, 1.442695
        %v4431 = vpow.pop %v4430
        %v4432 = vmul.f32 %v4411, 1.442695
        %v4433 = vpow.pop %v4432
        %v4434 = vmul.f32 %v4412, 1.442695
        %v4435 = vpow.pop %v4434
        %v4436 = vmul.f32 %v4413, 1.442695
        %v4437 = vpow.pop %v4436
        %v4438 = vmul.f32 %v4414, 1.442695
        %v4439 = vpow.pop %v4438
        %v4440 = vmul.f32 %v4415, 1.442695
        %v4441 = vpow.pop %v4440
        %v4442 = vmul.f32 %v4416, 1.442695
        %v4443 = vpow.pop %v4442
        %v4444 = vmul.f32 %v4417, 1.442695
        %v4445 = vpow.pop %v4444
        %v4446 = vmul.f32 %v4418, 1.442695
        %v4447 = vpow.pop %v4446
        %v4448 = vmul.f32 %v4419, 1.442695
        %v4449 = vpow.pop %v4448
        %v4450 = vmul.f32 %v4420, 1.442695
        %v4451 = vpow.pop %v4450
        %v4452 = vmul.f32 %v4421, 1.442695
        %v4453 = vpow.pop %v4452
        %4454 = vadd.xlane.f32.xlu0 %v4423
        %v4455 = vpop.xlane.xlu0 %4454
        %4456 = vadd.xlane.f32.xlu0 %v4425
        %v4457 = vpop.xlane.xlu0 %4456
        %4458 = vadd.xlane.f32.xlu0 %v4427
        %v4459 = vpop.xlane.xlu0 %4458
        %4460 = vadd.xlane.f32.xlu0 %v4429
        %v4461 = vpop.xlane.xlu0 %4460
        %4462 = vadd.xlane.f32.xlu0 %v4431
        %v4463 = vpop.xlane.xlu0 %4462
        %4464 = vadd.xlane.f32.xlu0 %v4433
        %v4465 = vpop.xlane.xlu0 %4464
        %4466 = vadd.xlane.f32.xlu0 %v4435
        %v4467 = vpop.xlane.xlu0 %4466
        %4468 = vadd.xlane.f32.xlu0 %v4437
        %v4469 = vpop.xlane.xlu0 %4468
        %4470 = vadd.xlane.f32.xlu0 %v4439
        %v4471 = vpop.xlane.xlu0 %4470
        %4472 = vadd.xlane.f32.xlu0 %v4441
        %v4473 = vpop.xlane.xlu0 %4472
        %4474 = vadd.xlane.f32.xlu0 %v4443
        %v4475 = vpop.xlane.xlu0 %4474
        %4476 = vadd.xlane.f32.xlu0 %v4445
        %v4477 = vpop.xlane.xlu0 %4476
        %4478 = vadd.xlane.f32.xlu0 %v4447
        %v4479 = vpop.xlane.xlu0 %4478
        %4480 = vadd.xlane.f32.xlu0 %v4449
        %v4481 = vpop.xlane.xlu0 %4480
        %4482 = vadd.xlane.f32.xlu0 %v4451
        %v4483 = vpop.xlane.xlu0 %4482
        %4484 = vadd.xlane.f32.xlu0 %v4453
        %v4485 = vpop.xlane.xlu0 %4484
        %v4486 = vrcp.pop %v4455
        %v4487 = vmul.f32 %v4423, %v4486
        %v4488 = vrcp.pop %v4457
        %v4489 = vmul.f32 %v4425, %v4488
        %v4490 = vrcp.pop %v4459
        %v4491 = vmul.f32 %v4427, %v4490
        %v4492 = vrcp.pop %v4461
        %v4493 = vmul.f32 %v4429, %v4492
        %v4494 = vrcp.pop %v4463
        %v4495 = vmul.f32 %v4431, %v4494
        %v4496 = vrcp.pop %v4465
        %v4497 = vmul.f32 %v4433, %v4496
        %v4498 = vrcp.pop %v4467
        %v4499 = vmul.f32 %v4435, %v4498
        %v4500 = vrcp.pop %v4469
        %v4501 = vmul.f32 %v4437, %v4500
        %v4502 = vrcp.pop %v4471
        %v4503 = vmul.f32 %v4439, %v4502
        %v4504 = vrcp.pop %v4473
        %v4505 = vmul.f32 %v4441, %v4504
        %v4506 = vrcp.pop %v4475
        %v4507 = vmul.f32 %v4443, %v4506
        %v4508 = vrcp.pop %v4477
        %v4509 = vmul.f32 %v4445, %v4508
        %v4510 = vrcp.pop %v4479
        %v4511 = vmul.f32 %v4447, %v4510
        %v4512 = vrcp.pop %v4481
        %v4513 = vmul.f32 %v4449, %v4512
        %v4514 = vrcp.pop %v4483
        %v4515 = vmul.f32 %v4451, %v4514
        %v4516 = vrcp.pop %v4485
        %v4517 = vmul.f32 %v4453, %v4516
        %v4518 = vpack.c.bf16 %v4489, %v4487
        %v4519 = vpack.c.bf16 %v4493, %v4491
        %v4520 = vpack.c.bf16 %v4497, %v4495
        %v4521 = vpack.c.bf16 %v4501, %v4499
        %v4522 = vpack.c.bf16 %v4505, %v4503
        %v4523 = vpack.c.bf16 %v4509, %v4507
        %v4524 = vpack.c.bf16 %v4513, %v4511
        %v4525 = vpack.c.bf16 %v4517, %v4515
        %v4534 = vunpack.c.l.b16 %v4518
        %v4535 = vunpack.c.h.b16 %v4518
        %v4536 = vunpack.c.l.b16 %v4519
        %v4537 = vunpack.c.h.b16 %v4519
        %v4538 = vunpack.c.l.b16 %v4520
        %v4539 = vunpack.c.h.b16 %v4520
        %v4540 = vunpack.c.l.b16 %v4521
        %v4541 = vunpack.c.h.b16 %v4521
        %v4542 = vunpack.c.l.b16 %v4522
        %v4543 = vunpack.c.h.b16 %v4522
        %v4544 = vunpack.c.l.b16 %v4523
        %v4545 = vunpack.c.h.b16 %v4523
        %v4546 = vunpack.c.l.b16 %v4524
        %v4547 = vunpack.c.h.b16 %v4524
        %v4548 = vunpack.c.l.b16 %v4525
        %v4549 = vunpack.c.h.b16 %v4525
        %v4550 = vpack.c.b16 %v4534, %v4534
        %v4551 = vpack.c.b16 %v4535, %v4535
        %v4552 = vpack.c.b16 %v4536, %v4536
        %v4553 = vpack.c.b16 %v4537, %v4537
        %v4554 = vpack.c.b16 %v4538, %v4538
        %v4555 = vpack.c.b16 %v4539, %v4539
        %v4556 = vpack.c.b16 %v4540, %v4540
        %v4557 = vpack.c.b16 %v4541, %v4541
        %v4558 = vpack.c.b16 %v4542, %v4542
        %v4559 = vpack.c.b16 %v4543, %v4543
        %v4560 = vpack.c.b16 %v4544, %v4544
        %v4561 = vpack.c.b16 %v4545, %v4545
        %v4562 = vpack.c.b16 %v4546, %v4546
        %v4563 = vpack.c.b16 %v4547, %v4547
        %v4564 = vpack.c.b16 %v4548, %v4548
        %v4565 = vpack.c.b16 %v4549, %v4549
        %s4582 = scalar_lea.vmem %s245, 384 [#allocation4]
        %4583 = vst [vmem:[%s4582] sm:$0xf] %v4550
        %4584 = vst [vmem:[%s4582 + $0x4] sm:$0xf] %v4551
        %4585 = vst [vmem:[%s4582 + $0x8] sm:$0xf] %v4552
        %4586 = vst [vmem:[%s4582 + $0xc] sm:$0xf] %v4553
        %4587 = vst [vmem:[%s4582 + $0x10] sm:$0xf] %v4554
        %4588 = vst [vmem:[%s4582 + $0x14] sm:$0xf] %v4555
        %4589 = vst [vmem:[%s4582 + $0x18] sm:$0xf] %v4556
        %4590 = vst [vmem:[%s4582 + $0x1c] sm:$0xf] %v4557
        %4591 = vst [vmem:[%s4582 + $0x20] sm:$0xf] %v4558
        %4592 = vst [vmem:[%s4582 + $0x24] sm:$0xf] %v4559
        %4593 = vst [vmem:[%s4582 + $0x28] sm:$0xf] %v4560
        %4594 = vst [vmem:[%s4582 + $0x2c] sm:$0xf] %v4561
        %4595 = vst [vmem:[%s4582 + $0x30] sm:$0xf] %v4562
        %4596 = vst [vmem:[%s4582 + $0x34] sm:$0xf] %v4563
        %4597 = vst [vmem:[%s4582 + $0x38] sm:$0xf] %v4564
        %4598 = vst [vmem:[%s4582 + $0x3c] sm:$0xf] %v4565
        %4599 = vrot.lane.b32.xlu0 %v4157, 40
        %v4600 = vpop.permute.xlu0 %4599
        %4601 = vrot.lane.b32.xlu0 %v4158, 40
        %v4602 = vpop.permute.xlu0 %4601
        %4603 = vrot.lane.b32.xlu0 %v4159, 40
        %v4604 = vpop.permute.xlu0 %4603
        %4605 = vrot.lane.b32.xlu0 %v4160, 40
        %v4606 = vpop.permute.xlu0 %4605
        %4607 = vrot.lane.b32.xlu0 %v4161, 40
        %v4608 = vpop.permute.xlu0 %4607
        %4609 = vrot.lane.b32.xlu0 %v4162, 40
        %v4610 = vpop.permute.xlu0 %4609
        %4611 = vrot.lane.b32.xlu0 %v4163, 40
        %v4612 = vpop.permute.xlu0 %4611
        %4613 = vrot.lane.b32.xlu0 %v4164, 40
        %v4614 = vpop.permute.xlu0 %4613
        %4623 = vmatprep.subr.bf16.mxu0 0
        %4624 = vmatpush1.bf16.msra.mxu0 %v4600
        %4625 = vmatprep.subr.bf16.mxu0 0
        %4626 = vmatpush1.bf16.msra.mxu0 %v4602
        %4627 = vmatprep.subr.bf16.mxu0 0
        %4628 = vmatpush1.bf16.msra.mxu0 %v4604
        %4629 = vmatprep.subr.bf16.mxu0 0
        %4630 = vmatpush1.bf16.msra.mxu0 %v4606
        %4631 = vmatprep.subr.bf16.mxu0 0
        %4632 = vmatpush1.bf16.msra.mxu0 %v4608
        %4633 = vmatprep.subr.bf16.mxu0 0
        %4634 = vmatpush1.bf16.msra.mxu0 %v4610
        %4635 = vmatprep.subr.bf16.mxu0 0
        %4636 = vmatpush1.bf16.msra.mxu0 %v4612
        %4637 = vmatprep.subr.bf16.mxu0 0
        %4638 = vmatpush1.bf16.msra.mxu0 %v4614
        %4639 = vmatprep.subr.bf16.mxu0 0
        %4640 = vmatpush1.bf16.msra.mxu0 0
        %4641 = vmatprep.subr.bf16.mxu0 0
        %4642 = vmatpush1.bf16.msra.mxu0 0
        %4643 = vmatprep.subr.bf16.mxu0 0
        %4644 = vmatpush1.bf16.msra.mxu0 0
        %4645 = vmatprep.subr.bf16.mxu0 0
        %4646 = vmatpush1.bf16.msra.mxu0 0
        %4647 = vmatprep.subr.bf16.mxu0 0
        %4648 = vmatpush1.bf16.msra.mxu0 0
        %4649 = vmatprep.subr.bf16.mxu0 0
        %4650 = vmatpush1.bf16.msra.mxu0 0
        %4651 = vmatprep.subr.bf16.mxu0 0
        %4652 = vmatpush1.bf16.msra.mxu0 0
        %4653 = vmatprep.subr.bf16.mxu0 0
        %4654 = vmatpush1.bf16.msra.mxu0 0
        %4655 = vmatprep.mubr.bf16.mxu0 0
        %4656 = vmatmul.mubr.bf16.gmra.mrb[0].mxu0 %v4518
        %v4657 = vpop.f32.mrb[0].mxu0
        %v4658 = vadd.f32 0.0, %v4657
        %v4659 = vpop.f32.mrb[0].mxu0
        %v4660 = vpop.f32.mrb[0].mxu0
        %v4661 = vadd.f32 0.0, %v4660
        %v4662 = vpop.f32.mrb[0].mxu0
        %4663 = vmatprep.mubr.bf16.mxu0 0
        %4664 = vmatmul.mubr.bf16.gmra.mrb[0].mxu0 %v4519
        %v4665 = vpop.f32.mrb[0].mxu0
        %v4666 = vadd.f32 0.0, %v4665
        %v4667 = vpop.f32.mrb[0].mxu0
        %v4668 = vpop.f32.mrb[0].mxu0
        %v4669 = vadd.f32 0.0, %v4668
        %v4670 = vpop.f32.mrb[0].mxu0
        %4671 = vmatprep.mubr.bf16.mxu0 0
        %4672 = vmatmul.mubr.bf16.gmra.mrb[0].mxu0 %v4520
        %v4673 = vpop.f32.mrb[0].mxu0
        %v4674 = vadd.f32 0.0, %v4673
        %v4675 = vpop.f32.mrb[0].mxu0
        %v4676 = vpop.f32.mrb[0].mxu0
        %v4677 = vadd.f32 0.0, %v4676
        %v4678 = vpop.f32.mrb[0].mxu0
        %4679 = vmatprep.mubr.bf16.mxu0 0
        %4680 = vmatmul.mubr.bf16.gmra.mrb[0].mxu0 %v4521
        %v4681 = vpop.f32.mrb[0].mxu0
        %v4682 = vadd.f32 0.0, %v4681
        %v4683 = vpop.f32.mrb[0].mxu0
        %v4684 = vpop.f32.mrb[0].mxu0
        %v4685 = vadd.f32 0.0, %v4684
        %v4686 = vpop.f32.mrb[0].mxu0
        %4687 = vmatprep.mubr.bf16.mxu0 0
        %4688 = vmatmul.mubr.bf16.gmra.mrb[0].mxu0 %v4522
        %v4689 = vpop.f32.mrb[0].mxu0
        %v4690 = vadd.f32 0.0, %v4689
        %v4691 = vpop.f32.mrb[0].mxu0
        %v4692 = vpop.f32.mrb[0].mxu0
        %v4693 = vadd.f32 0.0, %v4692
        %v4694 = vpop.f32.mrb[0].mxu0
        %4695 = vmatprep.mubr.bf16.mxu0 0
        %4696 = vmatmul.mubr.bf16.gmra.mrb[0].mxu0 %v4523
        %v4697 = vpop.f32.mrb[0].mxu0
        %v4698 = vadd.f32 0.0, %v4697
        %v4699 = vpop.f32.mrb[0].mxu0
        %v4700 = vpop.f32.mrb[0].mxu0
        %v4701 = vadd.f32 0.0, %v4700
        %v4702 = vpop.f32.mrb[0].mxu0
        %4703 = vmatprep.mubr.bf16.mxu0 0
        %4704 = vmatmul.mubr.bf16.gmra.mrb[0].mxu0 %v4524
        %v4705 = vpop.f32.mrb[0].mxu0
        %v4706 = vadd.f32 0.0, %v4705
        %v4707 = vpop.f32.mrb[0].mxu0
        %v4708 = vpop.f32.mrb[0].mxu0
        %v4709 = vadd.f32 0.0, %v4708
        %v4710 = vpop.f32.mrb[0].mxu0
        %4711 = vmatprep.mubr.bf16.mxu0 0
        %4712 = vmatmul.mubr.bf16.gmra.mrb[0].mxu0 %v4525
        %v4713 = vpop.f32.mrb[0].mxu0
        %v4714 = vadd.f32 0.0, %v4713
        %v4715 = vpop.f32.mrb[0].mxu0
        %v4716 = vpop.f32.mrb[0].mxu0
        %v4717 = vadd.f32 0.0, %v4716
        %v4718 = vpop.f32.mrb[0].mxu0
        %4719 = vdwg.mxu0
        %v4720 = vpack.c.bf16 %v4661, %v4658
        %v4721 = vpack.c.bf16 %v4669, %v4666
        %v4722 = vpack.c.bf16 %v4677, %v4674
        %v4723 = vpack.c.bf16 %v4685, %v4682
        %v4724 = vpack.c.bf16 %v4693, %v4690
        %v4725 = vpack.c.bf16 %v4701, %v4698
        %v4726 = vpack.c.bf16 %v4709, %v4706
        %v4727 = vpack.c.bf16 %v4717, %v4714
        %4736 = vrot.lane.b32.xlu0 %v4720, 24
        %v4737 = vpop.permute.xlu0 %4736
        %4738 = vrot.lane.b32.xlu0 %v4721, 24
        %v4739 = vpop.permute.xlu0 %4738
        %4740 = vrot.lane.b32.xlu0 %v4722, 24
        %v4741 = vpop.permute.xlu0 %4740
        %4742 = vrot.lane.b32.xlu0 %v4723, 24
        %v4743 = vpop.permute.xlu0 %4742
        %4744 = vrot.lane.b32.xlu0 %v4724, 24
        %v4745 = vpop.permute.xlu0 %4744
        %4746 = vrot.lane.b32.xlu0 %v4725, 24
        %v4747 = vpop.permute.xlu0 %4746
        %4748 = vrot.lane.b32.xlu0 %v4726, 24
        %v4749 = vpop.permute.xlu0 %4748
        %4750 = vrot.lane.b32.xlu0 %v4727, 24
        %v4751 = vpop.permute.xlu0 %4750
        %vm4760 = vcmask 228544
        %4761 = vst.msk [vmem:[#allocation3] sm:$0xff] %vm4760, %v4737
        %4762 = vst.msk [vmem:[#allocation3 + $0x8] sm:$0xff] %vm4760, %v4739
        %4763 = vst.msk [vmem:[#allocation3 + $0x10] sm:$0xff] %vm4760, %v4741
        %4764 = vst.msk [vmem:[#allocation3 + $0x18] sm:$0xff] %vm4760, %v4743
        %4765 = vst.msk [vmem:[#allocation3 + $0x20] sm:$0xff] %vm4760, %v4745
        %4766 = vst.msk [vmem:[#allocation3 + $0x28] sm:$0xff] %vm4760, %v4747
        %4767 = vst.msk [vmem:[#allocation3 + $0x30] sm:$0xff] %vm4760, %v4749
        %4768 = vst.msk [vmem:[#allocation3 + $0x38] sm:$0xff] %vm4760, %v4751
        %v4769 = vld [vmem:[%s485] sm:$0xff]
        %v4770 = vld [vmem:[%s485 + $0x8] sm:$0xff]
        %v4771 = vld [vmem:[%s485 + $0x10] sm:$0xff]
        %v4772 = vld [vmem:[%s485 + $0x18] sm:$0xff]
        %v4773 = vld [vmem:[%s485 + $0x20] sm:$0xff]
        %v4774 = vld [vmem:[%s485 + $0x28] sm:$0xff]
        %v4775 = vld [vmem:[%s485 + $0x30] sm:$0xff]
        %v4776 = vld [vmem:[%s485 + $0x38] sm:$0xff]
        %v4777 = vld [vmem:[#allocation2] sm:$0xff]
        %v4778 = vld [vmem:[#allocation2 + $0x8] sm:$0xff]
        %v4779 = vld [vmem:[#allocation2 + $0x10] sm:$0xff]
        %v4780 = vld [vmem:[#allocation2 + $0x18] sm:$0xff]
        %v4781 = vld [vmem:[#allocation2 + $0x20] sm:$0xff]
        %v4782 = vld [vmem:[#allocation2 + $0x28] sm:$0xff]
        %v4783 = vld [vmem:[#allocation2 + $0x30] sm:$0xff]
        %v4784 = vld [vmem:[#allocation2 + $0x38] sm:$0xff]
        %4793 = vrot.lane.b32.xlu0 %v4769, 100
        %v4794 = vpop.permute.xlu0 %4793
        %4795 = vrot.lane.b32.xlu0 %v4770, 100
        %v4796 = vpop.permute.xlu0 %4795
        %4797 = vrot.lane.b32.xlu0 %v4771, 100
        %v4798 = vpop.permute.xlu0 %4797
        %4799 = vrot.lane.b32.xlu0 %v4772, 100
        %v4800 = vpop.permute.xlu0 %4799
        %4801 = vrot.lane.b32.xlu0 %v4773, 100
        %v4802 = vpop.permute.xlu0 %4801
        %4803 = vrot.lane.b32.xlu0 %v4774, 100
        %v4804 = vpop.permute.xlu0 %4803
        %4805 = vrot.lane.b32.xlu0 %v4775, 100
        %v4806 = vpop.permute.xlu0 %4805
        %4807 = vrot.lane.b32.xlu0 %v4776, 100
        %v4808 = vpop.permute.xlu0 %4807
        %4817 = vrot.lane.b32.xlu0 %v4777, 68
        %v4818 = vpop.permute.xlu0 %4817
        %4819 = vrot.lane.b32.xlu0 %v4778, 68
        %v4820 = vpop.permute.xlu0 %4819
        %4821 = vrot.lane.b32.xlu0 %v4779, 68
        %v4822 = vpop.permute.xlu0 %4821
        %4823 = vrot.lane.b32.xlu0 %v4780, 68
        %v4824 = vpop.permute.xlu0 %4823
        %4825 = vrot.lane.b32.xlu0 %v4781, 68
        %v4826 = vpop.permute.xlu0 %4825
        %4827 = vrot.lane.b32.xlu0 %v4782, 68
        %v4828 = vpop.permute.xlu0 %4827
        %4829 = vrot.lane.b32.xlu0 %v4783, 68
        %v4830 = vpop.permute.xlu0 %4829
        %4831 = vrot.lane.b32.xlu0 %v4784, 68
        %v4832 = vpop.permute.xlu0 %4831
        %v4834 = vsel %vm526, %v4794, 0
        %v4837 = vsel %vm526, %v4796, 0
        %v4840 = vsel %vm526, %v4798, 0
        %v4843 = vsel %vm526, %v4800, 0
        %v4846 = vsel %vm526, %v4802, 0
        %v4849 = vsel %vm526, %v4804, 0
        %v4852 = vsel %vm526, %v4806, 0
        %v4855 = vsel %vm526, %v4808, 0
        %v4858 = vsel %vm526, %v4818, 0
        %v4861 = vsel %vm526, %v4820, 0
        %v4864 = vsel %vm526, %v4822, 0
        %v4867 = vsel %vm526, %v4824, 0
        %v4870 = vsel %vm526, %v4826, 0
        %v4873 = vsel %vm526, %v4828, 0
        %v4876 = vsel %vm526, %v4830, 0
        %v4879 = vsel %vm526, %v4832, 0
        %4881 = vmatprep.subr.bf16.mxu0 0
        %4882 = vmatpush1.bf16.xpose.msra.mxu0 %v4858
        %4883 = vmatprep.subr.bf16.mxu0 0
        %4884 = vmatpush1.bf16.xpose.msra.mxu0 %v4861
        %4885 = vmatprep.subr.bf16.mxu0 0
        %4886 = vmatpush1.bf16.xpose.msra.mxu0 %v4864
        %4887 = vmatprep.subr.bf16.mxu0 0
        %4888 = vmatpush1.bf16.xpose.msra.mxu0 %v4867
        %4889 = vmatprep.subr.bf16.mxu0 0
        %4890 = vmatpush1.bf16.xpose.msra.mxu0 %v4870
        %4891 = vmatprep.subr.bf16.mxu0 0
        %4892 = vmatpush1.bf16.xpose.msra.mxu0 %v4873
        %4893 = vmatprep.subr.bf16.mxu0 0
        %4894 = vmatpush1.bf16.xpose.msra.mxu0 %v4876
        %4895 = vmatprep.subr.bf16.mxu0 0
        %4896 = vmatpush1.bf16.xpose.msra.mxu0 %v4879
        %4897 = vmatprep.subr.bf16.mxu0 0
        %4898 = vmatpush1.bf16.xpose.msra.mxu0 0
        %4899 = vmatprep.subr.bf16.mxu0 0
        %4900 = vmatpush1.bf16.xpose.msra.mxu0 0
        %4901 = vmatprep.subr.bf16.mxu0 0
        %4902 = vmatpush1.bf16.xpose.msra.mxu0 0
        %4903 = vmatprep.subr.bf16.mxu0 0
        %4904 = vmatpush1.bf16.xpose.msra.mxu0 0
        %4905 = vmatprep.subr.bf16.mxu0 0
        %4906 = vmatpush1.bf16.xpose.msra.mxu0 0
        %4907 = vmatprep.subr.bf16.mxu0 0
        %4908 = vmatpush1.bf16.xpose.msra.mxu0 0
        %4909 = vmatprep.subr.bf16.mxu0 0
        %4910 = vmatpush1.bf16.xpose.msra.mxu0 0
        %4911 = vmatprep.subr.bf16.mxu0 0
        %4912 = vmatpush1.bf16.xpose.msra.mxu0 0
        %4913 = vmatprep.mubr.bf16.mxu0 0
        %4914 = vmatmul.mubr.bf16.gmra.mrb[0].mxu0 %v4834
        %v4915 = vpop.f32.mrb[0].mxu0
        %v4916 = vadd.f32 0.0, %v4915
        %v4917 = vpop.f32.mrb[0].mxu0
        %v4918 = vpop.f32.mrb[0].mxu0
        %v4919 = vadd.f32 0.0, %v4918
        %v4920 = vpop.f32.mrb[0].mxu0
        %4921 = vmatprep.mubr.bf16.mxu0 0
        %4922 = vmatmul.mubr.bf16.gmra.mrb[0].mxu0 %v4837
        %v4923 = vpop.f32.mrb[0].mxu0
        %v4924 = vadd.f32 0.0, %v4923
        %v4925 = vpop.f32.mrb[0].mxu0
        %v4926 = vpop.f32.mrb[0].mxu0
        %v4927 = vadd.f32 0.0, %v4926
        %v4928 = vpop.f32.mrb[0].mxu0
        %4929 = vmatprep.mubr.bf16.mxu0 0
        %4930 = vmatmul.mubr.bf16.gmra.mrb[0].mxu0 %v4840
        %v4931 = vpop.f32.mrb[0].mxu0
        %v4932 = vadd.f32 0.0, %v4931
        %v4933 = vpop.f32.mrb[0].mxu0
        %v4934 = vpop.f32.mrb[0].mxu0
        %v4935 = vadd.f32 0.0, %v4934
        %v4936 = vpop.f32.mrb[0].mxu0
        %4937 = vmatprep.mubr.bf16.mxu0 0
        %4938 = vmatmul.mubr.bf16.gmra.mrb[0].mxu0 %v4843
        %v4939 = vpop.f32.mrb[0].mxu0
        %v4940 = vadd.f32 0.0, %v4939
        %v4941 = vpop.f32.mrb[0].mxu0
        %v4942 = vpop.f32.mrb[0].mxu0
        %v4943 = vadd.f32 0.0, %v4942
        %v4944 = vpop.f32.mrb[0].mxu0
        %4945 = vmatprep.mubr.bf16.mxu0 0
        %4946 = vmatmul.mubr.bf16.gmra.mrb[0].mxu0 %v4846
        %v4947 = vpop.f32.mrb[0].mxu0
        %v4948 = vadd.f32 0.0, %v4947
        %v4949 = vpop.f32.mrb[0].mxu0
        %v4950 = vpop.f32.mrb[0].mxu0
        %v4951 = vadd.f32 0.0, %v4950
        %v4952 = vpop.f32.mrb[0].mxu0
        %4953 = vmatprep.mubr.bf16.mxu0 0
        %4954 = vmatmul.mubr.bf16.gmra.mrb[0].mxu0 %v4849
        %v4955 = vpop.f32.mrb[0].mxu0
        %v4956 = vadd.f32 0.0, %v4955
        %v4957 = vpop.f32.mrb[0].mxu0
        %v4958 = vpop.f32.mrb[0].mxu0
        %v4959 = vadd.f32 0.0, %v4958
        %v4960 = vpop.f32.mrb[0].mxu0
        %4961 = vmatprep.mubr.bf16.mxu0 0
        %4962 = vmatmul.mubr.bf16.gmra.mrb[0].mxu0 %v4852
        %v4963 = vpop.f32.mrb[0].mxu0
        %v4964 = vadd.f32 0.0, %v4963
        %v4965 = vpop.f32.mrb[0].mxu0
        %v4966 = vpop.f32.mrb[0].mxu0
        %v4967 = vadd.f32 0.0, %v4966
        %v4968 = vpop.f32.mrb[0].mxu0
        %4969 = vmatprep.mubr.bf16.mxu0 0
        %4970 = vmatmul.mubr.bf16.gmra.mrb[0].mxu0 %v4855
        %v4971 = vpop.f32.mrb[0].mxu0
        %v4972 = vadd.f32 0.0, %v4971
        %v4973 = vpop.f32.mrb[0].mxu0
        %v4974 = vpop.f32.mrb[0].mxu0
        %v4975 = vadd.f32 0.0, %v4974
        %v4976 = vpop.f32.mrb[0].mxu0
        %4977 = vdwg.mxu0
        %v4978 = vsel %vm481, %v4916, -1e+30
        %v4979 = vsel %vm481, %v4919, -1e+30
        %v4980 = vsel %vm481, %v4924, -1e+30
        %v4981 = vsel %vm481, %v4927, -1e+30
        %v4982 = vsel %vm481, %v4932, -1e+30
        %v4983 = vsel %vm481, %v4935, -1e+30
        %v4984 = vsel %vm481, %v4940, -1e+30
        %v4985 = vsel %vm481, %v4943, -1e+30
        %v4986 = vsel %vm481, %v4948, -1e+30
        %v4987 = vsel %vm481, %v4951, -1e+30
        %v4988 = vsel %vm481, %v4956, -1e+30
        %v4989 = vsel %vm481, %v4959, -1e+30
        %v4990 = vsel %vm481, %v4964, -1e+30
        %v4991 = vsel %vm481, %v4967, -1e+30
        %v4992 = vsel %vm481, %v4972, -1e+30
        %v4993 = vsel %vm481, %v4975, -1e+30
        %4994 = vmax.xlane.f32.xlu0 %v4978
        %v4995 = vpop.xlane.xlu0 %4994
        %4996 = vmax.xlane.f32.xlu0 %v4979
        %v4997 = vpop.xlane.xlu0 %4996
        %4998 = vmax.xlane.f32.xlu0 %v4980
        %v4999 = vpop.xlane.xlu0 %4998
        %5000 = vmax.xlane.f32.xlu0 %v4981
        %v5001 = vpop.xlane.xlu0 %5000
        %5002 = vmax.xlane.f32.xlu0 %v4982
        %v5003 = vpop.xlane.xlu0 %5002
        %5004 = vmax.xlane.f32.xlu0 %v4983
        %v5005 = vpop.xlane.xlu0 %5004
        %5006 = vmax.xlane.f32.xlu0 %v4984
        %v5007 = vpop.xlane.xlu0 %5006
        %5008 = vmax.xlane.f32.xlu0 %v4985
        %v5009 = vpop.xlane.xlu0 %5008
        %5010 = vmax.xlane.f32.xlu0 %v4986
        %v5011 = vpop.xlane.xlu0 %5010
        %5012 = vmax.xlane.f32.xlu0 %v4987
        %v5013 = vpop.xlane.xlu0 %5012
        %5014 = vmax.xlane.f32.xlu0 %v4988
        %v5015 = vpop.xlane.xlu0 %5014
        %5016 = vmax.xlane.f32.xlu0 %v4989
        %v5017 = vpop.xlane.xlu0 %5016
        %5018 = vmax.xlane.f32.xlu0 %v4990
        %v5019 = vpop.xlane.xlu0 %5018
        %5020 = vmax.xlane.f32.xlu0 %v4991
        %v5021 = vpop.xlane.xlu0 %5020
        %5022 = vmax.xlane.f32.xlu0 %v4992
        %v5023 = vpop.xlane.xlu0 %5022
        %5024 = vmax.xlane.f32.xlu0 %v4993
        %v5025 = vpop.xlane.xlu0 %5024
        %v5026 = vsub.f32 %v4978, %v4995
        %v5027 = vsub.f32 %v4979, %v4997
        %v5028 = vsub.f32 %v4980, %v4999
        %v5029 = vsub.f32 %v4981, %v5001
        %v5030 = vsub.f32 %v4982, %v5003
        %v5031 = vsub.f32 %v4983, %v5005
        %v5032 = vsub.f32 %v4984, %v5007
        %v5033 = vsub.f32 %v4985, %v5009
        %v5034 = vsub.f32 %v4986, %v5011
        %v5035 = vsub.f32 %v4987, %v5013
        %v5036 = vsub.f32 %v4988, %v5015
        %v5037 = vsub.f32 %v4989, %v5017
        %v5038 = vsub.f32 %v4990, %v5019
        %v5039 = vsub.f32 %v4991, %v5021
        %v5040 = vsub.f32 %v4992, %v5023
        %v5041 = vsub.f32 %v4993, %v5025
        %v5042 = vmul.f32 %v5026, 1.442695
        %v5043 = vpow.pop %v5042
        %v5044 = vmul.f32 %v5027, 1.442695
        %v5045 = vpow.pop %v5044
        %v5046 = vmul.f32 %v5028, 1.442695
        %v5047 = vpow.pop %v5046
        %v5048 = vmul.f32 %v5029, 1.442695
        %v5049 = vpow.pop %v5048
        %v5050 = vmul.f32 %v5030, 1.442695
        %v5051 = vpow.pop %v5050
        %v5052 = vmul.f32 %v5031, 1.442695
        %v5053 = vpow.pop %v5052
        %v5054 = vmul.f32 %v5032, 1.442695
        %v5055 = vpow.pop %v5054
        %v5056 = vmul.f32 %v5033, 1.442695
        %v5057 = vpow.pop %v5056
        %v5058 = vmul.f32 %v5034, 1.442695
        %v5059 = vpow.pop %v5058
        %v5060 = vmul.f32 %v5035, 1.442695
        %v5061 = vpow.pop %v5060
        %v5062 = vmul.f32 %v5036, 1.442695
        %v5063 = vpow.pop %v5062
        %v5064 = vmul.f32 %v5037, 1.442695
        %v5065 = vpow.pop %v5064
        %v5066 = vmul.f32 %v5038, 1.442695
        %v5067 = vpow.pop %v5066
        %v5068 = vmul.f32 %v5039, 1.442695
        %v5069 = vpow.pop %v5068
        %v5070 = vmul.f32 %v5040, 1.442695
        %v5071 = vpow.pop %v5070
        %v5072 = vmul.f32 %v5041, 1.442695
        %v5073 = vpow.pop %v5072
        %5074 = vadd.xlane.f32.xlu0 %v5043
        %v5075 = vpop.xlane.xlu0 %5074
        %5076 = vadd.xlane.f32.xlu0 %v5045
        %v5077 = vpop.xlane.xlu0 %5076
        %5078 = vadd.xlane.f32.xlu0 %v5047
        %v5079 = vpop.xlane.xlu0 %5078
        %5080 = vadd.xlane.f32.xlu0 %v5049
        %v5081 = vpop.xlane.xlu0 %5080
        %5082 = vadd.xlane.f32.xlu0 %v5051
        %v5083 = vpop.xlane.xlu0 %5082
        %5084 = vadd.xlane.f32.xlu0 %v5053
        %v5085 = vpop.xlane.xlu0 %5084
        %5086 = vadd.xlane.f32.xlu0 %v5055
        %v5087 = vpop.xlane.xlu0 %5086
        %5088 = vadd.xlane.f32.xlu0 %v5057
        %v5089 = vpop.xlane.xlu0 %5088
        %5090 = vadd.xlane.f32.xlu0 %v5059
        %v5091 = vpop.xlane.xlu0 %5090
        %5092 = vadd.xlane.f32.xlu0 %v5061
        %v5093 = vpop.xlane.xlu0 %5092
        %5094 = vadd.xlane.f32.xlu0 %v5063
        %v5095 = vpop.xlane.xlu0 %5094
        %5096 = vadd.xlane.f32.xlu0 %v5065
        %v5097 = vpop.xlane.xlu0 %5096
        %5098 = vadd.xlane.f32.xlu0 %v5067
        %v5099 = vpop.xlane.xlu0 %5098
        %5100 = vadd.xlane.f32.xlu0 %v5069
        %v5101 = vpop.xlane.xlu0 %5100
        %5102 = vadd.xlane.f32.xlu0 %v5071
        %v5103 = vpop.xlane.xlu0 %5102
        %5104 = vadd.xlane.f32.xlu0 %v5073
        %v5105 = vpop.xlane.xlu0 %5104
        %v5106 = vrcp.pop %v5075
        %v5107 = vmul.f32 %v5043, %v5106
        %v5108 = vrcp.pop %v5077
        %v5109 = vmul.f32 %v5045, %v5108
        %v5110 = vrcp.pop %v5079
        %v5111 = vmul.f32 %v5047, %v5110
        %v5112 = vrcp.pop %v5081
        %v5113 = vmul.f32 %v5049, %v5112
        %v5114 = vrcp.pop %v5083
        %v5115 = vmul.f32 %v5051, %v5114
        %v5116 = vrcp.pop %v5085
        %v5117 = vmul.f32 %v5053, %v5116
        %v5118 = vrcp.pop %v5087
        %v5119 = vmul.f32 %v5055, %v5118
        %v5120 = vrcp.pop %v5089
        %v5121 = vmul.f32 %v5057, %v5120
        %v5122 = vrcp.pop %v5091
        %v5123 = vmul.f32 %v5059, %v5122
        %v5124 = vrcp.pop %v5093
        %v5125 = vmul.f32 %v5061, %v5124
        %v5126 = vrcp.pop %v5095
        %v5127 = vmul.f32 %v5063, %v5126
        %v5128 = vrcp.pop %v5097
        %v5129 = vmul.f32 %v5065, %v5128
        %v5130 = vrcp.pop %v5099
        %v5131 = vmul.f32 %v5067, %v5130
        %v5132 = vrcp.pop %v5101
        %v5133 = vmul.f32 %v5069, %v5132
        %v5134 = vrcp.pop %v5103
        %v5135 = vmul.f32 %v5071, %v5134
        %v5136 = vrcp.pop %v5105
        %v5137 = vmul.f32 %v5073, %v5136
        %v5138 = vpack.c.bf16 %v5109, %v5107
        %v5139 = vpack.c.bf16 %v5113, %v5111
        %v5140 = vpack.c.bf16 %v5117, %v5115
        %v5141 = vpack.c.bf16 %v5121, %v5119
        %v5142 = vpack.c.bf16 %v5125, %v5123
        %v5143 = vpack.c.bf16 %v5129, %v5127
        %v5144 = vpack.c.bf16 %v5133, %v5131
        %v5145 = vpack.c.bf16 %v5137, %v5135
        %v5154 = vunpack.c.l.b16 %v5138
        %v5155 = vunpack.c.h.b16 %v5138
        %v5156 = vunpack.c.l.b16 %v5139
        %v5157 = vunpack.c.h.b16 %v5139
        %v5158 = vunpack.c.l.b16 %v5140
        %v5159 = vunpack.c.h.b16 %v5140
        %v5160 = vunpack.c.l.b16 %v5141
        %v5161 = vunpack.c.h.b16 %v5141
        %v5162 = vunpack.c.l.b16 %v5142
        %v5163 = vunpack.c.h.b16 %v5142
        %v5164 = vunpack.c.l.b16 %v5143
        %v5165 = vunpack.c.h.b16 %v5143
        %v5166 = vunpack.c.l.b16 %v5144
        %v5167 = vunpack.c.h.b16 %v5144
        %v5168 = vunpack.c.l.b16 %v5145
        %v5169 = vunpack.c.h.b16 %v5145
        %v5170 = vpack.c.b16 %v5154, %v5154
        %v5171 = vpack.c.b16 %v5155, %v5155
        %v5172 = vpack.c.b16 %v5156, %v5156
        %v5173 = vpack.c.b16 %v5157, %v5157
        %v5174 = vpack.c.b16 %v5158, %v5158
        %v5175 = vpack.c.b16 %v5159, %v5159
        %v5176 = vpack.c.b16 %v5160, %v5160
        %v5177 = vpack.c.b16 %v5161, %v5161
        %v5178 = vpack.c.b16 %v5162, %v5162
        %v5179 = vpack.c.b16 %v5163, %v5163
        %v5180 = vpack.c.b16 %v5164, %v5164
        %v5181 = vpack.c.b16 %v5165, %v5165
        %v5182 = vpack.c.b16 %v5166, %v5166
        %v5183 = vpack.c.b16 %v5167, %v5167
        %v5184 = vpack.c.b16 %v5168, %v5168
        %v5185 = vpack.c.b16 %v5169, %v5169
        %s5202 = scalar_lea.vmem %s245, 448 [#allocation4]
        %5203 = vst [vmem:[%s5202] sm:$0xf] %v5170
        %5204 = vst [vmem:[%s5202 + $0x4] sm:$0xf] %v5171
        %5205 = vst [vmem:[%s5202 + $0x8] sm:$0xf] %v5172
        %5206 = vst [vmem:[%s5202 + $0xc] sm:$0xf] %v5173
        %5207 = vst [vmem:[%s5202 + $0x10] sm:$0xf] %v5174
        %5208 = vst [vmem:[%s5202 + $0x14] sm:$0xf] %v5175
        %5209 = vst [vmem:[%s5202 + $0x18] sm:$0xf] %v5176
        %5210 = vst [vmem:[%s5202 + $0x1c] sm:$0xf] %v5177
        %5211 = vst [vmem:[%s5202 + $0x20] sm:$0xf] %v5178
        %5212 = vst [vmem:[%s5202 + $0x24] sm:$0xf] %v5179
        %5213 = vst [vmem:[%s5202 + $0x28] sm:$0xf] %v5180
        %5214 = vst [vmem:[%s5202 + $0x2c] sm:$0xf] %v5181
        %5215 = vst [vmem:[%s5202 + $0x30] sm:$0xf] %v5182
        %5216 = vst [vmem:[%s5202 + $0x34] sm:$0xf] %v5183
        %5217 = vst [vmem:[%s5202 + $0x38] sm:$0xf] %v5184
        %5218 = vst [vmem:[%s5202 + $0x3c] sm:$0xf] %v5185
        %5219 = vrot.lane.b32.xlu0 %v4777, 36
        %v5220 = vpop.permute.xlu0 %5219
        %5221 = vrot.lane.b32.xlu0 %v4778, 36
        %v5222 = vpop.permute.xlu0 %5221
        %5223 = vrot.lane.b32.xlu0 %v4779, 36
        %v5224 = vpop.permute.xlu0 %5223
        %5225 = vrot.lane.b32.xlu0 %v4780, 36
        %v5226 = vpop.permute.xlu0 %5225
        %5227 = vrot.lane.b32.xlu0 %v4781, 36
        %v5228 = vpop.permute.xlu0 %5227
        %5229 = vrot.lane.b32.xlu0 %v4782, 36
        %v5230 = vpop.permute.xlu0 %5229
        %5231 = vrot.lane.b32.xlu0 %v4783, 36
        %v5232 = vpop.permute.xlu0 %5231
        %5233 = vrot.lane.b32.xlu0 %v4784, 36
        %v5234 = vpop.permute.xlu0 %5233
        %5243 = vmatprep.subr.bf16.mxu0 0
        %5244 = vmatpush1.bf16.msra.mxu0 %v5220
        %5245 = vmatprep.subr.bf16.mxu0 0
        %5246 = vmatpush1.bf16.msra.mxu0 %v5222
        %5247 = vmatprep.subr.bf16.mxu0 0
        %5248 = vmatpush1.bf16.msra.mxu0 %v5224
        %5249 = vmatprep.subr.bf16.mxu0 0
        %5250 = vmatpush1.bf16.msra.mxu0 %v5226
        %5251 = vmatprep.subr.bf16.mxu0 0
        %5252 = vmatpush1.bf16.msra.mxu0 %v5228
        %5253 = vmatprep.subr.bf16.mxu0 0
        %5254 = vmatpush1.bf16.msra.mxu0 %v5230
        %5255 = vmatprep.subr.bf16.mxu0 0
        %5256 = vmatpush1.bf16.msra.mxu0 %v5232
        %5257 = vmatprep.subr.bf16.mxu0 0
        %5258 = vmatpush1.bf16.msra.mxu0 %v5234
        %5259 = vmatprep.subr.bf16.mxu0 0
        %5260 = vmatpush1.bf16.msra.mxu0 0
        %5261 = vmatprep.subr.bf16.mxu0 0
        %5262 = vmatpush1.bf16.msra.mxu0 0
        %5263 = vmatprep.subr.bf16.mxu0 0
        %5264 = vmatpush1.bf16.msra.mxu0 0
        %5265 = vmatprep.subr.bf16.mxu0 0
        %5266 = vmatpush1.bf16.msra.mxu0 0
        %5267 = vmatprep.subr.bf16.mxu0 0
        %5268 = vmatpush1.bf16.msra.mxu0 0
        %5269 = vmatprep.subr.bf16.mxu0 0
        %5270 = vmatpush1.bf16.msra.mxu0 0
        %5271 = vmatprep.subr.bf16.mxu0 0
        %5272 = vmatpush1.bf16.msra.mxu0 0
        %5273 = vmatprep.subr.bf16.mxu0 0
        %5274 = vmatpush1.bf16.msra.mxu0 0
        %5275 = vmatprep.mubr.bf16.mxu0 0
        %5276 = vmatmul.mubr.bf16.gmra.mrb[0].mxu0 %v5138
        %v5277 = vpop.f32.mrb[0].mxu0
        %v5278 = vadd.f32 0.0, %v5277
        %v5279 = vpop.f32.mrb[0].mxu0
        %v5280 = vpop.f32.mrb[0].mxu0
        %v5281 = vadd.f32 0.0, %v5280
        %v5282 = vpop.f32.mrb[0].mxu0
        %5283 = vmatprep.mubr.bf16.mxu0 0
        %5284 = vmatmul.mubr.bf16.gmra.mrb[0].mxu0 %v5139
        %v5285 = vpop.f32.mrb[0].mxu0
        %v5286 = vadd.f32 0.0, %v5285
        %v5287 = vpop.f32.mrb[0].mxu0
        %v5288 = vpop.f32.mrb[0].mxu0
        %v5289 = vadd.f32 0.0, %v5288
        %v5290 = vpop.f32.mrb[0].mxu0
        %5291 = vmatprep.mubr.bf16.mxu0 0
        %5292 = vmatmul.mubr.bf16.gmra.mrb[0].mxu0 %v5140
        %v5293 = vpop.f32.mrb[0].mxu0
        %v5294 = vadd.f32 0.0, %v5293
        %v5295 = vpop.f32.mrb[0].mxu0
        %v5296 = vpop.f32.mrb[0].mxu0
        %v5297 = vadd.f32 0.0, %v5296
        %v5298 = vpop.f32.mrb[0].mxu0
        %5299 = vmatprep.mubr.bf16.mxu0 0
        %5300 = vmatmul.mubr.bf16.gmra.mrb[0].mxu0 %v5141
        %v5301 = vpop.f32.mrb[0].mxu0
        %v5302 = vadd.f32 0.0, %v5301
        %v5303 = vpop.f32.mrb[0].mxu0
        %v5304 = vpop.f32.mrb[0].mxu0
        %v5305 = vadd.f32 0.0, %v5304
        %v5306 = vpop.f32.mrb[0].mxu0
        %5307 = vmatprep.mubr.bf16.mxu0 0
        %5308 = vmatmul.mubr.bf16.gmra.mrb[0].mxu0 %v5142
        %v5309 = vpop.f32.mrb[0].mxu0
        %v5310 = vadd.f32 0.0, %v5309
        %v5311 = vpop.f32.mrb[0].mxu0
        %v5312 = vpop.f32.mrb[0].mxu0
        %v5313 = vadd.f32 0.0, %v5312
        %v5314 = vpop.f32.mrb[0].mxu0
        %5315 = vmatprep.mubr.bf16.mxu0 0
        %5316 = vmatmul.mubr.bf16.gmra.mrb[0].mxu0 %v5143
        %v5317 = vpop.f32.mrb[0].mxu0
        %v5318 = vadd.f32 0.0, %v5317
        %v5319 = vpop.f32.mrb[0].mxu0
        %v5320 = vpop.f32.mrb[0].mxu0
        %v5321 = vadd.f32 0.0, %v5320
        %v5322 = vpop.f32.mrb[0].mxu0
        %5323 = vmatprep.mubr.bf16.mxu0 0
        %5324 = vmatmul.mubr.bf16.gmra.mrb[0].mxu0 %v5144
        %v5325 = vpop.f32.mrb[0].mxu0
        %v5326 = vadd.f32 0.0, %v5325
        %v5327 = vpop.f32.mrb[0].mxu0
        %v5328 = vpop.f32.mrb[0].mxu0
        %v5329 = vadd.f32 0.0, %v5328
        %v5330 = vpop.f32.mrb[0].mxu0
        %5331 = vmatprep.mubr.bf16.mxu0 0
        %5332 = vmatmul.mubr.bf16.gmra.mrb[0].mxu0 %v5145
        %v5333 = vpop.f32.mrb[0].mxu0
        %v5334 = vadd.f32 0.0, %v5333
        %v5335 = vpop.f32.mrb[0].mxu0
        %v5336 = vpop.f32.mrb[0].mxu0
        %v5337 = vadd.f32 0.0, %v5336
        %v5338 = vpop.f32.mrb[0].mxu0
        %5339 = vdwg.mxu0
        %v5340 = vpack.c.bf16 %v5281, %v5278
        %v5341 = vpack.c.bf16 %v5289, %v5286
        %v5342 = vpack.c.bf16 %v5297, %v5294
        %v5343 = vpack.c.bf16 %v5305, %v5302
        %v5344 = vpack.c.bf16 %v5313, %v5310
        %v5345 = vpack.c.bf16 %v5321, %v5318
        %v5346 = vpack.c.bf16 %v5329, %v5326
        %v5347 = vpack.c.bf16 %v5337, %v5334
        %5356 = vrot.lane.b32.xlu0 %v5340, 28
        %v5357 = vpop.permute.xlu0 %5356
        %5358 = vrot.lane.b32.xlu0 %v5341, 28
        %v5359 = vpop.permute.xlu0 %5358
        %5360 = vrot.lane.b32.xlu0 %v5342, 28
        %v5361 = vpop.permute.xlu0 %5360
        %5362 = vrot.lane.b32.xlu0 %v5343, 28
        %v5363 = vpop.permute.xlu0 %5362
        %5364 = vrot.lane.b32.xlu0 %v5344, 28
        %v5365 = vpop.permute.xlu0 %5364
        %5366 = vrot.lane.b32.xlu0 %v5345, 28
        %v5367 = vpop.permute.xlu0 %5366
        %5368 = vrot.lane.b32.xlu0 %v5346, 28
        %v5369 = vpop.permute.xlu0 %5368
        %5370 = vrot.lane.b32.xlu0 %v5347, 28
        %v5371 = vpop.permute.xlu0 %5370
        %vm5380 = vcmask 261344
        %5381 = vst.msk [vmem:[#allocation3] sm:$0xff] %vm5380, %v5357
        %5382 = vst.msk [vmem:[#allocation3 + $0x8] sm:$0xff] %vm5380, %v5359
        %5383 = vst.msk [vmem:[#allocation3 + $0x10] sm:$0xff] %vm5380, %v5361
        %5384 = vst.msk [vmem:[#allocation3 + $0x18] sm:$0xff] %vm5380, %v5363
        %5385 = vst.msk [vmem:[#allocation3 + $0x20] sm:$0xff] %vm5380, %v5365
        %5386 = vst.msk [vmem:[#allocation3 + $0x28] sm:$0xff] %vm5380, %v5367
        %5387 = vst.msk [vmem:[#allocation3 + $0x30] sm:$0xff] %vm5380, %v5369
        %5388 = vst.msk [vmem:[#allocation3 + $0x38] sm:$0xff] %vm5380, %v5371
        %v5389 = vld [vmem:[#allocation3] sm:$0xff]
        %v5390 = vld [vmem:[#allocation3 + $0x8] sm:$0xff]
        %v5391 = vld [vmem:[#allocation3 + $0x10] sm:$0xff]
        %v5392 = vld [vmem:[#allocation3 + $0x18] sm:$0xff]
        %v5393 = vld [vmem:[#allocation3 + $0x20] sm:$0xff]
        %v5394 = vld [vmem:[#allocation3 + $0x28] sm:$0xff]
        %v5395 = vld [vmem:[#allocation3 + $0x30] sm:$0xff]
        %v5396 = vld [vmem:[#allocation3 + $0x38] sm:$0xff]
        %v5397 = vld [vmem:[%s2] sm:$0xf]
        %v5398 = vld [vmem:[%s2 + $0x4] sm:$0xf]
        %v5399 = vld [vmem:[%s2 + $0x8] sm:$0xf]
        %v5400 = vld [vmem:[%s2 + $0xc] sm:$0xf]
        %v5401 = vld [vmem:[%s3] sm:$0x1]
        %v5403 = vlaneseq
        %v5404 = vshrl.u32 %v5403, 7
        %v5405 = vsub.s32 0, %v5404
        %v5406 = vrot.slane %v5401, %v5405
        %v5412 = vunpack.c.l.b16 %v5397
        %v5413 = vunpack.c.l.b16 %v5398
        %v5414 = vunpack.c.l.b16 %v5399
        %v5415 = vunpack.c.l.b16 %v5400
        %v5416 = vpack.c.b16 %v5413, %v5412
        %v5417 = vpack.c.b16 %v5415, %v5414
        %vm5420 = vcmask 261120
        %v5422 = vsel %vm5420, %v5389, 0
        %v5425 = vsel %vm5420, %v5390, 0
        %v5428 = vsel %vm5420, %v5391, 0
        %v5431 = vsel %vm5420, %v5392, 0
        %v5434 = vsel %vm5420, %v5393, 0
        %v5437 = vsel %vm5420, %v5394, 0
        %v5440 = vsel %vm5420, %v5395, 0
        %v5443 = vsel %vm5420, %v5396, 0
        %5445 = vmatprep.subr.bf16.mxu0 0
        %5446 = vmatpush1.bf16.msra.mxu0 %v5416
        %5447 = vmatprep.subr.bf16.mxu0 0
        %5448 = vmatpush1.bf16.msra.mxu0 %v5417
        %5449 = vmatprep.subr.bf16.mxu0 0
        %5450 = vmatpush1.bf16.msra.mxu0 0
        %5451 = vmatprep.subr.bf16.mxu0 0
        %5452 = vmatpush1.bf16.msra.mxu0 0
        %5453 = vmatprep.subr.bf16.mxu0 0
        %5454 = vmatpush1.bf16.msra.mxu0 0
        %5455 = vmatprep.subr.bf16.mxu0 0
        %5456 = vmatpush1.bf16.msra.mxu0 0
        %5457 = vmatprep.subr.bf16.mxu0 0
        %5458 = vmatpush1.bf16.msra.mxu0 0
        %5459 = vmatprep.subr.bf16.mxu0 0
        %5460 = vmatpush1.bf16.msra.mxu0 0
        %5461 = vmatprep.subr.bf16.mxu0 0
        %5462 = vmatpush1.bf16.msra.mxu0 0
        %5463 = vmatprep.subr.bf16.mxu0 0
        %5464 = vmatpush1.bf16.msra.mxu0 0
        %5465 = vmatprep.subr.bf16.mxu0 0
        %5466 = vmatpush1.bf16.msra.mxu0 0
        %5467 = vmatprep.subr.bf16.mxu0 0
        %5468 = vmatpush1.bf16.msra.mxu0 0
        %5469 = vmatprep.subr.bf16.mxu0 0
        %5470 = vmatpush1.bf16.msra.mxu0 0
        %5471 = vmatprep.subr.bf16.mxu0 0
        %5472 = vmatpush1.bf16.msra.mxu0 0
        %5473 = vmatprep.subr.bf16.mxu0 0
        %5474 = vmatpush1.bf16.msra.mxu0 0
        %5475 = vmatprep.subr.bf16.mxu0 0
        %5476 = vmatpush1.bf16.msra.mxu0 0
        %5477 = vmatprep.mubr.bf16.mxu0 0
        %5478 = vmatmul.mubr.bf16.gmra.mrb[0].mxu0 %v5422
        %v5479 = vpop.f32.mrb[0].mxu0
        %v5480 = vadd.f32 %v5406, %v5479
        %v5481 = vpop.f32.mrb[0].mxu0
        %v5482 = vpop.f32.mrb[0].mxu0
        %v5483 = vadd.f32 %v5406, %v5482
        %v5484 = vpop.f32.mrb[0].mxu0
        %5485 = vmatprep.mubr.bf16.mxu0 0
        %5486 = vmatmul.mubr.bf16.gmra.mrb[0].mxu0 %v5425
        %v5487 = vpop.f32.mrb[0].mxu0
        %v5488 = vadd.f32 %v5406, %v5487
        %v5489 = vpop.f32.mrb[0].mxu0
        %v5490 = vpop.f32.mrb[0].mxu0
        %v5491 = vadd.f32 %v5406, %v5490
        %v5492 = vpop.f32.mrb[0].mxu0
        %5493 = vmatprep.mubr.bf16.mxu0 0
        %5494 = vmatmul.mubr.bf16.gmra.mrb[0].mxu0 %v5428
        %v5495 = vpop.f32.mrb[0].mxu0
        %v5496 = vadd.f32 %v5406, %v5495
        %v5497 = vpop.f32.mrb[0].mxu0
        %v5498 = vpop.f32.mrb[0].mxu0
        %v5499 = vadd.f32 %v5406, %v5498
        %v5500 = vpop.f32.mrb[0].mxu0
        %5501 = vmatprep.mubr.bf16.mxu0 0
        %5502 = vmatmul.mubr.bf16.gmra.mrb[0].mxu0 %v5431
        %v5503 = vpop.f32.mrb[0].mxu0
        %v5504 = vadd.f32 %v5406, %v5503
        %v5505 = vpop.f32.mrb[0].mxu0
        %v5506 = vpop.f32.mrb[0].mxu0
        %v5507 = vadd.f32 %v5406, %v5506
        %v5508 = vpop.f32.mrb[0].mxu0
        %5509 = vmatprep.mubr.bf16.mxu0 0
        %5510 = vmatmul.mubr.bf16.gmra.mrb[0].mxu0 %v5434
        %v5511 = vpop.f32.mrb[0].mxu0
        %v5512 = vadd.f32 %v5406, %v5511
        %v5513 = vpop.f32.mrb[0].mxu0
        %v5514 = vpop.f32.mrb[0].mxu0
        %v5515 = vadd.f32 %v5406, %v5514
        %v5516 = vpop.f32.mrb[0].mxu0
        %5517 = vmatprep.mubr.bf16.mxu0 0
        %5518 = vmatmul.mubr.bf16.gmra.mrb[0].mxu0 %v5437
        %v5519 = vpop.f32.mrb[0].mxu0
        %v5520 = vadd.f32 %v5406, %v5519
        %v5521 = vpop.f32.mrb[0].mxu0
        %v5522 = vpop.f32.mrb[0].mxu0
        %v5523 = vadd.f32 %v5406, %v5522
        %v5524 = vpop.f32.mrb[0].mxu0
        %5525 = vmatprep.mubr.bf16.mxu0 0
        %5526 = vmatmul.mubr.bf16.gmra.mrb[0].mxu0 %v5440
        %v5527 = vpop.f32.mrb[0].mxu0
        %v5528 = vadd.f32 %v5406, %v5527
        %v5529 = vpop.f32.mrb[0].mxu0
        %v5530 = vpop.f32.mrb[0].mxu0
        %v5531 = vadd.f32 %v5406, %v5530
        %v5532 = vpop.f32.mrb[0].mxu0
        %5533 = vmatprep.mubr.bf16.mxu0 0
        %5534 = vmatmul.mubr.bf16.gmra.mrb[0].mxu0 %v5443
        %v5535 = vpop.f32.mrb[0].mxu0
        %v5536 = vadd.f32 %v5406, %v5535
        %v5537 = vpop.f32.mrb[0].mxu0
        %v5538 = vpop.f32.mrb[0].mxu0
        %v5539 = vadd.f32 %v5406, %v5538
        %v5540 = vpop.f32.mrb[0].mxu0
        %5541 = vdwg.mxu0
        %5542 = vst.msk [vmem:[%s259] sm:$0xff] %vm5420, %v5480
        %5543 = vst.msk [vmem:[%s259 + $0x8] sm:$0xff] %vm5420, %v5483
        %5544 = vst.msk [vmem:[%s259 + $0x10] sm:$0xff] %vm5420, %v5488
        %5545 = vst.msk [vmem:[%s259 + $0x18] sm:$0xff] %vm5420, %v5491
        %5546 = vst.msk [vmem:[%s259 + $0x20] sm:$0xff] %vm5420, %v5496
        %5547 = vst.msk [vmem:[%s259 + $0x28] sm:$0xff] %vm5420, %v5499
        %5548 = vst.msk [vmem:[%s259 + $0x30] sm:$0xff] %vm5420, %v5504
        %5549 = vst.msk [vmem:[%s259 + $0x38] sm:$0xff] %vm5420, %v5507
        %5550 = vst.msk [vmem:[%s259 + $0x40] sm:$0xff] %vm5420, %v5512
        %5551 = vst.msk [vmem:[%s259 + $0x48] sm:$0xff] %vm5420, %v5515
        %5552 = vst.msk [vmem:[%s259 + $0x50] sm:$0xff] %vm5420, %v5520
        %5553 = vst.msk [vmem:[%s259 + $0x58] sm:$0xff] %vm5420, %v5523
        %5554 = vst.msk [vmem:[%s259 + $0x60] sm:$0xff] %vm5420, %v5528
        %5555 = vst.msk [vmem:[%s259 + $0x68] sm:$0xff] %vm5420, %v5531
        %5556 = vst.msk [vmem:[%s259 + $0x70] sm:$0xff] %vm5420, %v5536
        %5557 = vst.msk [vmem:[%s259 + $0x78] sm:$0xff] %vm5420, %v5539
        %s5558 = smul.u32 16, %s25
        %p5559 = scmp.lt.s32.totalorder %s24, 1
        %s5560 = scalar_select %p5559, %s24, 1
        %p5561 = scmp.lt.s32.totalorder %s5558, 15
        %s5562 = scalar_select %p5561, %s5558, 15
        %s5563 = smul.addr %s5560, 16
        %s5564 = sadd.s32 %s5562, %s5563
        %s5565 = smul.addr %s5564, 8
        %s5566 = scalar_lea.vmem %s4, %s5565
        %s5567 = sand.u32 %s159, 1
        %s5568 = scalar_lea.sflag [#allocation5], %s5567
        %s5569 = sand.u32 %s159, 1
        %s5570 = smul.addr %s5569, 512
        %s5571 = scalar_lea.vmem [#allocation4], %s5570
        // Predicated region
        $region41: #{tpu_custom_call.1} parent=35 // pred_check
          %p5572 = pneg %p141
        $region42: #{tpu_custom_call.1} parent=35 // pred_check_branch
          %5574 = sbr.rel (%p5572) target = $region44
        $region43: #{tpu_custom_call.1} parent=35 // pred_region
          %s5575 = smul.u32 16, %s25
        $region44: #{tpu_custom_call.1} parent=35 // pred_fallthru
          _
        // Predicated region
        $region45: #{tpu_custom_call.1} parent=35 // pred_check
          %p5576 = pneg %p169
        $region46: #{tpu_custom_call.1} parent=35 // pred_check_branch
          %5578 = sbr.rel (%p5576) target = $region48
        $region47: #{tpu_custom_call.1} parent=35 // pred_region
          %s5579 = smul.u32 16, %s25
          %s5581 = ssub.s32 8192, 8192
          %5582 = vsyncadd %s5568, %s5581
          %s5583 = smul.addr %s24, 128
          %s5584 = sadd.s32 %s5579, %s5583
          %s5585 = smul.addr %s5584, 64
          %s5586 = scalar_lea.hbm %s5, %s5585
          %s5587 = sshll.u32 %s5571, 4
          %s5588 = int_to_ptr.vmem [resolvable:$true] %s5587
          %5593 = dma.vmem_to_hbm [thread:$0]  %s5588, 8192, %s5586, %s5568, 64, 64, 4
        $region48: #{tpu_custom_call.1} parent=35 // pred_fallthru
          _
      $region36: #{tpu_custom_call.1} parent=5 // pred_fallthru
        _
      %p5594 = scmp.le.s32.totalorder 2, %s15
      // Predicated region
      $region49: #{tpu_custom_call.1} parent=5 // pred_check
        %p5595 = pneg %p5594
      $region50: #{tpu_custom_call.1} parent=5 // pred_check_branch
        %5597 = sbr.rel (%p5595) target = $region52
      $region51: #{tpu_custom_call.1} parent=5 // pred_region
        %s5598 = ssub.s32 %s15, 2
        // Predicated region
        $region53: #{tpu_custom_call.1} parent=51 // pred_check
          %p5599 = pneg %p147
        $region54: #{tpu_custom_call.1} parent=51 // pred_check_branch
          %5601 = sbr.rel (%p5599) target = $region56
        $region55: #{tpu_custom_call.1} parent=51 // pred_region
          %s5602 = smul.u32 16, %s27
          %p5603 = scmp.lt.s32.totalorder %s26, 1
          %s5604 = scalar_select %p5603, %s26, 1
          %p5605 = scmp.lt.s32.totalorder %s5602, 15
          %s5606 = scalar_select %p5605, %s5602, 15
          %s5607 = smul.addr %s5604, 16
          %s5608 = sadd.s32 %s5606, %s5607
          %s5609 = smul.addr %s5608, 8
          %s5610 = scalar_lea.vmem %s4, %s5609
        $region56: #{tpu_custom_call.1} parent=51 // pred_fallthru
          _
        // Predicated region
        $region57: #{tpu_custom_call.1} parent=51 // pred_check
          %p5611 = pneg %p175
        $region58: #{tpu_custom_call.1} parent=51 // pred_check_branch
          %5613 = sbr.rel (%p5611) target = $region60
        $region59: #{tpu_custom_call.1} parent=51 // pred_region
          %s5614 = sand.u32 %s160, 1
          %s5615 = scalar_lea.sflag [#allocation5], %s5614
          %s5616 = sand.u32 %s160, 1
          %s5617 = smul.addr %s5616, 512
          %s5618 = scalar_lea.vmem [#allocation4], %s5617
          %5619 = dma.done %s5615, 8192
        $region60: #{tpu_custom_call.1} parent=51 // pred_fallthru
          _
      $region52: #{tpu_custom_call.1} parent=5 // pred_fallthru
        _
    $region6: #{tpu_custom_call.1} parent=1 // loop_footer
      %s19 = sadd.s32 1, %s15
    $region7: #{tpu_custom_call.1} parent=1 // loop_footer_branch
      %14 = sbr.rel target = $region3
    $region8: #{tpu_custom_call.1} parent=1 // loop_exit
      _
    %5620 = vsyncpa [#allocation5], 1
    %s5621 = scalar_lea.sflag [#allocation5], 1
    %5622 = vsyncpa %s5621, 1

</llo_original>
